<compile_context>
chip_gen: v6e
topology: v6e:2x2x1
jax: 0.10.0
libtpu: 0.0.40
codegen_flags: <defaults>
</compile_context>

<pallas_src>
import jax
import jax.numpy as jnp
from jax import lax
from jax.experimental import pallas as pl
from jax.experimental.pallas import tpu as pltpu


# ----------------------------- helpers ---------------------------------------
def _round_up(n, m):
    return ((n + m - 1) // m) * m


def _tile_bytes(shape, itemsize=4):
    """Padded VMEM footprint of an f32 tile ((8,128) tiling on last two dims)."""
    lead = 1
    for s in shape[:-2]:
        lead *= s
    return lead * _round_up(shape[-2], 8) * _round_up(shape[-1], 128) * itemsize


def _pick_time_chunk(T, B, D, H, budget_bytes=24 << 20):
    """Largest divisor of T whose per-chunk VMEM footprint fits the budget."""
    per_t = (2 * 2 * _tile_bytes((1, B, D))      # two x blocks, double-buffered
             + 2 * 2 * _tile_bytes((1, B, H))    # two out blocks, double-buffered
             + 2 * _tile_bytes((1, B, 4 * H)))   # two gate-projection scratches
    tc = max(1, min(T, budget_bytes // max(per_t, 1), 512))
    while T % tc != 0:
        tc -= 1
    return int(tc)


# ----------------------------- kernel -----------------------------------------
def _bilstm_chunk_kernel(xf_ref, xb_ref, wih_ref, whh_ref, b_ref,
                         outf_ref, outb_ref,
                         gxf_scr, gxb_scr, hc_scr):
    """One time-chunk of a bidirectional LSTM, both directions interleaved.

    Block shapes (time-major):
      xf_ref  : (Tc, B, D)  input chunk  i        (forward direction)
      xb_ref  : (Tc, B, D)  input chunk  nT-1-i   (backward direction)
      wih_ref : (2, D, 4H)  input->gates weights (pre-transposed), [fwd, bwd]
      whh_ref : (2, H, 4H)  hidden->gates weights (pre-transposed)
      b_ref   : (2, 1, 4H)  b_ih + b_hh per direction
      outf_ref: (Tc, B, H)  forward hidden states for chunk i
      outb_ref: (Tc, B, H)  backward hidden states for chunk nT-1-i
    Scratch (VMEM, f32):
      gxf_scr : (Tc, B, 4H) fwd input projections for this chunk
      gxb_scr : (Tc, B, 4H) bwd input projections for this chunk
      hc_scr  : (4, B, H)   persistent recurrent state [h_f, c_f, h_b, c_b]
    """
    Tc, B, D = xf_ref.shape
    H4 = wih_ref.shape[2]
    H = H4 // 4

    # Zero the recurrent state on the first time-chunk only; it persists across
    # the sequential ("arbitrary") grid axis after that.
    @pl.when(pl.program_id(0) == 0)
    def _():
        hc_scr[...] = jnp.zeros_like(hc_scr)

    # Loop-invariant weight / bias loads (hoisted out of the recurrence).
    wih_f, wih_b = wih_ref[0], wih_ref[1]     # (D, 4H)
    whh_f, whh_b = whh_ref[0], whh_ref[1]     # (H, 4H)
    b_f, b_b = b_ref[0], b_ref[1]             # (1, 4H)

    # Input projection for every timestep of the chunk: one lane-dense MXU
    # matmul per direction.  x is already time-major, so the result lands in
    # (Tc, B, 4H) order with no in-kernel transpose.
    gx_f = jnp.dot(xf_ref[...].reshape(Tc * B, D), wih_f,
                   preferred_element_type=jnp.float32) + b_f
    gx_b = jnp.dot(xb_ref[...].reshape(Tc * B, D), wih_b,
                   preferred_element_type=jnp.float32) + b_b
    gxf_scr[...] = gx_f.reshape(Tc, B, H4)
    gxb_scr[...] = gx_b.reshape(Tc, B, H4)

    def gates(pre):
        i_g = jax.nn.sigmoid(pre[:, 0 * H:1 * H])
        f_g = jax.nn.sigmoid(pre[:, 1 * H:2 * H])
        g_g = jnp.tanh(pre[:, 2 * H:3 * H])
        o_g = jax.nn.sigmoid(pre[:, 3 * H:4 * H])
        return i_g, f_g, g_g, o_g

    def step(s, carry):
        h_f, c_f, h_b, c_b = carry
        sb = Tc - 1 - s                       # bwd walks the chunk in reverse

        # Two independent latency chains; the scheduler interleaves them so the
        # MXU/EUP/VPU slots of one direction fill the other's stalls.
        pre_f = gxf_scr[s] + jnp.dot(h_f, whh_f,
                                     preferred_element_type=jnp.float32)
        pre_b = gxb_scr[sb] + jnp.dot(h_b, whh_b,
                                      preferred_element_type=jnp.float32)

        i_f, f_f, g_f, o_f = gates(pre_f)
        i_b, f_b, g_b, o_b = gates(pre_b)

        c_f = f_f * c_f + i_f * g_f
        h_f = o_f * jnp.tanh(c_f)
        c_b = f_b * c_b + i_b * g_b
        h_b = o_b * jnp.tanh(c_b)

        outf_ref[s] = h_f.astype(outf_ref.dtype)
        outb_ref[sb] = h_b.astype(outb_ref.dtype)
        return h_f, c_f, h_b, c_b

    carry0 = (hc_scr[0], hc_scr[1], hc_scr[2], hc_scr[3])
    h_f, c_f, h_b, c_b = lax.fori_loop(0, Tc, step, carry0, unroll=min(Tc, 8))

    # Carry the recurrent state into the next time-chunk.
    hc_scr[0] = h_f
    hc_scr[1] = c_f
    hc_scr[2] = h_b
    hc_scr[3] = c_b


# ----------------------------- wrapper -----------------------------------------
def single_rnn_forward(x, params):
    """Bidirectional single-layer LSTM (batch_first), PyTorch semantics.

    x: [B, T, D] float32
    params: dict with directions 'fwd'/'bwd', each holding PyTorch-layout
            w_ih [4H, D], w_hh [4H, H], b_ih [4H], b_hh [4H].
    returns: [B, T, 2H]  (== SingleRNN.forward(inp), i.e. nn.LSTM output[0])
    """
    B, T, D = x.shape
    H4 = params["fwd"]["w_ih"].shape[0]
    H = H4 // 4

    # Time-major input (single XLA transpose); no stacked / reversed copy.
    x_tm = jnp.transpose(x, (1, 0, 2))                                           # (T, B, D)

    # Pre-transpose weights once and fold the two biases per direction.
    wih = jnp.stack([params["fwd"]["w_ih"].T, params["bwd"]["w_ih"].T])          # (2, D, 4H)
    whh = jnp.stack([params["fwd"]["w_hh"].T, params["bwd"]["w_hh"].T])          # (2, H, 4H)
    b = jnp.stack([params["fwd"]["b_ih"] + params["fwd"]["b_hh"],
                   params["bwd"]["b_ih"] + params["bwd"]["b_hh"]])[:, None, :]   # (2, 1, 4H)

    Tc = _pick_time_chunk(T, B, D, H)
    nT = T // Tc

    # Explicit VMEM budget from the padded block + scratch footprint
    # (BlockSpec double-buffers the x and out blocks).
    footprint = (
        2 * 2 * _tile_bytes((Tc, B, D))
        + 2 * 2 * _tile_bytes((Tc, B, H))
        + 2 * (_tile_bytes((2, D, H4)) + _tile_bytes((2, H, H4))
               + _tile_bytes((2, 1, H4)))
        + 2 * _tile_bytes((Tc, B, H4))
        + _tile_bytes((4, B, H))
    )
    vmem_limit = int(min(max(footprint * 2, 16 << 20), 64 << 20))

    out_f, out_b = pl.pallas_call(
        _bilstm_chunk_kernel,
        out_shape=(jax.ShapeDtypeStruct((T, B, H), x.dtype),
                   jax.ShapeDtypeStruct((T, B, H), x.dtype)),
        grid_spec=pltpu.PrefetchScalarGridSpec(
            num_scalar_prefetch=0,
            grid=(nT,),
            in_specs=[
                pl.BlockSpec((Tc, B, D), lambda t: (t, 0, 0)),            # fwd chunk
                pl.BlockSpec((Tc, B, D), lambda t: (nT - 1 - t, 0, 0)),   # bwd chunk
                pl.BlockSpec((2, D, H4), lambda t: (0, 0, 0)),
                pl.BlockSpec((2, H, H4), lambda t: (0, 0, 0)),
                pl.BlockSpec((2, 1, H4), lambda t: (0, 0, 0)),
            ],
            out_specs=[
                pl.BlockSpec((Tc, B, H), lambda t: (t, 0, 0)),
                pl.BlockSpec((Tc, B, H), lambda t: (nT - 1 - t, 0, 0)),
            ],
            scratch_shapes=[
                pltpu.VMEM((Tc, B, H4), jnp.float32),   # fwd gate pre-activations
                pltpu.VMEM((Tc, B, H4), jnp.float32),   # bwd gate pre-activations
                pltpu.VMEM((4, B, H), jnp.float32),     # persistent [h_f,c_f,h_b,c_b]
            ],
        ),
        compiler_params=pltpu.CompilerParams(
            dimension_semantics=("arbitrary",),   # recurrence carries state across chunks
            vmem_limit_bytes=vmem_limit,
        ),
    )(x_tm, x_tm, wih, whh, b)

    # Fused layout plumbing back to PyTorch's [B, T, 2H]; out_b is already in
    # forward time order (the kernel writes it at reversed in-chunk indices).
    out_tm = jnp.concatenate([out_f, out_b], axis=-1)    # (T, B, 2H)
    return jnp.transpose(out_tm, (1, 0, 2))              # (B, T, 2H)


# ----------------------------- pure-JAX reference -----------------------------
def _lstm_ref_single(x, w_ih, w_hh, b_ih, b_hh):
    B, T, D = x.shape
    H = w_hh.shape[1]

    def step(carry, x_t):
        h, c = carry
        pre = x_t @ w_ih.T + b_ih + h @ w_hh.T + b_hh
        i = jax.nn.sigmoid(pre[:, :H])
        f = jax.nn.sigmoid(pre[:, H:2 * H])
        g = jnp.tanh(pre[:, 2 * H:3 * H])
        o = jax.nn.sigmoid(pre[:, 3 * H:])
        c = f * c + i * g
        h = o * jnp.tanh(c)
        return (h, c), h

    h0 = jnp.zeros((B, H), x.dtype)
    c0 = jnp.zeros((B, H), x.dtype)
    _, hs = lax.scan(step, (h0, c0), jnp.transpose(x, (1, 0, 2)))
    return jnp.transpose(hs, (1, 0, 2))   # [B, T, H]


if __name__ == "__main__":
    # Small shapes consistent with SingleRNN.forward: inp is [B, T, input_size].
    B, T, D, H = 2, 8, 16, 32

    key = jax.random.PRNGKey(0)
    keys = jax.random.split(key, 9)
    scale = 1.0 / jnp.sqrt(jnp.float32(H))

    def mk(k, shape):
        return jax.random.uniform(k, shape, jnp.float32, -1.0, 1.0) * scale

    params = {
        "fwd": {"w_ih": mk(keys[0], (4 * H, D)), "w_hh": mk(keys[1], (4 * H, H)),
                "b_ih": mk(keys[2], (4 * H,)), "b_hh": mk(keys[3], (4 * H,))},
        "bwd": {"w_ih": mk(keys[4], (4 * H, D)), "w_hh": mk(keys[5], (4 * H, H)),
                "b_ih": mk(keys[6], (4 * H,)), "b_hh": mk(keys[7], (4 * H,))},
    }
    x = jax.random.normal(keys[8], (B, T, D), dtype=jnp.float32)

    out = single_rnn_forward(x, params)
    out = jax.block_until_ready(out)
    assert out.shape == (B, T, 2 * H), out.shape

    # Reference: same LSTM equations (PyTorch gate order i,f,g,o), bidirectional.
    ref_f = _lstm_ref_single(x, **params["fwd"])
    ref_b = _lstm_ref_single(x[:, ::-1, :], **params["bwd"])[:, ::-1, :]
    ref = jnp.concatenate([ref_f, ref_b], axis=-1)
    assert jnp.allclose(out, ref, atol=1e-5, rtol=1e-5), \
        float(jnp.max(jnp.abs(out - ref)))

    print("KERNEL_OK")
</pallas_src>

<mosaic_0001>
module attributes {stable_mosaic.version = 11 : i64} {
  func.func @_bilstm_chunk_kernel(%arg0: i32, %arg1: memref<8x2x16xf32, #tpu.memory_space<vmem>>, %arg2: memref<8x2x16xf32, #tpu.memory_space<vmem>>, %arg3: memref<2x16x128xf32, #tpu.memory_space<vmem>>, %arg4: memref<2x32x128xf32, #tpu.memory_space<vmem>>, %arg5: memref<2x1x128xf32, #tpu.memory_space<vmem>>, %arg6: memref<8x2x32xf32, #tpu.memory_space<vmem>>, %arg7: memref<8x2x32xf32, #tpu.memory_space<vmem>>, %arg8: memref<8x2x128xf32, #tpu.memory_space<vmem>>, %arg9: memref<8x2x128xf32, #tpu.memory_space<vmem>>, %arg10: memref<4x2x32xf32, #tpu.memory_space<vmem>>) attributes {dimension_semantics = [#tpu.dimension_semantics<arbitrary>], iteration_bounds = array<i64: 1>, scalar_prefetch = 0 : i64, scratch_operands = 3 : i64, tpu.core_type = #tpu.core_type<tc>, window_params = [{transform_indices = @transform_0, window_bounds = array<i64: 8, 2, 16>}, {transform_indices = @transform_1, window_bounds = array<i64: 8, 2, 16>}, {pipeline_mode = #tpu.pipeline_mode<synchronous>, transform_indices = @transform_2, window_bounds = array<i64: 2, 16, 128>}, {pipeline_mode = #tpu.pipeline_mode<synchronous>, transform_indices = @transform_3, window_bounds = array<i64: 2, 32, 128>}, {pipeline_mode = #tpu.pipeline_mode<synchronous>, transform_indices = @transform_4, window_bounds = array<i64: 2, 1, 128>}, {transform_indices = @transform_5, window_bounds = array<i64: 8, 2, 32>}, {transform_indices = @transform_6, window_bounds = array<i64: 8, 2, 32>}]} {
    %c0_i32 = arith.constant 0 : i32
    %0 = arith.cmpi eq, %arg0, %c0_i32 : i32
    %1 = arith.extui %0 : i1 to i32
    %c0_i32_0 = arith.constant 0 : i32
    %2 = arith.cmpi ne, %1, %c0_i32_0 : i32
    scf.if %2 {
      %cst_189 = arith.constant 0.000000e+00 : f32
      %601 = vector.broadcast %cst_189 : f32 to vector<4x2x32xf32>
      %c0_190 = arith.constant 0 : index
      %c0_191 = arith.constant 0 : index
      %c0_192 = arith.constant 0 : index
      %602 = vector.load %arg10[%c0_190, %c0_191, %c0_192] : memref<4x2x32xf32, #tpu.memory_space<vmem>>, vector<4x2x32xf32>
      tpu.vector_store %arg10[%c0_190, %c0_191, %c0_192], %601 {strides = array<i32>} : memref<4x2x32xf32, #tpu.memory_space<vmem>>, vector<4x2x32xf32>,
    } else {
    }
    %c0 = arith.constant 0 : index
    %c0_1 = arith.constant 0 : index
    %c0_2 = arith.constant 0 : index
    %3 = vector.load %arg3[%c0, %c0_1, %c0_2] : memref<2x16x128xf32, #tpu.memory_space<vmem>>, vector<1x16x128xf32>
    %4 = vector.shape_cast %3 : vector<1x16x128xf32> to vector<16x128xf32>
    %c1 = arith.constant 1 : index
    %c0_3 = arith.constant 0 : index
    %c0_4 = arith.constant 0 : index
    %5 = vector.load %arg3[%c1, %c0_3, %c0_4] : memref<2x16x128xf32, #tpu.memory_space<vmem>>, vector<1x16x128xf32>
    %6 = vector.shape_cast %5 : vector<1x16x128xf32> to vector<16x128xf32>
    %c0_5 = arith.constant 0 : index
    %c0_6 = arith.constant 0 : index
    %c0_7 = arith.constant 0 : index
    %7 = vector.load %arg4[%c0_5, %c0_6, %c0_7] : memref<2x32x128xf32, #tpu.memory_space<vmem>>, vector<1x32x128xf32>
    %8 = vector.shape_cast %7 : vector<1x32x128xf32> to vector<32x128xf32>
    %c1_8 = arith.constant 1 : index
    %c0_9 = arith.constant 0 : index
    %c0_10 = arith.constant 0 : index
    %9 = vector.load %arg4[%c1_8, %c0_9, %c0_10] : memref<2x32x128xf32, #tpu.memory_space<vmem>>, vector<1x32x128xf32>
    %10 = vector.shape_cast %9 : vector<1x32x128xf32> to vector<32x128xf32>
    %c0_11 = arith.constant 0 : index
    %c0_12 = arith.constant 0 : index
    %c0_13 = arith.constant 0 : index
    %11 = vector.load %arg5[%c0_11, %c0_12, %c0_13] : memref<2x1x128xf32, #tpu.memory_space<vmem>>, vector<1x1x128xf32>
    %12 = vector.shape_cast %11 : vector<1x1x128xf32> to vector<1x128xf32>
    %c1_14 = arith.constant 1 : index
    %c0_15 = arith.constant 0 : index
    %c0_16 = arith.constant 0 : index
    %13 = vector.load %arg5[%c1_14, %c0_15, %c0_16] : memref<2x1x128xf32, #tpu.memory_space<vmem>>, vector<1x1x128xf32>
    %14 = vector.shape_cast %13 : vector<1x1x128xf32> to vector<1x128xf32>
    %c0_17 = arith.constant 0 : index
    %c0_18 = arith.constant 0 : index
    %c0_19 = arith.constant 0 : index
    %15 = vector.load %arg1[%c0_17, %c0_18, %c0_19] : memref<8x2x16xf32, #tpu.memory_space<vmem>>, vector<8x2x16xf32>
    %16 = vector.shape_cast %15 : vector<8x2x16xf32> to vector<16x16xf32>
    %cst = arith.constant dense<0.000000e+00> : vector<16x128xf32>
    %17 = tpu.matmul %16, %4, %cst {dimension_numbers = #tpu.dot_dimension_numbers<[1], [0], [0], [1], [0, 0, 1, 1], [], []>} : vector<16x16xf32>, vector<16x128xf32>, vector<16x128xf32> -> vector<16x128xf32>
    %18 = vector.broadcast %12 : vector<1x128xf32> to vector<16x128xf32>
    %19 = arith.addf %17, %18 : vector<16x128xf32>
    %c0_20 = arith.constant 0 : index
    %c0_21 = arith.constant 0 : index
    %c0_22 = arith.constant 0 : index
    %20 = vector.load %arg2[%c0_20, %c0_21, %c0_22] : memref<8x2x16xf32, #tpu.memory_space<vmem>>, vector<8x2x16xf32>
    %21 = vector.shape_cast %20 : vector<8x2x16xf32> to vector<16x16xf32>
    %cst_23 = arith.constant dense<0.000000e+00> : vector<16x128xf32>
    %22 = tpu.matmul %21, %6, %cst_23 {dimension_numbers = #tpu.dot_dimension_numbers<[1], [0], [0], [1], [0, 0, 1, 1], [], []>} : vector<16x16xf32>, vector<16x128xf32>, vector<16x128xf32> -> vector<16x128xf32>
    %23 = vector.broadcast %14 : vector<1x128xf32> to vector<16x128xf32>
    %24 = arith.addf %22, %23 : vector<16x128xf32>
    %25 = vector.shape_cast %19 : vector<16x128xf32> to vector<8x2x128xf32>
    %c0_24 = arith.constant 0 : index
    %c0_25 = arith.constant 0 : index
    %c0_26 = arith.constant 0 : index
    %26 = vector.load %arg8[%c0_24, %c0_25, %c0_26] : memref<8x2x128xf32, #tpu.memory_space<vmem>>, vector<8x2x128xf32>
    tpu.vector_store %arg8[%c0_24, %c0_25, %c0_26], %25 {strides = array<i32>} : memref<8x2x128xf32, #tpu.memory_space<vmem>>, vector<8x2x128xf32>,
    %27 = vector.shape_cast %24 : vector<16x128xf32> to vector<8x2x128xf32>
    %c0_27 = arith.constant 0 : index
    %c0_28 = arith.constant 0 : index
    %c0_29 = arith.constant 0 : index
    %28 = vector.load %arg9[%c0_27, %c0_28, %c0_29] : memref<8x2x128xf32, #tpu.memory_space<vmem>>, vector<8x2x128xf32>
    tpu.vector_store %arg9[%c0_27, %c0_28, %c0_29], %27 {strides = array<i32>} : memref<8x2x128xf32, #tpu.memory_space<vmem>>, vector<8x2x128xf32>,
    %c0_30 = arith.constant 0 : index
    %c0_31 = arith.constant 0 : index
    %c0_32 = arith.constant 0 : index
    %29 = vector.load %arg10[%c0_30, %c0_31, %c0_32] : memref<4x2x32xf32, #tpu.memory_space<vmem>>, vector<1x2x32xf32>
    %30 = vector.shape_cast %29 : vector<1x2x32xf32> to vector<2x32xf32>
    %c1_33 = arith.constant 1 : index
    %c0_34 = arith.constant 0 : index
    %c0_35 = arith.constant 0 : index
    %31 = vector.load %arg10[%c1_33, %c0_34, %c0_35] : memref<4x2x32xf32, #tpu.memory_space<vmem>>, vector<1x2x32xf32>
    %32 = vector.shape_cast %31 : vector<1x2x32xf32> to vector<2x32xf32>
    %c2 = arith.constant 2 : index
    %c0_36 = arith.constant 0 : index
    %c0_37 = arith.constant 0 : index
    %33 = vector.load %arg10[%c2, %c0_36, %c0_37] : memref<4x2x32xf32, #tpu.memory_space<vmem>>, vector<1x2x32xf32>
    %34 = vector.shape_cast %33 : vector<1x2x32xf32> to vector<2x32xf32>
    %c3 = arith.constant 3 : index
    %c0_38 = arith.constant 0 : index
    %c0_39 = arith.constant 0 : index
    %35 = vector.load %arg10[%c3, %c0_38, %c0_39] : memref<4x2x32xf32, #tpu.memory_space<vmem>>, vector<1x2x32xf32>
    %36 = vector.shape_cast %35 : vector<1x2x32xf32> to vector<2x32xf32>
    %c0_i32_40 = arith.constant 0 : i32
    %c7_i32 = arith.constant 7 : i32
    %37 = arith.subi %c7_i32, %c0_i32_40 : i32
    %38 = arith.index_cast %c0_i32_40 : i32 to index
    %c0_41 = arith.constant 0 : index
    %c0_42 = arith.constant 0 : index
    %39 = vector.load %arg8[%38, %c0_41, %c0_42] : memref<8x2x128xf32, #tpu.memory_space<vmem>>, vector<1x2x128xf32>
    %40 = vector.shape_cast %39 : vector<1x2x128xf32> to vector<2x128xf32>
    %cst_43 = arith.constant dense<0.000000e+00> : vector<2x128xf32>
    %41 = tpu.matmul %30, %8, %cst_43 {dimension_numbers = #tpu.dot_dimension_numbers<[1], [0], [0], [1], [0, 0, 1, 1], [], []>} : vector<2x32xf32>, vector<32x128xf32>, vector<2x128xf32> -> vector<2x128xf32>
    %42 = arith.addf %40, %41 : vector<2x128xf32>
    %43 = arith.index_cast %37 : i32 to index
    %c0_44 = arith.constant 0 : index
    %c0_45 = arith.constant 0 : index
    %44 = vector.load %arg9[%43, %c0_44, %c0_45] : memref<8x2x128xf32, #tpu.memory_space<vmem>>, vector<1x2x128xf32>
    %45 = vector.shape_cast %44 : vector<1x2x128xf32> to vector<2x128xf32>
    %cst_46 = arith.constant dense<0.000000e+00> : vector<2x128xf32>
    %46 = tpu.matmul %34, %10, %cst_46 {dimension_numbers = #tpu.dot_dimension_numbers<[1], [0], [0], [1], [0, 0, 1, 1], [], []>} : vector<2x32xf32>, vector<32x128xf32>, vector<2x128xf32> -> vector<2x128xf32>
    %47 = arith.addf %45, %46 : vector<2x128xf32>
    %48 = vector.extract_strided_slice %42 {offsets = [0, 0], sizes = [2, 32], strides = [1, 1]} : vector<2x128xf32> to vector<2x32xf32>
    %49 = arith.negf %48 : vector<2x32xf32>
    %50 = math.exp %49 : vector<2x32xf32>
    %cst_47 = arith.constant 1.000000e+00 : f32
    %51 = vector.broadcast %cst_47 : f32 to vector<2x32xf32>
    %52 = arith.addf %51, %50 : vector<2x32xf32>
    %53 = arith.divf %51, %52 : vector<2x32xf32>
    %54 = vector.extract_strided_slice %42 {offsets = [0, 32], sizes = [2, 32], strides = [1, 1]} : vector<2x128xf32> to vector<2x32xf32>
    %55 = arith.negf %54 : vector<2x32xf32>
    %56 = math.exp %55 : vector<2x32xf32>
    %cst_48 = arith.constant 1.000000e+00 : f32
    %57 = vector.broadcast %cst_48 : f32 to vector<2x32xf32>
    %58 = arith.addf %57, %56 : vector<2x32xf32>
    %59 = arith.divf %57, %58 : vector<2x32xf32>
    %60 = vector.extract_strided_slice %42 {offsets = [0, 64], sizes = [2, 32], strides = [1, 1]} : vector<2x128xf32> to vector<2x32xf32>
    %61 = math.tanh %60 : vector<2x32xf32>
    %62 = vector.extract_strided_slice %42 {offsets = [0, 96], sizes = [2, 32], strides = [1, 1]} : vector<2x128xf32> to vector<2x32xf32>
    %63 = arith.negf %62 : vector<2x32xf32>
    %64 = math.exp %63 : vector<2x32xf32>
    %cst_49 = arith.constant 1.000000e+00 : f32
    %65 = vector.broadcast %cst_49 : f32 to vector<2x32xf32>
    %66 = arith.addf %65, %64 : vector<2x32xf32>
    %67 = arith.divf %65, %66 : vector<2x32xf32>
    %68 = vector.extract_strided_slice %47 {offsets = [0, 0], sizes = [2, 32], strides = [1, 1]} : vector<2x128xf32> to vector<2x32xf32>
    %69 = arith.negf %68 : vector<2x32xf32>
    %70 = math.exp %69 : vector<2x32xf32>
    %cst_50 = arith.constant 1.000000e+00 : f32
    %71 = vector.broadcast %cst_50 : f32 to vector<2x32xf32>
    %72 = arith.addf %71, %70 : vector<2x32xf32>
    %73 = arith.divf %71, %72 : vector<2x32xf32>
    %74 = vector.extract_strided_slice %47 {offsets = [0, 32], sizes = [2, 32], strides = [1, 1]} : vector<2x128xf32> to vector<2x32xf32>
    %75 = arith.negf %74 : vector<2x32xf32>
    %76 = math.exp %75 : vector<2x32xf32>
    %cst_51 = arith.constant 1.000000e+00 : f32
    %77 = vector.broadcast %cst_51 : f32 to vector<2x32xf32>
    %78 = arith.addf %77, %76 : vector<2x32xf32>
    %79 = arith.divf %77, %78 : vector<2x32xf32>
    %80 = vector.extract_strided_slice %47 {offsets = [0, 64], sizes = [2, 32], strides = [1, 1]} : vector<2x128xf32> to vector<2x32xf32>
    %81 = math.tanh %80 : vector<2x32xf32>
    %82 = vector.extract_strided_slice %47 {offsets = [0, 96], sizes = [2, 32], strides = [1, 1]} : vector<2x128xf32> to vector<2x32xf32>
    %83 = arith.negf %82 : vector<2x32xf32>
    %84 = math.exp %83 : vector<2x32xf32>
    %cst_52 = arith.constant 1.000000e+00 : f32
    %85 = vector.broadcast %cst_52 : f32 to vector<2x32xf32>
    %86 = arith.addf %85, %84 : vector<2x32xf32>
    %87 = arith.divf %85, %86 : vector<2x32xf32>
    %88 = arith.mulf %59, %32 : vector<2x32xf32>
    %89 = arith.mulf %53, %61 : vector<2x32xf32>
    %90 = arith.addf %88, %89 : vector<2x32xf32>
    %91 = math.tanh %90 : vector<2x32xf32>
    %92 = arith.mulf %67, %91 : vector<2x32xf32>
    %93 = arith.mulf %79, %36 : vector<2x32xf32>
    %94 = arith.mulf %73, %81 : vector<2x32xf32>
    %95 = arith.addf %93, %94 : vector<2x32xf32>
    %96 = math.tanh %95 : vector<2x32xf32>
    %97 = arith.mulf %87, %96 : vector<2x32xf32>
    %98 = arith.index_cast %c0_i32_40 : i32 to index
    %c0_53 = arith.constant 0 : index
    %c0_54 = arith.constant 0 : index
    %99 = vector.load %arg6[%98, %c0_53, %c0_54] : memref<8x2x32xf32, #tpu.memory_space<vmem>>, vector<1x2x32xf32>
    %100 = vector.shape_cast %99 : vector<1x2x32xf32> to vector<2x32xf32>
    %101 = vector.shape_cast %92 : vector<2x32xf32> to vector<1x2x32xf32>
    tpu.vector_store %arg6[%98, %c0_53, %c0_54], %101 {strides = array<i32>} : memref<8x2x32xf32, #tpu.memory_space<vmem>>, vector<1x2x32xf32>,
    %102 = arith.index_cast %37 : i32 to index
    %c0_55 = arith.constant 0 : index
    %c0_56 = arith.constant 0 : index
    %103 = vector.load %arg7[%102, %c0_55, %c0_56] : memref<8x2x32xf32, #tpu.memory_space<vmem>>, vector<1x2x32xf32>
    %104 = vector.shape_cast %103 : vector<1x2x32xf32> to vector<2x32xf32>
    %105 = vector.shape_cast %97 : vector<2x32xf32> to vector<1x2x32xf32>
    tpu.vector_store %arg7[%102, %c0_55, %c0_56], %105 {strides = array<i32>} : memref<8x2x32xf32, #tpu.memory_space<vmem>>, vector<1x2x32xf32>,
    %c1_i32 = arith.constant 1 : i32
    %c7_i32_57 = arith.constant 7 : i32
    %106 = arith.subi %c7_i32_57, %c1_i32 : i32
    %107 = arith.index_cast %c1_i32 : i32 to index
    %c0_58 = arith.constant 0 : index
    %c0_59 = arith.constant 0 : index
    %108 = vector.load %arg8[%107, %c0_58, %c0_59] : memref<8x2x128xf32, #tpu.memory_space<vmem>>, vector<1x2x128xf32>
    %109 = vector.shape_cast %108 : vector<1x2x128xf32> to vector<2x128xf32>
    %cst_60 = arith.constant dense<0.000000e+00> : vector<2x128xf32>
    %110 = tpu.matmul %92, %8, %cst_60 {dimension_numbers = #tpu.dot_dimension_numbers<[1], [0], [0], [1], [0, 0, 1, 1], [], []>} : vector<2x32xf32>, vector<32x128xf32>, vector<2x128xf32> -> vector<2x128xf32>
    %111 = arith.addf %109, %110 : vector<2x128xf32>
    %112 = arith.index_cast %106 : i32 to index
    %c0_61 = arith.constant 0 : index
    %c0_62 = arith.constant 0 : index
    %113 = vector.load %arg9[%112, %c0_61, %c0_62] : memref<8x2x128xf32, #tpu.memory_space<vmem>>, vector<1x2x128xf32>
    %114 = vector.shape_cast %113 : vector<1x2x128xf32> to vector<2x128xf32>
    %cst_63 = arith.constant dense<0.000000e+00> : vector<2x128xf32>
    %115 = tpu.matmul %97, %10, %cst_63 {dimension_numbers = #tpu.dot_dimension_numbers<[1], [0], [0], [1], [0, 0, 1, 1], [], []>} : vector<2x32xf32>, vector<32x128xf32>, vector<2x128xf32> -> vector<2x128xf32>
    %116 = arith.addf %114, %115 : vector<2x128xf32>
    %117 = vector.extract_strided_slice %111 {offsets = [0, 0], sizes = [2, 32], strides = [1, 1]} : vector<2x128xf32> to vector<2x32xf32>
    %118 = arith.negf %117 : vector<2x32xf32>
    %119 = math.exp %118 : vector<2x32xf32>
    %cst_64 = arith.constant 1.000000e+00 : f32
    %120 = vector.broadcast %cst_64 : f32 to vector<2x32xf32>
    %121 = arith.addf %120, %119 : vector<2x32xf32>
    %122 = arith.divf %120, %121 : vector<2x32xf32>
    %123 = vector.extract_strided_slice %111 {offsets = [0, 32], sizes = [2, 32], strides = [1, 1]} : vector<2x128xf32> to vector<2x32xf32>
    %124 = arith.negf %123 : vector<2x32xf32>
    %125 = math.exp %124 : vector<2x32xf32>
    %cst_65 = arith.constant 1.000000e+00 : f32
    %126 = vector.broadcast %cst_65 : f32 to vector<2x32xf32>
    %127 = arith.addf %126, %125 : vector<2x32xf32>
    %128 = arith.divf %126, %127 : vector<2x32xf32>
    %129 = vector.extract_strided_slice %111 {offsets = [0, 64], sizes = [2, 32], strides = [1, 1]} : vector<2x128xf32> to vector<2x32xf32>
    %130 = math.tanh %129 : vector<2x32xf32>
    %131 = vector.extract_strided_slice %111 {offsets = [0, 96], sizes = [2, 32], strides = [1, 1]} : vector<2x128xf32> to vector<2x32xf32>
    %132 = arith.negf %131 : vector<2x32xf32>
    %133 = math.exp %132 : vector<2x32xf32>
    %cst_66 = arith.constant 1.000000e+00 : f32
    %134 = vector.broadcast %cst_66 : f32 to vector<2x32xf32>
    %135 = arith.addf %134, %133 : vector<2x32xf32>
    %136 = arith.divf %134, %135 : vector<2x32xf32>
    %137 = vector.extract_strided_slice %116 {offsets = [0, 0], sizes = [2, 32], strides = [1, 1]} : vector<2x128xf32> to vector<2x32xf32>
    %138 = arith.negf %137 : vector<2x32xf32>
    %139 = math.exp %138 : vector<2x32xf32>
    %cst_67 = arith.constant 1.000000e+00 : f32
    %140 = vector.broadcast %cst_67 : f32 to vector<2x32xf32>
    %141 = arith.addf %140, %139 : vector<2x32xf32>
    %142 = arith.divf %140, %141 : vector<2x32xf32>
    %143 = vector.extract_strided_slice %116 {offsets = [0, 32], sizes = [2, 32], strides = [1, 1]} : vector<2x128xf32> to vector<2x32xf32>
    %144 = arith.negf %143 : vector<2x32xf32>
    %145 = math.exp %144 : vector<2x32xf32>
    %cst_68 = arith.constant 1.000000e+00 : f32
    %146 = vector.broadcast %cst_68 : f32 to vector<2x32xf32>
    %147 = arith.addf %146, %145 : vector<2x32xf32>
    %148 = arith.divf %146, %147 : vector<2x32xf32>
    %149 = vector.extract_strided_slice %116 {offsets = [0, 64], sizes = [2, 32], strides = [1, 1]} : vector<2x128xf32> to vector<2x32xf32>
    %150 = math.tanh %149 : vector<2x32xf32>
    %151 = vector.extract_strided_slice %116 {offsets = [0, 96], sizes = [2, 32], strides = [1, 1]} : vector<2x128xf32> to vector<2x32xf32>
    %152 = arith.negf %151 : vector<2x32xf32>
    %153 = math.exp %152 : vector<2x32xf32>
    %cst_69 = arith.constant 1.000000e+00 : f32
    %154 = vector.broadcast %cst_69 : f32 to vector<2x32xf32>
    %155 = arith.addf %154, %153 : vector<2x32xf32>
    %156 = arith.divf %154, %155 : vector<2x32xf32>
    %157 = arith.mulf %128, %90 : vector<2x32xf32>
    %158 = arith.mulf %122, %130 : vector<2x32xf32>
    %159 = arith.addf %157, %158 : vector<2x32xf32>
    %160 = math.tanh %159 : vector<2x32xf32>
    %161 = arith.mulf %136, %160 : vector<2x32xf32>
    %162 = arith.mulf %148, %95 : vector<2x32xf32>
    %163 = arith.mulf %142, %150 : vector<2x32xf32>
    %164 = arith.addf %162, %163 : vector<2x32xf32>
    %165 = math.tanh %164 : vector<2x32xf32>
    %166 = arith.mulf %156, %165 : vector<2x32xf32>
    %167 = arith.index_cast %c1_i32 : i32 to index
    %c0_70 = arith.constant 0 : index
    %c0_71 = arith.constant 0 : index
    %168 = vector.load %arg6[%167, %c0_70, %c0_71] : memref<8x2x32xf32, #tpu.memory_space<vmem>>, vector<1x2x32xf32>
    %169 = vector.shape_cast %168 : vector<1x2x32xf32> to vector<2x32xf32>
    %170 = vector.shape_cast %161 : vector<2x32xf32> to vector<1x2x32xf32>
    tpu.vector_store %arg6[%167, %c0_70, %c0_71], %170 {strides = array<i32>} : memref<8x2x32xf32, #tpu.memory_space<vmem>>, vector<1x2x32xf32>,
    %171 = arith.index_cast %106 : i32 to index
    %c0_72 = arith.constant 0 : index
    %c0_73 = arith.constant 0 : index
    %172 = vector.load %arg7[%171, %c0_72, %c0_73] : memref<8x2x32xf32, #tpu.memory_space<vmem>>, vector<1x2x32xf32>
    %173 = vector.shape_cast %172 : vector<1x2x32xf32> to vector<2x32xf32>
    %174 = vector.shape_cast %166 : vector<2x32xf32> to vector<1x2x32xf32>
    tpu.vector_store %arg7[%171, %c0_72, %c0_73], %174 {strides = array<i32>} : memref<8x2x32xf32, #tpu.memory_space<vmem>>, vector<1x2x32xf32>,
    %c2_i32 = arith.constant 2 : i32
    %c7_i32_74 = arith.constant 7 : i32
    %175 = arith.subi %c7_i32_74, %c2_i32 : i32
    %176 = arith.index_cast %c2_i32 : i32 to index
    %c0_75 = arith.constant 0 : index
    %c0_76 = arith.constant 0 : index
    %177 = vector.load %arg8[%176, %c0_75, %c0_76] : memref<8x2x128xf32, #tpu.memory_space<vmem>>, vector<1x2x128xf32>
    %178 = vector.shape_cast %177 : vector<1x2x128xf32> to vector<2x128xf32>
    %cst_77 = arith.constant dense<0.000000e+00> : vector<2x128xf32>
    %179 = tpu.matmul %161, %8, %cst_77 {dimension_numbers = #tpu.dot_dimension_numbers<[1], [0], [0], [1], [0, 0, 1, 1], [], []>} : vector<2x32xf32>, vector<32x128xf32>, vector<2x128xf32> -> vector<2x128xf32>
    %180 = arith.addf %178, %179 : vector<2x128xf32>
    %181 = arith.index_cast %175 : i32 to index
    %c0_78 = arith.constant 0 : index
    %c0_79 = arith.constant 0 : index
    %182 = vector.load %arg9[%181, %c0_78, %c0_79] : memref<8x2x128xf32, #tpu.memory_space<vmem>>, vector<1x2x128xf32>
    %183 = vector.shape_cast %182 : vector<1x2x128xf32> to vector<2x128xf32>
    %cst_80 = arith.constant dense<0.000000e+00> : vector<2x128xf32>
    %184 = tpu.matmul %166, %10, %cst_80 {dimension_numbers = #tpu.dot_dimension_numbers<[1], [0], [0], [1], [0, 0, 1, 1], [], []>} : vector<2x32xf32>, vector<32x128xf32>, vector<2x128xf32> -> vector<2x128xf32>
    %185 = arith.addf %183, %184 : vector<2x128xf32>
    %186 = vector.extract_strided_slice %180 {offsets = [0, 0], sizes = [2, 32], strides = [1, 1]} : vector<2x128xf32> to vector<2x32xf32>
    %187 = arith.negf %186 : vector<2x32xf32>
    %188 = math.exp %187 : vector<2x32xf32>
    %cst_81 = arith.constant 1.000000e+00 : f32
    %189 = vector.broadcast %cst_81 : f32 to vector<2x32xf32>
    %190 = arith.addf %189, %188 : vector<2x32xf32>
    %191 = arith.divf %189, %190 : vector<2x32xf32>
    %192 = vector.extract_strided_slice %180 {offsets = [0, 32], sizes = [2, 32], strides = [1, 1]} : vector<2x128xf32> to vector<2x32xf32>
    %193 = arith.negf %192 : vector<2x32xf32>
    %194 = math.exp %193 : vector<2x32xf32>
    %cst_82 = arith.constant 1.000000e+00 : f32
    %195 = vector.broadcast %cst_82 : f32 to vector<2x32xf32>
    %196 = arith.addf %195, %194 : vector<2x32xf32>
    %197 = arith.divf %195, %196 : vector<2x32xf32>
    %198 = vector.extract_strided_slice %180 {offsets = [0, 64], sizes = [2, 32], strides = [1, 1]} : vector<2x128xf32> to vector<2x32xf32>
    %199 = math.tanh %198 : vector<2x32xf32>
    %200 = vector.extract_strided_slice %180 {offsets = [0, 96], sizes = [2, 32], strides = [1, 1]} : vector<2x128xf32> to vector<2x32xf32>
    %201 = arith.negf %200 : vector<2x32xf32>
    %202 = math.exp %201 : vector<2x32xf32>
    %cst_83 = arith.constant 1.000000e+00 : f32
    %203 = vector.broadcast %cst_83 : f32 to vector<2x32xf32>
    %204 = arith.addf %203, %202 : vector<2x32xf32>
    %205 = arith.divf %203, %204 : vector<2x32xf32>
    %206 = vector.extract_strided_slice %185 {offsets = [0, 0], sizes = [2, 32], strides = [1, 1]} : vector<2x128xf32> to vector<2x32xf32>
    %207 = arith.negf %206 : vector<2x32xf32>
    %208 = math.exp %207 : vector<2x32xf32>
    %cst_84 = arith.constant 1.000000e+00 : f32
    %209 = vector.broadcast %cst_84 : f32 to vector<2x32xf32>
    %210 = arith.addf %209, %208 : vector<2x32xf32>
    %211 = arith.divf %209, %210 : vector<2x32xf32>
    %212 = vector.extract_strided_slice %185 {offsets = [0, 32], sizes = [2, 32], strides = [1, 1]} : vector<2x128xf32> to vector<2x32xf32>
    %213 = arith.negf %212 : vector<2x32xf32>
    %214 = math.exp %213 : vector<2x32xf32>
    %cst_85 = arith.constant 1.000000e+00 : f32
    %215 = vector.broadcast %cst_85 : f32 to vector<2x32xf32>
    %216 = arith.addf %215, %214 : vector<2x32xf32>
    %217 = arith.divf %215, %216 : vector<2x32xf32>
    %218 = vector.extract_strided_slice %185 {offsets = [0, 64], sizes = [2, 32], strides = [1, 1]} : vector<2x128xf32> to vector<2x32xf32>
    %219 = math.tanh %218 : vector<2x32xf32>
    %220 = vector.extract_strided_slice %185 {offsets = [0, 96], sizes = [2, 32], strides = [1, 1]} : vector<2x128xf32> to vector<2x32xf32>
    %221 = arith.negf %220 : vector<2x32xf32>
    %222 = math.exp %221 : vector<2x32xf32>
    %cst_86 = arith.constant 1.000000e+00 : f32
    %223 = vector.broadcast %cst_86 : f32 to vector<2x32xf32>
    %224 = arith.addf %223, %222 : vector<2x32xf32>
    %225 = arith.divf %223, %224 : vector<2x32xf32>
    %226 = arith.mulf %197, %159 : vector<2x32xf32>
    %227 = arith.mulf %191, %199 : vector<2x32xf32>
    %228 = arith.addf %226, %227 : vector<2x32xf32>
    %229 = math.tanh %228 : vector<2x32xf32>
    %230 = arith.mulf %205, %229 : vector<2x32xf32>
    %231 = arith.mulf %217, %164 : vector<2x32xf32>
    %232 = arith.mulf %211, %219 : vector<2x32xf32>
    %233 = arith.addf %231, %232 : vector<2x32xf32>
    %234 = math.tanh %233 : vector<2x32xf32>
    %235 = arith.mulf %225, %234 : vector<2x32xf32>
    %236 = arith.index_cast %c2_i32 : i32 to index
    %c0_87 = arith.constant 0 : index
    %c0_88 = arith.constant 0 : index
    %237 = vector.load %arg6[%236, %c0_87, %c0_88] : memref<8x2x32xf32, #tpu.memory_space<vmem>>, vector<1x2x32xf32>
    %238 = vector.shape_cast %237 : vector<1x2x32xf32> to vector<2x32xf32>
    %239 = vector.shape_cast %230 : vector<2x32xf32> to vector<1x2x32xf32>
    tpu.vector_store %arg6[%236, %c0_87, %c0_88], %239 {strides = array<i32>} : memref<8x2x32xf32, #tpu.memory_space<vmem>>, vector<1x2x32xf32>,
    %240 = arith.index_cast %175 : i32 to index
    %c0_89 = arith.constant 0 : index
    %c0_90 = arith.constant 0 : index
    %241 = vector.load %arg7[%240, %c0_89, %c0_90] : memref<8x2x32xf32, #tpu.memory_space<vmem>>, vector<1x2x32xf32>
    %242 = vector.shape_cast %241 : vector<1x2x32xf32> to vector<2x32xf32>
    %243 = vector.shape_cast %235 : vector<2x32xf32> to vector<1x2x32xf32>
    tpu.vector_store %arg7[%240, %c0_89, %c0_90], %243 {strides = array<i32>} : memref<8x2x32xf32, #tpu.memory_space<vmem>>, vector<1x2x32xf32>,
    %c3_i32 = arith.constant 3 : i32
    %c7_i32_91 = arith.constant 7 : i32
    %244 = arith.subi %c7_i32_91, %c3_i32 : i32
    %245 = arith.index_cast %c3_i32 : i32 to index
    %c0_92 = arith.constant 0 : index
    %c0_93 = arith.constant 0 : index
    %246 = vector.load %arg8[%245, %c0_92, %c0_93] : memref<8x2x128xf32, #tpu.memory_space<vmem>>, vector<1x2x128xf32>
    %247 = vector.shape_cast %246 : vector<1x2x128xf32> to vector<2x128xf32>
    %cst_94 = arith.constant dense<0.000000e+00> : vector<2x128xf32>
    %248 = tpu.matmul %230, %8, %cst_94 {dimension_numbers = #tpu.dot_dimension_numbers<[1], [0], [0], [1], [0, 0, 1, 1], [], []>} : vector<2x32xf32>, vector<32x128xf32>, vector<2x128xf32> -> vector<2x128xf32>
    %249 = arith.addf %247, %248 : vector<2x128xf32>
    %250 = arith.index_cast %244 : i32 to index
    %c0_95 = arith.constant 0 : index
    %c0_96 = arith.constant 0 : index
    %251 = vector.load %arg9[%250, %c0_95, %c0_96] : memref<8x2x128xf32, #tpu.memory_space<vmem>>, vector<1x2x128xf32>
    %252 = vector.shape_cast %251 : vector<1x2x128xf32> to vector<2x128xf32>
    %cst_97 = arith.constant dense<0.000000e+00> : vector<2x128xf32>
    %253 = tpu.matmul %235, %10, %cst_97 {dimension_numbers = #tpu.dot_dimension_numbers<[1], [0], [0], [1], [0, 0, 1, 1], [], []>} : vector<2x32xf32>, vector<32x128xf32>, vector<2x128xf32> -> vector<2x128xf32>
    %254 = arith.addf %252, %253 : vector<2x128xf32>
    %255 = vector.extract_strided_slice %249 {offsets = [0, 0], sizes = [2, 32], strides = [1, 1]} : vector<2x128xf32> to vector<2x32xf32>
    %256 = arith.negf %255 : vector<2x32xf32>
    %257 = math.exp %256 : vector<2x32xf32>
    %cst_98 = arith.constant 1.000000e+00 : f32
    %258 = vector.broadcast %cst_98 : f32 to vector<2x32xf32>
    %259 = arith.addf %258, %257 : vector<2x32xf32>
    %260 = arith.divf %258, %259 : vector<2x32xf32>
    %261 = vector.extract_strided_slice %249 {offsets = [0, 32], sizes = [2, 32], strides = [1, 1]} : vector<2x128xf32> to vector<2x32xf32>
    %262 = arith.negf %261 : vector<2x32xf32>
    %263 = math.exp %262 : vector<2x32xf32>
    %cst_99 = arith.constant 1.000000e+00 : f32
    %264 = vector.broadcast %cst_99 : f32 to vector<2x32xf32>
    %265 = arith.addf %264, %263 : vector<2x32xf32>
    %266 = arith.divf %264, %265 : vector<2x32xf32>
    %267 = vector.extract_strided_slice %249 {offsets = [0, 64], sizes = [2, 32], strides = [1, 1]} : vector<2x128xf32> to vector<2x32xf32>
    %268 = math.tanh %267 : vector<2x32xf32>
    %269 = vector.extract_strided_slice %249 {offsets = [0, 96], sizes = [2, 32], strides = [1, 1]} : vector<2x128xf32> to vector<2x32xf32>
    %270 = arith.negf %269 : vector<2x32xf32>
    %271 = math.exp %270 : vector<2x32xf32>
    %cst_100 = arith.constant 1.000000e+00 : f32
    %272 = vector.broadcast %cst_100 : f32 to vector<2x32xf32>
    %273 = arith.addf %272, %271 : vector<2x32xf32>
    %274 = arith.divf %272, %273 : vector<2x32xf32>
    %275 = vector.extract_strided_slice %254 {offsets = [0, 0], sizes = [2, 32], strides = [1, 1]} : vector<2x128xf32> to vector<2x32xf32>
    %276 = arith.negf %275 : vector<2x32xf32>
    %277 = math.exp %276 : vector<2x32xf32>
    %cst_101 = arith.constant 1.000000e+00 : f32
    %278 = vector.broadcast %cst_101 : f32 to vector<2x32xf32>
    %279 = arith.addf %278, %277 : vector<2x32xf32>
    %280 = arith.divf %278, %279 : vector<2x32xf32>
    %281 = vector.extract_strided_slice %254 {offsets = [0, 32], sizes = [2, 32], strides = [1, 1]} : vector<2x128xf32> to vector<2x32xf32>
    %282 = arith.negf %281 : vector<2x32xf32>
    %283 = math.exp %282 : vector<2x32xf32>
    %cst_102 = arith.constant 1.000000e+00 : f32
    %284 = vector.broadcast %cst_102 : f32 to vector<2x32xf32>
    %285 = arith.addf %284, %283 : vector<2x32xf32>
    %286 = arith.divf %284, %285 : vector<2x32xf32>
    %287 = vector.extract_strided_slice %254 {offsets = [0, 64], sizes = [2, 32], strides = [1, 1]} : vector<2x128xf32> to vector<2x32xf32>
    %288 = math.tanh %287 : vector<2x32xf32>
    %289 = vector.extract_strided_slice %254 {offsets = [0, 96], sizes = [2, 32], strides = [1, 1]} : vector<2x128xf32> to vector<2x32xf32>
    %290 = arith.negf %289 : vector<2x32xf32>
    %291 = math.exp %290 : vector<2x32xf32>
    %cst_103 = arith.constant 1.000000e+00 : f32
    %292 = vector.broadcast %cst_103 : f32 to vector<2x32xf32>
    %293 = arith.addf %292, %291 : vector<2x32xf32>
    %294 = arith.divf %292, %293 : vector<2x32xf32>
    %295 = arith.mulf %266, %228 : vector<2x32xf32>
    %296 = arith.mulf %260, %268 : vector<2x32xf32>
    %297 = arith.addf %295, %296 : vector<2x32xf32>
    %298 = math.tanh %297 : vector<2x32xf32>
    %299 = arith.mulf %274, %298 : vector<2x32xf32>
    %300 = arith.mulf %286, %233 : vector<2x32xf32>
    %301 = arith.mulf %280, %288 : vector<2x32xf32>
    %302 = arith.addf %300, %301 : vector<2x32xf32>
    %303 = math.tanh %302 : vector<2x32xf32>
    %304 = arith.mulf %294, %303 : vector<2x32xf32>
    %305 = arith.index_cast %c3_i32 : i32 to index
    %c0_104 = arith.constant 0 : index
    %c0_105 = arith.constant 0 : index
    %306 = vector.load %arg6[%305, %c0_104, %c0_105] : memref<8x2x32xf32, #tpu.memory_space<vmem>>, vector<1x2x32xf32>
    %307 = vector.shape_cast %306 : vector<1x2x32xf32> to vector<2x32xf32>
    %308 = vector.shape_cast %299 : vector<2x32xf32> to vector<1x2x32xf32>
    tpu.vector_store %arg6[%305, %c0_104, %c0_105], %308 {strides = array<i32>} : memref<8x2x32xf32, #tpu.memory_space<vmem>>, vector<1x2x32xf32>,
    %309 = arith.index_cast %244 : i32 to index
    %c0_106 = arith.constant 0 : index
    %c0_107 = arith.constant 0 : index
    %310 = vector.load %arg7[%309, %c0_106, %c0_107] : memref<8x2x32xf32, #tpu.memory_space<vmem>>, vector<1x2x32xf32>
    %311 = vector.shape_cast %310 : vector<1x2x32xf32> to vector<2x32xf32>
    %312 = vector.shape_cast %304 : vector<2x32xf32> to vector<1x2x32xf32>
    tpu.vector_store %arg7[%309, %c0_106, %c0_107], %312 {strides = array<i32>} : memref<8x2x32xf32, #tpu.memory_space<vmem>>, vector<1x2x32xf32>,
    %c4_i32 = arith.constant 4 : i32
    %c7_i32_108 = arith.constant 7 : i32
    %313 = arith.subi %c7_i32_108, %c4_i32 : i32
    %314 = arith.index_cast %c4_i32 : i32 to index
    %c0_109 = arith.constant 0 : index
    %c0_110 = arith.constant 0 : index
    %315 = vector.load %arg8[%314, %c0_109, %c0_110] : memref<8x2x128xf32, #tpu.memory_space<vmem>>, vector<1x2x128xf32>
    %316 = vector.shape_cast %315 : vector<1x2x128xf32> to vector<2x128xf32>
    %cst_111 = arith.constant dense<0.000000e+00> : vector<2x128xf32>
    %317 = tpu.matmul %299, %8, %cst_111 {dimension_numbers = #tpu.dot_dimension_numbers<[1], [0], [0], [1], [0, 0, 1, 1], [], []>} : vector<2x32xf32>, vector<32x128xf32>, vector<2x128xf32> -> vector<2x128xf32>
    %318 = arith.addf %316, %317 : vector<2x128xf32>
    %319 = arith.index_cast %313 : i32 to index
    %c0_112 = arith.constant 0 : index
    %c0_113 = arith.constant 0 : index
    %320 = vector.load %arg9[%319, %c0_112, %c0_113] : memref<8x2x128xf32, #tpu.memory_space<vmem>>, vector<1x2x128xf32>
    %321 = vector.shape_cast %320 : vector<1x2x128xf32> to vector<2x128xf32>
    %cst_114 = arith.constant dense<0.000000e+00> : vector<2x128xf32>
    %322 = tpu.matmul %304, %10, %cst_114 {dimension_numbers = #tpu.dot_dimension_numbers<[1], [0], [0], [1], [0, 0, 1, 1], [], []>} : vector<2x32xf32>, vector<32x128xf32>, vector<2x128xf32> -> vector<2x128xf32>
    %323 = arith.addf %321, %322 : vector<2x128xf32>
    %324 = vector.extract_strided_slice %318 {offsets = [0, 0], sizes = [2, 32], strides = [1, 1]} : vector<2x128xf32> to vector<2x32xf32>
    %325 = arith.negf %324 : vector<2x32xf32>
    %326 = math.exp %325 : vector<2x32xf32>
    %cst_115 = arith.constant 1.000000e+00 : f32
    %327 = vector.broadcast %cst_115 : f32 to vector<2x32xf32>
    %328 = arith.addf %327, %326 : vector<2x32xf32>
    %329 = arith.divf %327, %328 : vector<2x32xf32>
    %330 = vector.extract_strided_slice %318 {offsets = [0, 32], sizes = [2, 32], strides = [1, 1]} : vector<2x128xf32> to vector<2x32xf32>
    %331 = arith.negf %330 : vector<2x32xf32>
    %332 = math.exp %331 : vector<2x32xf32>
    %cst_116 = arith.constant 1.000000e+00 : f32
    %333 = vector.broadcast %cst_116 : f32 to vector<2x32xf32>
    %334 = arith.addf %333, %332 : vector<2x32xf32>
    %335 = arith.divf %333, %334 : vector<2x32xf32>
    %336 = vector.extract_strided_slice %318 {offsets = [0, 64], sizes = [2, 32], strides = [1, 1]} : vector<2x128xf32> to vector<2x32xf32>
    %337 = math.tanh %336 : vector<2x32xf32>
    %338 = vector.extract_strided_slice %318 {offsets = [0, 96], sizes = [2, 32], strides = [1, 1]} : vector<2x128xf32> to vector<2x32xf32>
    %339 = arith.negf %338 : vector<2x32xf32>
    %340 = math.exp %339 : vector<2x32xf32>
    %cst_117 = arith.constant 1.000000e+00 : f32
    %341 = vector.broadcast %cst_117 : f32 to vector<2x32xf32>
    %342 = arith.addf %341, %340 : vector<2x32xf32>
    %343 = arith.divf %341, %342 : vector<2x32xf32>
    %344 = vector.extract_strided_slice %323 {offsets = [0, 0], sizes = [2, 32], strides = [1, 1]} : vector<2x128xf32> to vector<2x32xf32>
    %345 = arith.negf %344 : vector<2x32xf32>
    %346 = math.exp %345 : vector<2x32xf32>
    %cst_118 = arith.constant 1.000000e+00 : f32
    %347 = vector.broadcast %cst_118 : f32 to vector<2x32xf32>
    %348 = arith.addf %347, %346 : vector<2x32xf32>
    %349 = arith.divf %347, %348 : vector<2x32xf32>
    %350 = vector.extract_strided_slice %323 {offsets = [0, 32], sizes = [2, 32], strides = [1, 1]} : vector<2x128xf32> to vector<2x32xf32>
    %351 = arith.negf %350 : vector<2x32xf32>
    %352 = math.exp %351 : vector<2x32xf32>
    %cst_119 = arith.constant 1.000000e+00 : f32
    %353 = vector.broadcast %cst_119 : f32 to vector<2x32xf32>
    %354 = arith.addf %353, %352 : vector<2x32xf32>
    %355 = arith.divf %353, %354 : vector<2x32xf32>
    %356 = vector.extract_strided_slice %323 {offsets = [0, 64], sizes = [2, 32], strides = [1, 1]} : vector<2x128xf32> to vector<2x32xf32>
    %357 = math.tanh %356 : vector<2x32xf32>
    %358 = vector.extract_strided_slice %323 {offsets = [0, 96], sizes = [2, 32], strides = [1, 1]} : vector<2x128xf32> to vector<2x32xf32>
    %359 = arith.negf %358 : vector<2x32xf32>
    %360 = math.exp %359 : vector<2x32xf32>
    %cst_120 = arith.constant 1.000000e+00 : f32
    %361 = vector.broadcast %cst_120 : f32 to vector<2x32xf32>
    %362 = arith.addf %361, %360 : vector<2x32xf32>
    %363 = arith.divf %361, %362 : vector<2x32xf32>
    %364 = arith.mulf %335, %297 : vector<2x32xf32>
    %365 = arith.mulf %329, %337 : vector<2x32xf32>
    %366 = arith.addf %364, %365 : vector<2x32xf32>
    %367 = math.tanh %366 : vector<2x32xf32>
    %368 = arith.mulf %343, %367 : vector<2x32xf32>
    %369 = arith.mulf %355, %302 : vector<2x32xf32>
    %370 = arith.mulf %349, %357 : vector<2x32xf32>
    %371 = arith.addf %369, %370 : vector<2x32xf32>
    %372 = math.tanh %371 : vector<2x32xf32>
    %373 = arith.mulf %363, %372 : vector<2x32xf32>
    %374 = arith.index_cast %c4_i32 : i32 to index
    %c0_121 = arith.constant 0 : index
    %c0_122 = arith.constant 0 : index
    %375 = vector.load %arg6[%374, %c0_121, %c0_122] : memref<8x2x32xf32, #tpu.memory_space<vmem>>, vector<1x2x32xf32>
    %376 = vector.shape_cast %375 : vector<1x2x32xf32> to vector<2x32xf32>
    %377 = vector.shape_cast %368 : vector<2x32xf32> to vector<1x2x32xf32>
    tpu.vector_store %arg6[%374, %c0_121, %c0_122], %377 {strides = array<i32>} : memref<8x2x32xf32, #tpu.memory_space<vmem>>, vector<1x2x32xf32>,
    %378 = arith.index_cast %313 : i32 to index
    %c0_123 = arith.constant 0 : index
    %c0_124 = arith.constant 0 : index
    %379 = vector.load %arg7[%378, %c0_123, %c0_124] : memref<8x2x32xf32, #tpu.memory_space<vmem>>, vector<1x2x32xf32>
    %380 = vector.shape_cast %379 : vector<1x2x32xf32> to vector<2x32xf32>
    %381 = vector.shape_cast %373 : vector<2x32xf32> to vector<1x2x32xf32>
    tpu.vector_store %arg7[%378, %c0_123, %c0_124], %381 {strides = array<i32>} : memref<8x2x32xf32, #tpu.memory_space<vmem>>, vector<1x2x32xf32>,
    %c5_i32 = arith.constant 5 : i32
    %c7_i32_125 = arith.constant 7 : i32
    %382 = arith.subi %c7_i32_125, %c5_i32 : i32
    %383 = arith.index_cast %c5_i32 : i32 to index
    %c0_126 = arith.constant 0 : index
    %c0_127 = arith.constant 0 : index
    %384 = vector.load %arg8[%383, %c0_126, %c0_127] : memref<8x2x128xf32, #tpu.memory_space<vmem>>, vector<1x2x128xf32>
    %385 = vector.shape_cast %384 : vector<1x2x128xf32> to vector<2x128xf32>
    %cst_128 = arith.constant dense<0.000000e+00> : vector<2x128xf32>
    %386 = tpu.matmul %368, %8, %cst_128 {dimension_numbers = #tpu.dot_dimension_numbers<[1], [0], [0], [1], [0, 0, 1, 1], [], []>} : vector<2x32xf32>, vector<32x128xf32>, vector<2x128xf32> -> vector<2x128xf32>
    %387 = arith.addf %385, %386 : vector<2x128xf32>
    %388 = arith.index_cast %382 : i32 to index
    %c0_129 = arith.constant 0 : index
    %c0_130 = arith.constant 0 : index
    %389 = vector.load %arg9[%388, %c0_129, %c0_130] : memref<8x2x128xf32, #tpu.memory_space<vmem>>, vector<1x2x128xf32>
    %390 = vector.shape_cast %389 : vector<1x2x128xf32> to vector<2x128xf32>
    %cst_131 = arith.constant dense<0.000000e+00> : vector<2x128xf32>
    %391 = tpu.matmul %373, %10, %cst_131 {dimension_numbers = #tpu.dot_dimension_numbers<[1], [0], [0], [1], [0, 0, 1, 1], [], []>} : vector<2x32xf32>, vector<32x128xf32>, vector<2x128xf32> -> vector<2x128xf32>
    %392 = arith.addf %390, %391 : vector<2x128xf32>
    %393 = vector.extract_strided_slice %387 {offsets = [0, 0], sizes = [2, 32], strides = [1, 1]} : vector<2x128xf32> to vector<2x32xf32>
    %394 = arith.negf %393 : vector<2x32xf32>
    %395 = math.exp %394 : vector<2x32xf32>
    %cst_132 = arith.constant 1.000000e+00 : f32
    %396 = vector.broadcast %cst_132 : f32 to vector<2x32xf32>
    %397 = arith.addf %396, %395 : vector<2x32xf32>
    %398 = arith.divf %396, %397 : vector<2x32xf32>
    %399 = vector.extract_strided_slice %387 {offsets = [0, 32], sizes = [2, 32], strides = [1, 1]} : vector<2x128xf32> to vector<2x32xf32>
    %400 = arith.negf %399 : vector<2x32xf32>
    %401 = math.exp %400 : vector<2x32xf32>
    %cst_133 = arith.constant 1.000000e+00 : f32
    %402 = vector.broadcast %cst_133 : f32 to vector<2x32xf32>
    %403 = arith.addf %402, %401 : vector<2x32xf32>
    %404 = arith.divf %402, %403 : vector<2x32xf32>
    %405 = vector.extract_strided_slice %387 {offsets = [0, 64], sizes = [2, 32], strides = [1, 1]} : vector<2x128xf32> to vector<2x32xf32>
    %406 = math.tanh %405 : vector<2x32xf32>
    %407 = vector.extract_strided_slice %387 {offsets = [0, 96], sizes = [2, 32], strides = [1, 1]} : vector<2x128xf32> to vector<2x32xf32>
    %408 = arith.negf %407 : vector<2x32xf32>
    %409 = math.exp %408 : vector<2x32xf32>
    %cst_134 = arith.constant 1.000000e+00 : f32
    %410 = vector.broadcast %cst_134 : f32 to vector<2x32xf32>
    %411 = arith.addf %410, %409 : vector<2x32xf32>
    %412 = arith.divf %410, %411 : vector<2x32xf32>
    %413 = vector.extract_strided_slice %392 {offsets = [0, 0], sizes = [2, 32], strides = [1, 1]} : vector<2x128xf32> to vector<2x32xf32>
    %414 = arith.negf %413 : vector<2x32xf32>
    %415 = math.exp %414 : vector<2x32xf32>
    %cst_135 = arith.constant 1.000000e+00 : f32
    %416 = vector.broadcast %cst_135 : f32 to vector<2x32xf32>
    %417 = arith.addf %416, %415 : vector<2x32xf32>
    %418 = arith.divf %416, %417 : vector<2x32xf32>
    %419 = vector.extract_strided_slice %392 {offsets = [0, 32], sizes = [2, 32], strides = [1, 1]} : vector<2x128xf32> to vector<2x32xf32>
    %420 = arith.negf %419 : vector<2x32xf32>
    %421 = math.exp %420 : vector<2x32xf32>
    %cst_136 = arith.constant 1.000000e+00 : f32
    %422 = vector.broadcast %cst_136 : f32 to vector<2x32xf32>
    %423 = arith.addf %422, %421 : vector<2x32xf32>
    %424 = arith.divf %422, %423 : vector<2x32xf32>
    %425 = vector.extract_strided_slice %392 {offsets = [0, 64], sizes = [2, 32], strides = [1, 1]} : vector<2x128xf32> to vector<2x32xf32>
    %426 = math.tanh %425 : vector<2x32xf32>
    %427 = vector.extract_strided_slice %392 {offsets = [0, 96], sizes = [2, 32], strides = [1, 1]} : vector<2x128xf32> to vector<2x32xf32>
    %428 = arith.negf %427 : vector<2x32xf32>
    %429 = math.exp %428 : vector<2x32xf32>
    %cst_137 = arith.constant 1.000000e+00 : f32
    %430 = vector.broadcast %cst_137 : f32 to vector<2x32xf32>
    %431 = arith.addf %430, %429 : vector<2x32xf32>
    %432 = arith.divf %430, %431 : vector<2x32xf32>
    %433 = arith.mulf %404, %366 : vector<2x32xf32>
    %434 = arith.mulf %398, %406 : vector<2x32xf32>
    %435 = arith.addf %433, %434 : vector<2x32xf32>
    %436 = math.tanh %435 : vector<2x32xf32>
    %437 = arith.mulf %412, %436 : vector<2x32xf32>
    %438 = arith.mulf %424, %371 : vector<2x32xf32>
    %439 = arith.mulf %418, %426 : vector<2x32xf32>
    %440 = arith.addf %438, %439 : vector<2x32xf32>
    %441 = math.tanh %440 : vector<2x32xf32>
    %442 = arith.mulf %432, %441 : vector<2x32xf32>
    %443 = arith.index_cast %c5_i32 : i32 to index
    %c0_138 = arith.constant 0 : index
    %c0_139 = arith.constant 0 : index
    %444 = vector.load %arg6[%443, %c0_138, %c0_139] : memref<8x2x32xf32, #tpu.memory_space<vmem>>, vector<1x2x32xf32>
    %445 = vector.shape_cast %444 : vector<1x2x32xf32> to vector<2x32xf32>
    %446 = vector.shape_cast %437 : vector<2x32xf32> to vector<1x2x32xf32>
    tpu.vector_store %arg6[%443, %c0_138, %c0_139], %446 {strides = array<i32>} : memref<8x2x32xf32, #tpu.memory_space<vmem>>, vector<1x2x32xf32>,
    %447 = arith.index_cast %382 : i32 to index
    %c0_140 = arith.constant 0 : index
    %c0_141 = arith.constant 0 : index
    %448 = vector.load %arg7[%447, %c0_140, %c0_141] : memref<8x2x32xf32, #tpu.memory_space<vmem>>, vector<1x2x32xf32>
    %449 = vector.shape_cast %448 : vector<1x2x32xf32> to vector<2x32xf32>
    %450 = vector.shape_cast %442 : vector<2x32xf32> to vector<1x2x32xf32>
    tpu.vector_store %arg7[%447, %c0_140, %c0_141], %450 {strides = array<i32>} : memref<8x2x32xf32, #tpu.memory_space<vmem>>, vector<1x2x32xf32>,
    %c6_i32 = arith.constant 6 : i32
    %c7_i32_142 = arith.constant 7 : i32
    %451 = arith.subi %c7_i32_142, %c6_i32 : i32
    %452 = arith.index_cast %c6_i32 : i32 to index
    %c0_143 = arith.constant 0 : index
    %c0_144 = arith.constant 0 : index
    %453 = vector.load %arg8[%452, %c0_143, %c0_144] : memref<8x2x128xf32, #tpu.memory_space<vmem>>, vector<1x2x128xf32>
    %454 = vector.shape_cast %453 : vector<1x2x128xf32> to vector<2x128xf32>
    %cst_145 = arith.constant dense<0.000000e+00> : vector<2x128xf32>
    %455 = tpu.matmul %437, %8, %cst_145 {dimension_numbers = #tpu.dot_dimension_numbers<[1], [0], [0], [1], [0, 0, 1, 1], [], []>} : vector<2x32xf32>, vector<32x128xf32>, vector<2x128xf32> -> vector<2x128xf32>
    %456 = arith.addf %454, %455 : vector<2x128xf32>
    %457 = arith.index_cast %451 : i32 to index
    %c0_146 = arith.constant 0 : index
    %c0_147 = arith.constant 0 : index
    %458 = vector.load %arg9[%457, %c0_146, %c0_147] : memref<8x2x128xf32, #tpu.memory_space<vmem>>, vector<1x2x128xf32>
    %459 = vector.shape_cast %458 : vector<1x2x128xf32> to vector<2x128xf32>
    %cst_148 = arith.constant dense<0.000000e+00> : vector<2x128xf32>
    %460 = tpu.matmul %442, %10, %cst_148 {dimension_numbers = #tpu.dot_dimension_numbers<[1], [0], [0], [1], [0, 0, 1, 1], [], []>} : vector<2x32xf32>, vector<32x128xf32>, vector<2x128xf32> -> vector<2x128xf32>
    %461 = arith.addf %459, %460 : vector<2x128xf32>
    %462 = vector.extract_strided_slice %456 {offsets = [0, 0], sizes = [2, 32], strides = [1, 1]} : vector<2x128xf32> to vector<2x32xf32>
    %463 = arith.negf %462 : vector<2x32xf32>
    %464 = math.exp %463 : vector<2x32xf32>
    %cst_149 = arith.constant 1.000000e+00 : f32
    %465 = vector.broadcast %cst_149 : f32 to vector<2x32xf32>
    %466 = arith.addf %465, %464 : vector<2x32xf32>
    %467 = arith.divf %465, %466 : vector<2x32xf32>
    %468 = vector.extract_strided_slice %456 {offsets = [0, 32], sizes = [2, 32], strides = [1, 1]} : vector<2x128xf32> to vector<2x32xf32>
    %469 = arith.negf %468 : vector<2x32xf32>
    %470 = math.exp %469 : vector<2x32xf32>
    %cst_150 = arith.constant 1.000000e+00 : f32
    %471 = vector.broadcast %cst_150 : f32 to vector<2x32xf32>
    %472 = arith.addf %471, %470 : vector<2x32xf32>
    %473 = arith.divf %471, %472 : vector<2x32xf32>
    %474 = vector.extract_strided_slice %456 {offsets = [0, 64], sizes = [2, 32], strides = [1, 1]} : vector<2x128xf32> to vector<2x32xf32>
    %475 = math.tanh %474 : vector<2x32xf32>
    %476 = vector.extract_strided_slice %456 {offsets = [0, 96], sizes = [2, 32], strides = [1, 1]} : vector<2x128xf32> to vector<2x32xf32>
    %477 = arith.negf %476 : vector<2x32xf32>
    %478 = math.exp %477 : vector<2x32xf32>
    %cst_151 = arith.constant 1.000000e+00 : f32
    %479 = vector.broadcast %cst_151 : f32 to vector<2x32xf32>
    %480 = arith.addf %479, %478 : vector<2x32xf32>
    %481 = arith.divf %479, %480 : vector<2x32xf32>
    %482 = vector.extract_strided_slice %461 {offsets = [0, 0], sizes = [2, 32], strides = [1, 1]} : vector<2x128xf32> to vector<2x32xf32>
    %483 = arith.negf %482 : vector<2x32xf32>
    %484 = math.exp %483 : vector<2x32xf32>
    %cst_152 = arith.constant 1.000000e+00 : f32
    %485 = vector.broadcast %cst_152 : f32 to vector<2x32xf32>
    %486 = arith.addf %485, %484 : vector<2x32xf32>
    %487 = arith.divf %485, %486 : vector<2x32xf32>
    %488 = vector.extract_strided_slice %461 {offsets = [0, 32], sizes = [2, 32], strides = [1, 1]} : vector<2x128xf32> to vector<2x32xf32>
    %489 = arith.negf %488 : vector<2x32xf32>
    %490 = math.exp %489 : vector<2x32xf32>
    %cst_153 = arith.constant 1.000000e+00 : f32
    %491 = vector.broadcast %cst_153 : f32 to vector<2x32xf32>
    %492 = arith.addf %491, %490 : vector<2x32xf32>
    %493 = arith.divf %491, %492 : vector<2x32xf32>
    %494 = vector.extract_strided_slice %461 {offsets = [0, 64], sizes = [2, 32], strides = [1, 1]} : vector<2x128xf32> to vector<2x32xf32>
    %495 = math.tanh %494 : vector<2x32xf32>
    %496 = vector.extract_strided_slice %461 {offsets = [0, 96], sizes = [2, 32], strides = [1, 1]} : vector<2x128xf32> to vector<2x32xf32>
    %497 = arith.negf %496 : vector<2x32xf32>
    %498 = math.exp %497 : vector<2x32xf32>
    %cst_154 = arith.constant 1.000000e+00 : f32
    %499 = vector.broadcast %cst_154 : f32 to vector<2x32xf32>
    %500 = arith.addf %499, %498 : vector<2x32xf32>
    %501 = arith.divf %499, %500 : vector<2x32xf32>
    %502 = arith.mulf %473, %435 : vector<2x32xf32>
    %503 = arith.mulf %467, %475 : vector<2x32xf32>
    %504 = arith.addf %502, %503 : vector<2x32xf32>
    %505 = math.tanh %504 : vector<2x32xf32>
    %506 = arith.mulf %481, %505 : vector<2x32xf32>
    %507 = arith.mulf %493, %440 : vector<2x32xf32>
    %508 = arith.mulf %487, %495 : vector<2x32xf32>
    %509 = arith.addf %507, %508 : vector<2x32xf32>
    %510 = math.tanh %509 : vector<2x32xf32>
    %511 = arith.mulf %501, %510 : vector<2x32xf32>
    %512 = arith.index_cast %c6_i32 : i32 to index
    %c0_155 = arith.constant 0 : index
    %c0_156 = arith.constant 0 : index
    %513 = vector.load %arg6[%512, %c0_155, %c0_156] : memref<8x2x32xf32, #tpu.memory_space<vmem>>, vector<1x2x32xf32>
    %514 = vector.shape_cast %513 : vector<1x2x32xf32> to vector<2x32xf32>
    %515 = vector.shape_cast %506 : vector<2x32xf32> to vector<1x2x32xf32>
    tpu.vector_store %arg6[%512, %c0_155, %c0_156], %515 {strides = array<i32>} : memref<8x2x32xf32, #tpu.memory_space<vmem>>, vector<1x2x32xf32>,
    %516 = arith.index_cast %451 : i32 to index
    %c0_157 = arith.constant 0 : index
    %c0_158 = arith.constant 0 : index
    %517 = vector.load %arg7[%516, %c0_157, %c0_158] : memref<8x2x32xf32, #tpu.memory_space<vmem>>, vector<1x2x32xf32>
    %518 = vector.shape_cast %517 : vector<1x2x32xf32> to vector<2x32xf32>
    %519 = vector.shape_cast %511 : vector<2x32xf32> to vector<1x2x32xf32>
    tpu.vector_store %arg7[%516, %c0_157, %c0_158], %519 {strides = array<i32>} : memref<8x2x32xf32, #tpu.memory_space<vmem>>, vector<1x2x32xf32>,
    %c7_i32_159 = arith.constant 7 : i32
    %c7_i32_160 = arith.constant 7 : i32
    %520 = arith.subi %c7_i32_160, %c7_i32_159 : i32
    %521 = arith.index_cast %c7_i32_159 : i32 to index
    %c0_161 = arith.constant 0 : index
    %c0_162 = arith.constant 0 : index
    %522 = vector.load %arg8[%521, %c0_161, %c0_162] : memref<8x2x128xf32, #tpu.memory_space<vmem>>, vector<1x2x128xf32>
    %523 = vector.shape_cast %522 : vector<1x2x128xf32> to vector<2x128xf32>
    %cst_163 = arith.constant dense<0.000000e+00> : vector<2x128xf32>
    %524 = tpu.matmul %506, %8, %cst_163 {dimension_numbers = #tpu.dot_dimension_numbers<[1], [0], [0], [1], [0, 0, 1, 1], [], []>} : vector<2x32xf32>, vector<32x128xf32>, vector<2x128xf32> -> vector<2x128xf32>
    %525 = arith.addf %523, %524 : vector<2x128xf32>
    %526 = arith.index_cast %520 : i32 to index
    %c0_164 = arith.constant 0 : index
    %c0_165 = arith.constant 0 : index
    %527 = vector.load %arg9[%526, %c0_164, %c0_165] : memref<8x2x128xf32, #tpu.memory_space<vmem>>, vector<1x2x128xf32>
    %528 = vector.shape_cast %527 : vector<1x2x128xf32> to vector<2x128xf32>
    %cst_166 = arith.constant dense<0.000000e+00> : vector<2x128xf32>
    %529 = tpu.matmul %511, %10, %cst_166 {dimension_numbers = #tpu.dot_dimension_numbers<[1], [0], [0], [1], [0, 0, 1, 1], [], []>} : vector<2x32xf32>, vector<32x128xf32>, vector<2x128xf32> -> vector<2x128xf32>
    %530 = arith.addf %528, %529 : vector<2x128xf32>
    %531 = vector.extract_strided_slice %525 {offsets = [0, 0], sizes = [2, 32], strides = [1, 1]} : vector<2x128xf32> to vector<2x32xf32>
    %532 = arith.negf %531 : vector<2x32xf32>
    %533 = math.exp %532 : vector<2x32xf32>
    %cst_167 = arith.constant 1.000000e+00 : f32
    %534 = vector.broadcast %cst_167 : f32 to vector<2x32xf32>
    %535 = arith.addf %534, %533 : vector<2x32xf32>
    %536 = arith.divf %534, %535 : vector<2x32xf32>
    %537 = vector.extract_strided_slice %525 {offsets = [0, 32], sizes = [2, 32], strides = [1, 1]} : vector<2x128xf32> to vector<2x32xf32>
    %538 = arith.negf %537 : vector<2x32xf32>
    %539 = math.exp %538 : vector<2x32xf32>
    %cst_168 = arith.constant 1.000000e+00 : f32
    %540 = vector.broadcast %cst_168 : f32 to vector<2x32xf32>
    %541 = arith.addf %540, %539 : vector<2x32xf32>
    %542 = arith.divf %540, %541 : vector<2x32xf32>
    %543 = vector.extract_strided_slice %525 {offsets = [0, 64], sizes = [2, 32], strides = [1, 1]} : vector<2x128xf32> to vector<2x32xf32>
    %544 = math.tanh %543 : vector<2x32xf32>
    %545 = vector.extract_strided_slice %525 {offsets = [0, 96], sizes = [2, 32], strides = [1, 1]} : vector<2x128xf32> to vector<2x32xf32>
    %546 = arith.negf %545 : vector<2x32xf32>
    %547 = math.exp %546 : vector<2x32xf32>
    %cst_169 = arith.constant 1.000000e+00 : f32
    %548 = vector.broadcast %cst_169 : f32 to vector<2x32xf32>
    %549 = arith.addf %548, %547 : vector<2x32xf32>
    %550 = arith.divf %548, %549 : vector<2x32xf32>
    %551 = vector.extract_strided_slice %530 {offsets = [0, 0], sizes = [2, 32], strides = [1, 1]} : vector<2x128xf32> to vector<2x32xf32>
    %552 = arith.negf %551 : vector<2x32xf32>
    %553 = math.exp %552 : vector<2x32xf32>
    %cst_170 = arith.constant 1.000000e+00 : f32
    %554 = vector.broadcast %cst_170 : f32 to vector<2x32xf32>
    %555 = arith.addf %554, %553 : vector<2x32xf32>
    %556 = arith.divf %554, %555 : vector<2x32xf32>
    %557 = vector.extract_strided_slice %530 {offsets = [0, 32], sizes = [2, 32], strides = [1, 1]} : vector<2x128xf32> to vector<2x32xf32>
    %558 = arith.negf %557 : vector<2x32xf32>
    %559 = math.exp %558 : vector<2x32xf32>
    %cst_171 = arith.constant 1.000000e+00 : f32
    %560 = vector.broadcast %cst_171 : f32 to vector<2x32xf32>
    %561 = arith.addf %560, %559 : vector<2x32xf32>
    %562 = arith.divf %560, %561 : vector<2x32xf32>
    %563 = vector.extract_strided_slice %530 {offsets = [0, 64], sizes = [2, 32], strides = [1, 1]} : vector<2x128xf32> to vector<2x32xf32>
    %564 = math.tanh %563 : vector<2x32xf32>
    %565 = vector.extract_strided_slice %530 {offsets = [0, 96], sizes = [2, 32], strides = [1, 1]} : vector<2x128xf32> to vector<2x32xf32>
    %566 = arith.negf %565 : vector<2x32xf32>
    %567 = math.exp %566 : vector<2x32xf32>
    %cst_172 = arith.constant 1.000000e+00 : f32
    %568 = vector.broadcast %cst_172 : f32 to vector<2x32xf32>
    %569 = arith.addf %568, %567 : vector<2x32xf32>
    %570 = arith.divf %568, %569 : vector<2x32xf32>
    %571 = arith.mulf %542, %504 : vector<2x32xf32>
    %572 = arith.mulf %536, %544 : vector<2x32xf32>
    %573 = arith.addf %571, %572 : vector<2x32xf32>
    %574 = math.tanh %573 : vector<2x32xf32>
    %575 = arith.mulf %550, %574 : vector<2x32xf32>
    %576 = arith.mulf %562, %509 : vector<2x32xf32>
    %577 = arith.mulf %556, %564 : vector<2x32xf32>
    %578 = arith.addf %576, %577 : vector<2x32xf32>
    %579 = math.tanh %578 : vector<2x32xf32>
    %580 = arith.mulf %570, %579 : vector<2x32xf32>
    %581 = arith.index_cast %c7_i32_159 : i32 to index
    %c0_173 = arith.constant 0 : index
    %c0_174 = arith.constant 0 : index
    %582 = vector.load %arg6[%581, %c0_173, %c0_174] : memref<8x2x32xf32, #tpu.memory_space<vmem>>, vector<1x2x32xf32>
    %583 = vector.shape_cast %582 : vector<1x2x32xf32> to vector<2x32xf32>
    %584 = vector.shape_cast %575 : vector<2x32xf32> to vector<1x2x32xf32>
    tpu.vector_store %arg6[%581, %c0_173, %c0_174], %584 {strides = array<i32>} : memref<8x2x32xf32, #tpu.memory_space<vmem>>, vector<1x2x32xf32>,
    %585 = arith.index_cast %520 : i32 to index
    %c0_175 = arith.constant 0 : index
    %c0_176 = arith.constant 0 : index
    %586 = vector.load %arg7[%585, %c0_175, %c0_176] : memref<8x2x32xf32, #tpu.memory_space<vmem>>, vector<1x2x32xf32>
    %587 = vector.shape_cast %586 : vector<1x2x32xf32> to vector<2x32xf32>
    %588 = vector.shape_cast %580 : vector<2x32xf32> to vector<1x2x32xf32>
    tpu.vector_store %arg7[%585, %c0_175, %c0_176], %588 {strides = array<i32>} : memref<8x2x32xf32, #tpu.memory_space<vmem>>, vector<1x2x32xf32>,
    %c8_i32 = arith.constant 8 : i32
    %c0_177 = arith.constant 0 : index
    %c0_178 = arith.constant 0 : index
    %c0_179 = arith.constant 0 : index
    %589 = vector.load %arg10[%c0_177, %c0_178, %c0_179] : memref<4x2x32xf32, #tpu.memory_space<vmem>>, vector<1x2x32xf32>
    %590 = vector.shape_cast %589 : vector<1x2x32xf32> to vector<2x32xf32>
    %591 = vector.shape_cast %575 : vector<2x32xf32> to vector<1x2x32xf32>
    tpu.vector_store %arg10[%c0_177, %c0_178, %c0_179], %591 {strides = array<i32>} : memref<4x2x32xf32, #tpu.memory_space<vmem>>, vector<1x2x32xf32>,
    %c1_180 = arith.constant 1 : index
    %c0_181 = arith.constant 0 : index
    %c0_182 = arith.constant 0 : index
    %592 = vector.load %arg10[%c1_180, %c0_181, %c0_182] : memref<4x2x32xf32, #tpu.memory_space<vmem>>, vector<1x2x32xf32>
    %593 = vector.shape_cast %592 : vector<1x2x32xf32> to vector<2x32xf32>
    %594 = vector.shape_cast %573 : vector<2x32xf32> to vector<1x2x32xf32>
    tpu.vector_store %arg10[%c1_180, %c0_181, %c0_182], %594 {strides = array<i32>} : memref<4x2x32xf32, #tpu.memory_space<vmem>>, vector<1x2x32xf32>,
    %c2_183 = arith.constant 2 : index
    %c0_184 = arith.constant 0 : index
    %c0_185 = arith.constant 0 : index
    %595 = vector.load %arg10[%c2_183, %c0_184, %c0_185] : memref<4x2x32xf32, #tpu.memory_space<vmem>>, vector<1x2x32xf32>
    %596 = vector.shape_cast %595 : vector<1x2x32xf32> to vector<2x32xf32>
    %597 = vector.shape_cast %580 : vector<2x32xf32> to vector<1x2x32xf32>
    tpu.vector_store %arg10[%c2_183, %c0_184, %c0_185], %597 {strides = array<i32>} : memref<4x2x32xf32, #tpu.memory_space<vmem>>, vector<1x2x32xf32>,
    %c3_186 = arith.constant 3 : index
    %c0_187 = arith.constant 0 : index
    %c0_188 = arith.constant 0 : index
    %598 = vector.load %arg10[%c3_186, %c0_187, %c0_188] : memref<4x2x32xf32, #tpu.memory_space<vmem>>, vector<1x2x32xf32>
    %599 = vector.shape_cast %598 : vector<1x2x32xf32> to vector<2x32xf32>
    %600 = vector.shape_cast %578 : vector<2x32xf32> to vector<1x2x32xf32>
    tpu.vector_store %arg10[%c3_186, %c0_187, %c0_188], %600 {strides = array<i32>} : memref<4x2x32xf32, #tpu.memory_space<vmem>>, vector<1x2x32xf32>,
    return
  }
  func.func @transform_0(%arg0: i32) -> (i32, i32, i32) {
    %c0_i32 = arith.constant 0 : i32
    %c0_i32_0 = arith.constant 0 : i32
    %c0_i32_1 = arith.constant 0 : i32
    return %arg0, %c0_i32, %c0_i32_0 : i32, i32, i32
  }
  func.func @transform_1(%arg0: i32) -> (i32, i32, i32) {
    %c0_i32 = arith.constant 0 : i32
    %0 = arith.subi %c0_i32, %arg0 : i32
    %c0_i32_0 = arith.constant 0 : i32
    %c0_i32_1 = arith.constant 0 : i32
    %c0_i32_2 = arith.constant 0 : i32
    return %0, %c0_i32_0, %c0_i32_1 : i32, i32, i32
  }
  func.func @transform_2(%arg0: i32) -> (i32, i32, i32) {
    %c0_i32 = arith.constant 0 : i32
    %c0_i32_0 = arith.constant 0 : i32
    %c0_i32_1 = arith.constant 0 : i32
    %c0_i32_2 = arith.constant 0 : i32
    return %c0_i32, %c0_i32_0, %c0_i32_1 : i32, i32, i32
  }
  func.func @transform_3(%arg0: i32) -> (i32, i32, i32) {
    %c0_i32 = arith.constant 0 : i32
    %c0_i32_0 = arith.constant 0 : i32
    %c0_i32_1 = arith.constant 0 : i32
    %c0_i32_2 = arith.constant 0 : i32
    return %c0_i32, %c0_i32_0, %c0_i32_1 : i32, i32, i32
  }
  func.func @transform_4(%arg0: i32) -> (i32, i32, i32) {
    %c0_i32 = arith.constant 0 : i32
    %c0_i32_0 = arith.constant 0 : i32
    %c0_i32_1 = arith.constant 0 : i32
    %c0_i32_2 = arith.constant 0 : i32
    return %c0_i32, %c0_i32_0, %c0_i32_1 : i32, i32, i32
  }
  func.func @transform_5(%arg0: i32) -> (i32, i32, i32) {
    %c0_i32 = arith.constant 0 : i32
    %c0_i32_0 = arith.constant 0 : i32
    %c0_i32_1 = arith.constant 0 : i32
    return %arg0, %c0_i32, %c0_i32_0 : i32, i32, i32
  }
  func.func @transform_6(%arg0: i32) -> (i32, i32, i32) {
    %c0_i32 = arith.constant 0 : i32
    %0 = arith.subi %c0_i32, %arg0 : i32
    %c0_i32_0 = arith.constant 0 : i32
    %c0_i32_1 = arith.constant 0 : i32
    %c0_i32_2 = arith.constant 0 : i32
    return %0, %c0_i32_0, %c0_i32_1 : i32, i32, i32
  }
}

</mosaic_0001>

<llo_original>
// kernel: tpu_custom_call.1
$region0: #{tpu_custom_call.1}
  #allocation0 [shape = 'u32[]', space=smem, size = 0x4, offset = 0x4, fixed_abs, tag = 'smem constant byte address 0x4 - core index']
  #allocation1 [shape = 'u32[144,128]{1,0:T(1,128)}', space=vmem, size = 0x12000, scoped, tag = 'internal scratch']
  #allocation2 [shape = 'f32[8,2,128]{2,1,0:T(2,128)}', space=vmem, size = 0x2000, scoped, tag = 'scratch operand']
  #allocation3 [shape = 'f32[8,2,128]{2,1,0:T(2,128)}', space=vmem, size = 0x2000, scoped, tag = 'scratch operand']
  #allocation4 [shape = 'f32[4,2,32]{2,1,0:T(2,128)}', space=vmem, size = 0x1000, scoped, tag = 'scratch operand']
  %s0 = inlined_call_operand.hbm [shape: f32[8,2,16], index: 0, kind: input, shape index: {}]
  %s1 = inlined_call_operand.hbm [shape: f32[8,2,16], index: 1, kind: input, shape index: {}]
  %s2 = inlined_call_operand.hbm [shape: f32[2,16,128], index: 2, kind: input, shape index: {}]
  %s3 = inlined_call_operand.hbm [shape: f32[2,32,128], index: 3, kind: input, shape index: {}]
  %s4 = inlined_call_operand.vmem [shape: f32[2,1,128], index: 4, kind: input, shape index: {}]
  %s5 = inlined_call_operand.hbm [shape: f32[8,2,32], index: 5, kind: output, shape index: {0}]
  %s6 = inlined_call_operand.hbm [shape: f32[8,2,32], index: 6, kind: output, shape index: {1}]
  %7 = xla_tuple %s5, %s6
  %s8 = sld [smem:[#allocation0]]
  $region58: #{tpu_custom_call.1} parent=0
    _
  %s10 = ssub.s32 1, %s8
  %s11 = scalar_select 0, %s10, %s8
  $region1: #{tpu_custom_call.1} parent=0
    #allocation5 [shape = 'u8[8192]{0}', space=vmem, size = 0x2000, scoped, tag = 'input window, operand 0, single buffered']
    #allocation6 [shape = 's32[1]{0}', space=sflag, size = 0x4, scoped, tag = 'scoped memory for tpu_custom_call.1']
    #allocation7 [shape = 's32[1]{0}', space=sflag, size = 0x4, scoped, tag = 'scoped memory for tpu_custom_call.1']
    #allocation8 [shape = 'u8[8192]{0}', space=vmem, size = 0x2000, scoped, tag = 'input window, operand 1, single buffered']
    #allocation9 [shape = 's32[1]{0}', space=sflag, size = 0x4, scoped, tag = 'scoped memory for tpu_custom_call.1']
    #allocation10 [shape = 'u8[16384]{0}', space=vmem, size = 0x4000, scoped, tag = 'input window, operand 2, single buffered']
    #allocation11 [shape = 'u8[32768]{0}', space=vmem, size = 0x8000, scoped, tag = 'input window, operand 3, single buffered']
    #allocation12 [shape = 's32[1]{0}', space=sflag, size = 0x4, scoped, tag = 'scoped memory for tpu_custom_call.1']
    #allocation13 [shape = 'u8[8192]{0}', space=vmem, size = 0x2000, scoped, tag = 'output window, operand 0, single buffered']
    #allocation14 [shape = 'u8[8192]{0}', space=vmem, size = 0x2000, scoped, tag = 'output window, operand 1, single buffered']
    #allocation15 [shape = 's32[1]{0}', space=sflag, size = 0x4, scoped, tag = 'scoped memory for tpu_custom_call.1']
    %12 = vsyncpa [#allocation6], 0
    %13 = vsyncpa [#allocation9], 0
    %14 = vsyncpa [#allocation12], 0
    %15 = vsyncpa [#allocation7], 0
    %16 = vsyncpa [#allocation15], 0
    // Predicated region
    $region2: #{tpu_custom_call.1} parent=1 // pred_check
      _
    $region3: #{tpu_custom_call.1} parent=1 // pred_check_branch
      %18 = sbr.rel (0) target = $region5
    $region4: #{tpu_custom_call.1} parent=1 // pred_region
      %s20 = ssub.s32 256, 256
      %21 = vsyncadd [#allocation6], %s20
      %s22 = sshll.u32 [#allocation5], 4
      %s23 = int_to_ptr.vmem [resolvable:$true] %s22
      %28 = dma.hbm_to_vmem [thread:$0]  %s0, 256, %s23, [#allocation6], 32, 32, 2
    $region5: #{tpu_custom_call.1} parent=1 // pred_fallthru
      _
    // Predicated region
    $region6: #{tpu_custom_call.1} parent=1 // pred_check
      _
    $region7: #{tpu_custom_call.1} parent=1 // pred_check_branch
      %30 = sbr.rel (0) target = $region9
    $region8: #{tpu_custom_call.1} parent=1 // pred_region
      %s31 = ssub.s32 0, 0
      %s32 = smul.u32 8, %s31
      %s34 = ssub.s32 256, 256
      %35 = vsyncadd [#allocation9], %s34
      %s36 = smul.addr %s32, 32
      %s37 = scalar_lea.hbm %s1, %s36
      %s38 = sshll.u32 [#allocation8], 4
      %s39 = int_to_ptr.vmem [resolvable:$true] %s38
      %44 = dma.hbm_to_vmem [thread:$0]  %s37, 256, %s39, [#allocation9], 32, 32, 2
    $region9: #{tpu_custom_call.1} parent=1 // pred_fallthru
      _
    // Predicated region
    $region10: #{tpu_custom_call.1} parent=1 // pred_check
      _
    $region11: #{tpu_custom_call.1} parent=1 // pred_check_branch
      %46 = sbr.rel (0) target = $region13
    $region12: #{tpu_custom_call.1} parent=1 // pred_region
      %s48 = ssub.s32 512, 512
      %49 = vsyncadd [#allocation9], %s48
      %s50 = sshll.u32 [#allocation10], 4
      %s51 = int_to_ptr.vmem [resolvable:$true] %s50
      %56 = dma.hbm_to_vmem [thread:$0]  %s2, 512, %s51, [#allocation9], 128, 128, 8
    $region13: #{tpu_custom_call.1} parent=1 // pred_fallthru
      _
    // Predicated region
    $region14: #{tpu_custom_call.1} parent=1 // pred_check
      _
    $region15: #{tpu_custom_call.1} parent=1 // pred_check_branch
      %58 = sbr.rel (0) target = $region17
    $region16: #{tpu_custom_call.1} parent=1 // pred_region
      %s60 = ssub.s32 1024, 1024
      %61 = vsyncadd [#allocation12], %s60
      %s62 = sshll.u32 [#allocation11], 4
      %s63 = int_to_ptr.vmem [resolvable:$true] %s62
      %68 = dma.hbm_to_vmem [thread:$0]  %s3, 1024, %s63, [#allocation12], 128, 128, 8
    $region17: #{tpu_custom_call.1} parent=1 // pred_fallthru
      _
    // Predicated region
    $region18: #{tpu_custom_call.1} parent=1 // pred_check
      _
    $region19: #{tpu_custom_call.1} parent=1 // pred_check_branch
      %70 = sbr.rel (0) target = $region21
    $region20: #{tpu_custom_call.1} parent=1 // pred_region
      _
    $region21: #{tpu_custom_call.1} parent=1 // pred_fallthru
      _
    // Predicated region
    $region22: #{tpu_custom_call.1} parent=1 // pred_check
      _
    $region23: #{tpu_custom_call.1} parent=1 // pred_check_branch
      %72 = sbr.rel (0) target = $region25
    $region24: #{tpu_custom_call.1} parent=1 // pred_region
      %73 = dma.done [#allocation6], 256
    $region25: #{tpu_custom_call.1} parent=1 // pred_fallthru
      _
    // Predicated region
    $region26: #{tpu_custom_call.1} parent=1 // pred_check
      _
    $region27: #{tpu_custom_call.1} parent=1 // pred_check_branch
      %75 = sbr.rel (0) target = $region29
    $region28: #{tpu_custom_call.1} parent=1 // pred_region
      %76 = dma.done [#allocation9], 256
    $region29: #{tpu_custom_call.1} parent=1 // pred_fallthru
      _
    // Predicated region
    $region30: #{tpu_custom_call.1} parent=1 // pred_check
      _
    $region31: #{tpu_custom_call.1} parent=1 // pred_check_branch
      %78 = sbr.rel (0) target = $region33
    $region32: #{tpu_custom_call.1} parent=1 // pred_region
      %79 = dma.done [#allocation9], 512
    $region33: #{tpu_custom_call.1} parent=1 // pred_fallthru
      _
    // Predicated region
    $region34: #{tpu_custom_call.1} parent=1 // pred_check
      _
    $region35: #{tpu_custom_call.1} parent=1 // pred_check_branch
      %81 = sbr.rel (0) target = $region37
    $region36: #{tpu_custom_call.1} parent=1 // pred_region
      %82 = dma.done [#allocation12], 1024
    $region37: #{tpu_custom_call.1} parent=1 // pred_fallthru
      _
    %s83 = ssub.s32 0, 0
    %s84 = smul.u32 8, %s83
    %s85 = ssub.s32 0, 0
    %s86 = smul.u32 8, %s85
    %p87 = scmp.eq.s32.totalorder 0, 0
    // Predicated region
    $region38: #{tpu_custom_call.1} parent=1 // pred_check
      %p88 = pneg %p87
    $region39: #{tpu_custom_call.1} parent=1 // pred_check_branch
      %90 = sbr.rel (%p88) target = $region41
    $region40: #{tpu_custom_call.1} parent=1 // pred_region
      %vm91 = vcmask 254976
      %92 = vst.msk [vmem:[#allocation4] sm:$0x3] %vm91, 0.0
      %93 = vst.msk [vmem:[#allocation4 + $0x2] sm:$0x3] %vm91, 0.0
      %94 = vst.msk [vmem:[#allocation4 + $0x4] sm:$0x3] %vm91, 0.0
      %95 = vst.msk [vmem:[#allocation4 + $0x6] sm:$0x3] %vm91, 0.0
    $region41: #{tpu_custom_call.1} parent=1 // pred_fallthru
      _
    %v96 = vld [vmem:[#allocation10] sm:$0xff]
    %v97 = vld [vmem:[#allocation10 + $0x8] sm:$0xff]
    %s98 = scalar_lea.vmem [#allocation10], 16
    %v99 = vld [vmem:[%s98] sm:$0xff]
    %v100 = vld [vmem:[%s98 + $0x8] sm:$0xff]
    %v101 = vld [vmem:[#allocation11] sm:$0xff]
    %v102 = vld [vmem:[#allocation11 + $0x8] sm:$0xff]
    %v103 = vld [vmem:[#allocation11 + $0x10] sm:$0xff]
    %v104 = vld [vmem:[#allocation11 + $0x18] sm:$0xff]
    %s105 = scalar_lea.vmem [#allocation11], 32
    %v106 = vld [vmem:[%s105] sm:$0xff]
    %v107 = vld [vmem:[%s105 + $0x8] sm:$0xff]
    %v108 = vld [vmem:[%s105 + $0x10] sm:$0xff]
    %v109 = vld [vmem:[%s105 + $0x18] sm:$0xff]
    %v110 = vld [vmem:[%s4] sm:$0x1]
    %s111 = scalar_lea.vmem %s4, 1
    %v112 = vld [vmem:[%s111] sm:$0x1]
    %v113 = vld [vmem:[#allocation5] sm:$0x3]
    %v114 = vld [vmem:[#allocation5 + $0x2] sm:$0x3]
    %v115 = vld [vmem:[#allocation5 + $0x4] sm:$0x3]
    %v116 = vld [vmem:[#allocation5 + $0x6] sm:$0x3]
    %v117 = vld [vmem:[#allocation5 + $0x8] sm:$0x3]
    %v118 = vld [vmem:[#allocation5 + $0xa] sm:$0x3]
    %v119 = vld [vmem:[#allocation5 + $0xc] sm:$0x3]
    %v120 = vld [vmem:[#allocation5 + $0xe] sm:$0x3]
    %v122 = vlaneseq
    %v123 = vshrl.u32 %v122, 7
    %v124 = vsub.s32 0, %v123
    %v125 = vrot.slane %v110, %v124
    %v135 = vcombine.low %v113, %v114
    %v136 = vcombine.low %v115, %v116
    %v138 = vunpack.c.l.s4 1983009808
    %v139 = vunpack.c.0.s8 %v138
    %v140 = vlaneseq
    %v141 = vshrl.u32 %v140, 7
    %v142 = vsub.s32 %v139, %v141
    %v143 = vrot.slane %v135, %v142
    %v145 = vunpack.c.l.s4 1983009808
    %v146 = vunpack.c.0.s8 %v145
    %v147 = vlaneseq
    %v148 = vshrl.u32 %v147, 7
    %v149 = vsub.s32 %v146, %v148
    %v150 = vrot.slane %v136, %v149
    %v151 = vcombine.low %v143, %v150
    %v152 = vcombine.low %v117, %v118
    %v153 = vcombine.low %v119, %v120
    %v155 = vunpack.c.l.s4 1983009808
    %v156 = vunpack.c.0.s8 %v155
    %v157 = vlaneseq
    %v158 = vshrl.u32 %v157, 7
    %v159 = vsub.s32 %v156, %v158
    %v160 = vrot.slane %v152, %v159
    %v162 = vunpack.c.l.s4 1983009808
    %v163 = vunpack.c.0.s8 %v162
    %v164 = vlaneseq
    %v165 = vshrl.u32 %v164, 7
    %v166 = vsub.s32 %v163, %v165
    %v167 = vrot.slane %v153, %v166
    %v168 = vcombine.low %v160, %v167
    %vm169 = vcmask 130048
    %v170 = vsel %vm169, %v151, 0
    %v172 = vsel %vm169, %v168, 0
    %174 = vmatprep.subr.mxu0 0.0
    %175 = vmatpush1.msra.mxu0 0.0
    %176 = vmatprep.subr.mxu0 0.0
    %177 = vmatpush1.msra.mxu0 0.0
    %178 = vmatprep.subr.mxu0 0.0
    %179 = vmatpush1.msra.mxu0 0.0
    %180 = vmatprep.subr.mxu0 0.0
    %181 = vmatpush1.msra.mxu0 0.0
    %182 = vmatprep.subr.mxu0 0.0
    %183 = vmatpush1.msra.mxu0 0.0
    %184 = vmatprep.subr.mxu0 0.0
    %185 = vmatpush1.msra.mxu0 0.0
    %186 = vmatprep.subr.mxu0 0.0
    %187 = vmatpush1.msra.mxu0 0.0
    %188 = vmatprep.subr.mxu0 0.0
    %189 = vmatpush1.msra.mxu0 0.0
    %190 = vmatprep.subr.mxu0 0.0
    %191 = vmatpush1.msra.mxu0 0.0
    %192 = vmatprep.subr.mxu0 0.0
    %193 = vmatpush1.msra.mxu0 0.0
    %194 = vmatprep.subr.mxu0 0.0
    %195 = vmatpush1.msra.mxu0 0.0
    %196 = vmatprep.subr.mxu0 0.0
    %197 = vmatpush1.msra.mxu0 0.0
    %198 = vmatprep.subr.mxu0 0.0
    %199 = vmatpush1.msra.mxu0 0.0
    %200 = vmatprep.subr.mxu0 0.0
    %201 = vmatpush1.msra.mxu0 0.0
    %202 = vmatprep.subr.mxu0 0.0
    %203 = vmatpush1.msra.mxu0 %v97
    %204 = vmatprep.subr.mxu0 0.0
    %205 = vmatpush1.msra.mxu0 %v96
    %206 = vmatprep.subr.mxu0 0.0
    %207 = vmatpush2.msra.mxu0 0.0
    %208 = vmatprep.subr.mxu0 0.0
    %209 = vmatpush2.msra.mxu0 0.0
    %210 = vmatprep.subr.mxu0 0.0
    %211 = vmatpush2.msra.mxu0 0.0
    %212 = vmatprep.subr.mxu0 0.0
    %213 = vmatpush2.msra.mxu0 0.0
    %214 = vmatprep.subr.mxu0 0.0
    %215 = vmatpush2.msra.mxu0 0.0
    %216 = vmatprep.subr.mxu0 0.0
    %217 = vmatpush2.msra.mxu0 0.0
    %218 = vmatprep.subr.mxu0 0.0
    %219 = vmatpush2.msra.mxu0 0.0
    %220 = vmatprep.subr.mxu0 0.0
    %221 = vmatpush2.msra.mxu0 0.0
    %222 = vmatprep.subr.mxu0 0.0
    %223 = vmatpush2.msra.mxu0 0.0
    %224 = vmatprep.subr.mxu0 0.0
    %225 = vmatpush2.msra.mxu0 0.0
    %226 = vmatprep.subr.mxu0 0.0
    %227 = vmatpush2.msra.mxu0 0.0
    %228 = vmatprep.subr.mxu0 0.0
    %229 = vmatpush2.msra.mxu0 0.0
    %230 = vmatprep.subr.mxu0 0.0
    %231 = vmatpush2.msra.mxu0 0.0
    %232 = vmatprep.subr.mxu0 0.0
    %233 = vmatpush2.msra.mxu0 0.0
    %234 = vmatprep.subr.mxu0 0.0
    %235 = vmatpush2.msra.mxu0 0.0
    %236 = vmatprep.subr.mxu0 0.0
    %237 = vmatpush2.msra.mxu0 0.0
    %238 = vmatprep.mubr.f32.mxu0 0.0
    %239 = vmatmul.mubr.f32.gmra.mxu0 %v170
    %v240 = vpop.f32.mrf.mxu0
    %v241 = vadd.f32 %v125, %v240
    %v242 = vpop.f32.mrf.mxu0
    %243 = vmatprep.mubr.f32.mxu0 0.0
    %244 = vmatmul.mubr.f32.gmra.mxu0 %v172
    %v245 = vpop.f32.mrf.mxu0
    %v246 = vadd.f32 %v125, %v245
    %v247 = vpop.f32.mrf.mxu0
    %248 = vdwg.mxu0
    %v249 = vld [vmem:[#allocation8] sm:$0x3]
    %v250 = vld [vmem:[#allocation8 + $0x2] sm:$0x3]
    %v251 = vld [vmem:[#allocation8 + $0x4] sm:$0x3]
    %v252 = vld [vmem:[#allocation8 + $0x6] sm:$0x3]
    %v253 = vld [vmem:[#allocation8 + $0x8] sm:$0x3]
    %v254 = vld [vmem:[#allocation8 + $0xa] sm:$0x3]
    %v255 = vld [vmem:[#allocation8 + $0xc] sm:$0x3]
    %v256 = vld [vmem:[#allocation8 + $0xe] sm:$0x3]
    %v258 = vlaneseq
    %v259 = vshrl.u32 %v258, 7
    %v260 = vsub.s32 0, %v259
    %v261 = vrot.slane %v112, %v260
    %v271 = vcombine.low %v249, %v250
    %v272 = vcombine.low %v251, %v252
    %v274 = vunpack.c.l.s4 1983009808
    %v275 = vunpack.c.0.s8 %v274
    %v276 = vlaneseq
    %v277 = vshrl.u32 %v276, 7
    %v278 = vsub.s32 %v275, %v277
    %v279 = vrot.slane %v271, %v278
    %v281 = vunpack.c.l.s4 1983009808
    %v282 = vunpack.c.0.s8 %v281
    %v283 = vlaneseq
    %v284 = vshrl.u32 %v283, 7
    %v285 = vsub.s32 %v282, %v284
    %v286 = vrot.slane %v272, %v285
    %v287 = vcombine.low %v279, %v286
    %v288 = vcombine.low %v253, %v254
    %v289 = vcombine.low %v255, %v256
    %v291 = vunpack.c.l.s4 1983009808
    %v292 = vunpack.c.0.s8 %v291
    %v293 = vlaneseq
    %v294 = vshrl.u32 %v293, 7
    %v295 = vsub.s32 %v292, %v294
    %v296 = vrot.slane %v288, %v295
    %v298 = vunpack.c.l.s4 1983009808
    %v299 = vunpack.c.0.s8 %v298
    %v300 = vlaneseq
    %v301 = vshrl.u32 %v300, 7
    %v302 = vsub.s32 %v299, %v301
    %v303 = vrot.slane %v289, %v302
    %v304 = vcombine.low %v296, %v303
    %v305 = vsel %vm169, %v287, 0
    %v307 = vsel %vm169, %v304, 0
    %309 = vmatprep.subr.mxu0 0.0
    %310 = vmatpush1.msra.mxu0 0.0
    %311 = vmatprep.subr.mxu0 0.0
    %312 = vmatpush1.msra.mxu0 0.0
    %313 = vmatprep.subr.mxu0 0.0
    %314 = vmatpush1.msra.mxu0 0.0
    %315 = vmatprep.subr.mxu0 0.0
    %316 = vmatpush1.msra.mxu0 0.0
    %317 = vmatprep.subr.mxu0 0.0
    %318 = vmatpush1.msra.mxu0 0.0
    %319 = vmatprep.subr.mxu0 0.0
    %320 = vmatpush1.msra.mxu0 0.0
    %321 = vmatprep.subr.mxu0 0.0
    %322 = vmatpush1.msra.mxu0 0.0
    %323 = vmatprep.subr.mxu0 0.0
    %324 = vmatpush1.msra.mxu0 0.0
    %325 = vmatprep.subr.mxu0 0.0
    %326 = vmatpush1.msra.mxu0 0.0
    %327 = vmatprep.subr.mxu0 0.0
    %328 = vmatpush1.msra.mxu0 0.0
    %329 = vmatprep.subr.mxu0 0.0
    %330 = vmatpush1.msra.mxu0 0.0
    %331 = vmatprep.subr.mxu0 0.0
    %332 = vmatpush1.msra.mxu0 0.0
    %333 = vmatprep.subr.mxu0 0.0
    %334 = vmatpush1.msra.mxu0 0.0
    %335 = vmatprep.subr.mxu0 0.0
    %336 = vmatpush1.msra.mxu0 0.0
    %337 = vmatprep.subr.mxu0 0.0
    %338 = vmatpush1.msra.mxu0 %v100
    %339 = vmatprep.subr.mxu0 0.0
    %340 = vmatpush1.msra.mxu0 %v99
    %341 = vmatprep.subr.mxu0 0.0
    %342 = vmatpush2.msra.mxu0 0.0
    %343 = vmatprep.subr.mxu0 0.0
    %344 = vmatpush2.msra.mxu0 0.0
    %345 = vmatprep.subr.mxu0 0.0
    %346 = vmatpush2.msra.mxu0 0.0
    %347 = vmatprep.subr.mxu0 0.0
    %348 = vmatpush2.msra.mxu0 0.0
    %349 = vmatprep.subr.mxu0 0.0
    %350 = vmatpush2.msra.mxu0 0.0
    %351 = vmatprep.subr.mxu0 0.0
    %352 = vmatpush2.msra.mxu0 0.0
    %353 = vmatprep.subr.mxu0 0.0
    %354 = vmatpush2.msra.mxu0 0.0
    %355 = vmatprep.subr.mxu0 0.0
    %356 = vmatpush2.msra.mxu0 0.0
    %357 = vmatprep.subr.mxu0 0.0
    %358 = vmatpush2.msra.mxu0 0.0
    %359 = vmatprep.subr.mxu0 0.0
    %360 = vmatpush2.msra.mxu0 0.0
    %361 = vmatprep.subr.mxu0 0.0
    %362 = vmatpush2.msra.mxu0 0.0
    %363 = vmatprep.subr.mxu0 0.0
    %364 = vmatpush2.msra.mxu0 0.0
    %365 = vmatprep.subr.mxu0 0.0
    %366 = vmatpush2.msra.mxu0 0.0
    %367 = vmatprep.subr.mxu0 0.0
    %368 = vmatpush2.msra.mxu0 0.0
    %369 = vmatprep.subr.mxu0 0.0
    %370 = vmatpush2.msra.mxu0 0.0
    %371 = vmatprep.subr.mxu0 0.0
    %372 = vmatpush2.msra.mxu0 0.0
    %373 = vmatprep.mubr.f32.mxu0 0.0
    %374 = vmatmul.mubr.f32.gmra.mxu0 %v305
    %v375 = vpop.f32.mrf.mxu0
    %v376 = vadd.f32 %v261, %v375
    %v377 = vpop.f32.mrf.mxu0
    %378 = vmatprep.mubr.f32.mxu0 0.0
    %379 = vmatmul.mubr.f32.gmra.mxu0 %v307
    %v380 = vpop.f32.mrf.mxu0
    %v381 = vadd.f32 %v261, %v380
    %v382 = vpop.f32.mrf.mxu0
    %383 = vdwg.mxu0
    %v386 = vcombine.high %v241, %v241
    %v388 = vunpack.c.l.s4 1983009808
    %v389 = vunpack.c.0.s8 %v388
    %v390 = vlaneseq
    %v391 = vshrl.u32 %v390, 7
    %v392 = vsub.s32 %v389, %v391
    %v393 = vrot.slane %v241, %v392
    %v395 = vunpack.c.l.s4 1983009808
    %v396 = vunpack.c.0.s8 %v395
    %v397 = vlaneseq
    %v398 = vshrl.u32 %v397, 7
    %v399 = vsub.s32 %v396, %v398
    %v400 = vrot.slane %v386, %v399
    %v401 = vcombine.high %v393, %v393
    %v402 = vcombine.high %v400, %v400
    %v403 = vcombine.high %v246, %v246
    %v405 = vunpack.c.l.s4 1983009808
    %v406 = vunpack.c.0.s8 %v405
    %v407 = vlaneseq
    %v408 = vshrl.u32 %v407, 7
    %v409 = vsub.s32 %v406, %v408
    %v410 = vrot.slane %v246, %v409
    %v412 = vunpack.c.l.s4 1983009808
    %v413 = vunpack.c.0.s8 %v412
    %v414 = vlaneseq
    %v415 = vshrl.u32 %v414, 7
    %v416 = vsub.s32 %v413, %v415
    %v417 = vrot.slane %v403, %v416
    %v418 = vcombine.high %v410, %v410
    %v419 = vcombine.high %v417, %v417
    %428 = vst [vmem:[#allocation2] sm:$0x3] %v393
    %429 = vst [vmem:[#allocation2 + $0x2] sm:$0x3] %v401
    %430 = vst [vmem:[#allocation2 + $0x4] sm:$0x3] %v400
    %431 = vst [vmem:[#allocation2 + $0x6] sm:$0x3] %v402
    %432 = vst [vmem:[#allocation2 + $0x8] sm:$0x3] %v410
    %433 = vst [vmem:[#allocation2 + $0xa] sm:$0x3] %v418
    %434 = vst [vmem:[#allocation2 + $0xc] sm:$0x3] %v417
    %435 = vst [vmem:[#allocation2 + $0xe] sm:$0x3] %v419
    %v438 = vcombine.high %v376, %v376
    %v440 = vunpack.c.l.s4 1983009808
    %v441 = vunpack.c.0.s8 %v440
    %v442 = vlaneseq
    %v443 = vshrl.u32 %v442, 7
    %v444 = vsub.s32 %v441, %v443
    %v445 = vrot.slane %v376, %v444
    %v447 = vunpack.c.l.s4 1983009808
    %v448 = vunpack.c.0.s8 %v447
    %v449 = vlaneseq
    %v450 = vshrl.u32 %v449, 7
    %v451 = vsub.s32 %v448, %v450
    %v452 = vrot.slane %v438, %v451
    %v453 = vcombine.high %v445, %v445
    %v454 = vcombine.high %v452, %v452
    %v455 = vcombine.high %v381, %v381
    %v457 = vunpack.c.l.s4 1983009808
    %v458 = vunpack.c.0.s8 %v457
    %v459 = vlaneseq
    %v460 = vshrl.u32 %v459, 7
    %v461 = vsub.s32 %v458, %v460
    %v462 = vrot.slane %v381, %v461
    %v464 = vunpack.c.l.s4 1983009808
    %v465 = vunpack.c.0.s8 %v464
    %v466 = vlaneseq
    %v467 = vshrl.u32 %v466, 7
    %v468 = vsub.s32 %v465, %v467
    %v469 = vrot.slane %v455, %v468
    %v470 = vcombine.high %v462, %v462
    %v471 = vcombine.high %v469, %v469
    %480 = vst [vmem:[#allocation3] sm:$0x3] %v445
    %481 = vst [vmem:[#allocation3 + $0x2] sm:$0x3] %v453
    %482 = vst [vmem:[#allocation3 + $0x4] sm:$0x3] %v452
    %483 = vst [vmem:[#allocation3 + $0x6] sm:$0x3] %v454
    %484 = vst [vmem:[#allocation3 + $0x8] sm:$0x3] %v462
    %485 = vst [vmem:[#allocation3 + $0xa] sm:$0x3] %v470
    %486 = vst [vmem:[#allocation3 + $0xc] sm:$0x3] %v469
    %487 = vst [vmem:[#allocation3 + $0xe] sm:$0x3] %v471
    %v488 = vld [vmem:[#allocation4] sm:$0x3]
    %s489 = scalar_lea.vmem [#allocation4], 2
    %v490 = vld [vmem:[%s489] sm:$0x3]
    %s491 = scalar_lea.vmem [#allocation4], 4
    %v492 = vld [vmem:[%s491] sm:$0x3]
    %s493 = scalar_lea.vmem [#allocation4], 6
    %v494 = vld [vmem:[%s493] sm:$0x3]
    %v495 = vld [vmem:[#allocation2] sm:$0x3]
    %vm496 = vcmask 261120
    %v498 = vsel %vm496, %v488, 0
    %500 = vmatprep.subr.mxu0 0.0
    %501 = vmatpush1.msra.mxu0 0.0
    %502 = vmatprep.subr.mxu0 0.0
    %503 = vmatpush1.msra.mxu0 0.0
    %504 = vmatprep.subr.mxu0 0.0
    %505 = vmatpush1.msra.mxu0 0.0
    %506 = vmatprep.subr.mxu0 0.0
    %507 = vmatpush1.msra.mxu0 0.0
    %508 = vmatprep.subr.mxu0 0.0
    %509 = vmatpush1.msra.mxu0 0.0
    %510 = vmatprep.subr.mxu0 0.0
    %511 = vmatpush1.msra.mxu0 0.0
    %512 = vmatprep.subr.mxu0 0.0
    %513 = vmatpush1.msra.mxu0 0.0
    %514 = vmatprep.subr.mxu0 0.0
    %515 = vmatpush1.msra.mxu0 0.0
    %516 = vmatprep.subr.mxu0 0.0
    %517 = vmatpush1.msra.mxu0 0.0
    %518 = vmatprep.subr.mxu0 0.0
    %519 = vmatpush1.msra.mxu0 0.0
    %520 = vmatprep.subr.mxu0 0.0
    %521 = vmatpush1.msra.mxu0 0.0
    %522 = vmatprep.subr.mxu0 0.0
    %523 = vmatpush1.msra.mxu0 0.0
    %524 = vmatprep.subr.mxu0 0.0
    %525 = vmatpush1.msra.mxu0 %v104
    %526 = vmatprep.subr.mxu0 0.0
    %527 = vmatpush1.msra.mxu0 %v103
    %528 = vmatprep.subr.mxu0 0.0
    %529 = vmatpush1.msra.mxu0 %v102
    %530 = vmatprep.subr.mxu0 0.0
    %531 = vmatpush1.msra.mxu0 %v101
    %532 = vmatprep.subr.mxu0 0.0
    %533 = vmatpush2.msra.mxu0 0.0
    %534 = vmatprep.subr.mxu0 0.0
    %535 = vmatpush2.msra.mxu0 0.0
    %536 = vmatprep.subr.mxu0 0.0
    %537 = vmatpush2.msra.mxu0 0.0
    %538 = vmatprep.subr.mxu0 0.0
    %539 = vmatpush2.msra.mxu0 0.0
    %540 = vmatprep.subr.mxu0 0.0
    %541 = vmatpush2.msra.mxu0 0.0
    %542 = vmatprep.subr.mxu0 0.0
    %543 = vmatpush2.msra.mxu0 0.0
    %544 = vmatprep.subr.mxu0 0.0
    %545 = vmatpush2.msra.mxu0 0.0
    %546 = vmatprep.subr.mxu0 0.0
    %547 = vmatpush2.msra.mxu0 0.0
    %548 = vmatprep.subr.mxu0 0.0
    %549 = vmatpush2.msra.mxu0 0.0
    %550 = vmatprep.subr.mxu0 0.0
    %551 = vmatpush2.msra.mxu0 0.0
    %552 = vmatprep.subr.mxu0 0.0
    %553 = vmatpush2.msra.mxu0 0.0
    %554 = vmatprep.subr.mxu0 0.0
    %555 = vmatpush2.msra.mxu0 0.0
    %556 = vmatprep.subr.mxu0 0.0
    %557 = vmatpush2.msra.mxu0 0.0
    %558 = vmatprep.subr.mxu0 0.0
    %559 = vmatpush2.msra.mxu0 0.0
    %560 = vmatprep.subr.mxu0 0.0
    %561 = vmatpush2.msra.mxu0 0.0
    %562 = vmatprep.subr.mxu0 0.0
    %563 = vmatpush2.msra.mxu0 0.0
    %564 = vmatprep.mubr.f32.mxu0 0.0
    %565 = vmatmul.mubr.f32.gmra.mxu0 %v498
    %v566 = vpop.f32.mrf.mxu0
    %v567 = vadd.f32 0.0, %v566
    %v568 = vpop.f32.mrf.mxu0
    %569 = vdwg.mxu0
    %v570 = vadd.f32 %v495, %v567
    %s571 = scalar_lea.vmem [#allocation3], 14
    %v572 = vld [vmem:[%s571] sm:$0x3]
    %v574 = vsel %vm496, %v492, 0
    %576 = vmatprep.subr.mxu0 0.0
    %577 = vmatpush1.msra.mxu0 0.0
    %578 = vmatprep.subr.mxu0 0.0
    %579 = vmatpush1.msra.mxu0 0.0
    %580 = vmatprep.subr.mxu0 0.0
    %581 = vmatpush1.msra.mxu0 0.0
    %582 = vmatprep.subr.mxu0 0.0
    %583 = vmatpush1.msra.mxu0 0.0
    %584 = vmatprep.subr.mxu0 0.0
    %585 = vmatpush1.msra.mxu0 0.0
    %586 = vmatprep.subr.mxu0 0.0
    %587 = vmatpush1.msra.mxu0 0.0
    %588 = vmatprep.subr.mxu0 0.0
    %589 = vmatpush1.msra.mxu0 0.0
    %590 = vmatprep.subr.mxu0 0.0
    %591 = vmatpush1.msra.mxu0 0.0
    %592 = vmatprep.subr.mxu0 0.0
    %593 = vmatpush1.msra.mxu0 0.0
    %594 = vmatprep.subr.mxu0 0.0
    %595 = vmatpush1.msra.mxu0 0.0
    %596 = vmatprep.subr.mxu0 0.0
    %597 = vmatpush1.msra.mxu0 0.0
    %598 = vmatprep.subr.mxu0 0.0
    %599 = vmatpush1.msra.mxu0 0.0
    %600 = vmatprep.subr.mxu0 0.0
    %601 = vmatpush1.msra.mxu0 %v109
    %602 = vmatprep.subr.mxu0 0.0
    %603 = vmatpush1.msra.mxu0 %v108
    %604 = vmatprep.subr.mxu0 0.0
    %605 = vmatpush1.msra.mxu0 %v107
    %606 = vmatprep.subr.mxu0 0.0
    %607 = vmatpush1.msra.mxu0 %v106
    %608 = vmatprep.subr.mxu0 0.0
    %609 = vmatpush2.msra.mxu0 0.0
    %610 = vmatprep.subr.mxu0 0.0
    %611 = vmatpush2.msra.mxu0 0.0
    %612 = vmatprep.subr.mxu0 0.0
    %613 = vmatpush2.msra.mxu0 0.0
    %614 = vmatprep.subr.mxu0 0.0
    %615 = vmatpush2.msra.mxu0 0.0
    %616 = vmatprep.subr.mxu0 0.0
    %617 = vmatpush2.msra.mxu0 0.0
    %618 = vmatprep.subr.mxu0 0.0
    %619 = vmatpush2.msra.mxu0 0.0
    %620 = vmatprep.subr.mxu0 0.0
    %621 = vmatpush2.msra.mxu0 0.0
    %622 = vmatprep.subr.mxu0 0.0
    %623 = vmatpush2.msra.mxu0 0.0
    %624 = vmatprep.subr.mxu0 0.0
    %625 = vmatpush2.msra.mxu0 0.0
    %626 = vmatprep.subr.mxu0 0.0
    %627 = vmatpush2.msra.mxu0 0.0
    %628 = vmatprep.subr.mxu0 0.0
    %629 = vmatpush2.msra.mxu0 0.0
    %630 = vmatprep.subr.mxu0 0.0
    %631 = vmatpush2.msra.mxu0 0.0
    %632 = vmatprep.subr.mxu0 0.0
    %633 = vmatpush2.msra.mxu0 0.0
    %634 = vmatprep.subr.mxu0 0.0
    %635 = vmatpush2.msra.mxu0 0.0
    %636 = vmatprep.subr.mxu0 0.0
    %637 = vmatpush2.msra.mxu0 0.0
    %638 = vmatprep.subr.mxu0 0.0
    %639 = vmatpush2.msra.mxu0 0.0
    %640 = vmatprep.mubr.f32.mxu0 0.0
    %641 = vmatmul.mubr.f32.gmra.mxu0 %v574
    %v642 = vpop.f32.mrf.mxu0
    %v643 = vadd.f32 0.0, %v642
    %v644 = vpop.f32.mrf.mxu0
    %645 = vdwg.mxu0
    %v646 = vadd.f32 %v572, %v643
    %v647 = vxor.u32 %v570, 2147483648
    %v648 = vmul.f32 %v647, 1.442695
    %v649 = vpow.pop %v648
    %v650 = vadd.f32 %v649, 1.0
    %v651 = vrcp.pop %v650
    %v652 = vmul.f32 1.0, %v651
    %v653 = vtanh.pop %v570
    %v654 = vxor.u32 %v646, 2147483648
    %v655 = vmul.f32 %v654, 1.442695
    %v656 = vpow.pop %v655
    %v657 = vadd.f32 %v656, 1.0
    %v658 = vrcp.pop %v657
    %v659 = vmul.f32 1.0, %v658
    %v660 = vtanh.pop %v646
    %662 = vrot.lane.b32.xlu0 %v490, 32
    %v663 = vpop.permute.xlu0 %662
    %v665 = vmul.f32 %v652, %v663
    %667 = vrot.lane.b32.xlu0 %v653, 64
    %v668 = vpop.permute.xlu0 %667
    %v670 = vmul.f32 %v652, %v668
    %672 = vrot.lane.b32.xlu0 %v670, 32
    %v673 = vpop.permute.xlu0 %672
    %v675 = vadd.f32 %v665, %v673
    %v676 = vtanh.pop %v675
    %678 = vrot.lane.b32.xlu0 %v676, 64
    %v679 = vpop.permute.xlu0 %678
    %v681 = vmul.f32 %v652, %v679
    %683 = vrot.lane.b32.xlu0 %v494, 32
    %v684 = vpop.permute.xlu0 %683
    %v686 = vmul.f32 %v659, %v684
    %688 = vrot.lane.b32.xlu0 %v660, 64
    %v689 = vpop.permute.xlu0 %688
    %v691 = vmul.f32 %v659, %v689
    %693 = vrot.lane.b32.xlu0 %v691, 32
    %v694 = vpop.permute.xlu0 %693
    %v696 = vadd.f32 %v686, %v694
    %v697 = vtanh.pop %v696
    %699 = vrot.lane.b32.xlu0 %v697, 64
    %v700 = vpop.permute.xlu0 %699
    %v702 = vmul.f32 %v659, %v700
    %704 = vrot.lane.b32.xlu0 %v681, 32
    %v705 = vpop.permute.xlu0 %704
    %vm707 = vcmask 254976
    %708 = vst.msk [vmem:[#allocation13] sm:$0x3] %vm707, %v705
    %710 = vrot.lane.b32.xlu0 %v702, 32
    %v711 = vpop.permute.xlu0 %710
    %s713 = scalar_lea.vmem [#allocation14], 14
    %714 = vst.msk [vmem:[%s713] sm:$0x3] %vm707, %v711
    %s715 = scalar_lea.vmem [#allocation2], 2
    %v716 = vld [vmem:[%s715] sm:$0x3]
    %v717 = vsel %vm496, %v705, 0
    %719 = vmatprep.subr.mxu0 0.0
    %720 = vmatpush1.msra.mxu0 0.0
    %721 = vmatprep.subr.mxu0 0.0
    %722 = vmatpush1.msra.mxu0 0.0
    %723 = vmatprep.subr.mxu0 0.0
    %724 = vmatpush1.msra.mxu0 0.0
    %725 = vmatprep.subr.mxu0 0.0
    %726 = vmatpush1.msra.mxu0 0.0
    %727 = vmatprep.subr.mxu0 0.0
    %728 = vmatpush1.msra.mxu0 0.0
    %729 = vmatprep.subr.mxu0 0.0
    %730 = vmatpush1.msra.mxu0 0.0
    %731 = vmatprep.subr.mxu0 0.0
    %732 = vmatpush1.msra.mxu0 0.0
    %733 = vmatprep.subr.mxu0 0.0
    %734 = vmatpush1.msra.mxu0 0.0
    %735 = vmatprep.subr.mxu0 0.0
    %736 = vmatpush1.msra.mxu0 0.0
    %737 = vmatprep.subr.mxu0 0.0
    %738 = vmatpush1.msra.mxu0 0.0
    %739 = vmatprep.subr.mxu0 0.0
    %740 = vmatpush1.msra.mxu0 0.0
    %741 = vmatprep.subr.mxu0 0.0
    %742 = vmatpush1.msra.mxu0 0.0
    %743 = vmatprep.subr.mxu0 0.0
    %744 = vmatpush1.msra.mxu0 %v104
    %745 = vmatprep.subr.mxu0 0.0
    %746 = vmatpush1.msra.mxu0 %v103
    %747 = vmatprep.subr.mxu0 0.0
    %748 = vmatpush1.msra.mxu0 %v102
    %749 = vmatprep.subr.mxu0 0.0
    %750 = vmatpush1.msra.mxu0 %v101
    %751 = vmatprep.subr.mxu0 0.0
    %752 = vmatpush2.msra.mxu0 0.0
    %753 = vmatprep.subr.mxu0 0.0
    %754 = vmatpush2.msra.mxu0 0.0
    %755 = vmatprep.subr.mxu0 0.0
    %756 = vmatpush2.msra.mxu0 0.0
    %757 = vmatprep.subr.mxu0 0.0
    %758 = vmatpush2.msra.mxu0 0.0
    %759 = vmatprep.subr.mxu0 0.0
    %760 = vmatpush2.msra.mxu0 0.0
    %761 = vmatprep.subr.mxu0 0.0
    %762 = vmatpush2.msra.mxu0 0.0
    %763 = vmatprep.subr.mxu0 0.0
    %764 = vmatpush2.msra.mxu0 0.0
    %765 = vmatprep.subr.mxu0 0.0
    %766 = vmatpush2.msra.mxu0 0.0
    %767 = vmatprep.subr.mxu0 0.0
    %768 = vmatpush2.msra.mxu0 0.0
    %769 = vmatprep.subr.mxu0 0.0
    %770 = vmatpush2.msra.mxu0 0.0
    %771 = vmatprep.subr.mxu0 0.0
    %772 = vmatpush2.msra.mxu0 0.0
    %773 = vmatprep.subr.mxu0 0.0
    %774 = vmatpush2.msra.mxu0 0.0
    %775 = vmatprep.subr.mxu0 0.0
    %776 = vmatpush2.msra.mxu0 0.0
    %777 = vmatprep.subr.mxu0 0.0
    %778 = vmatpush2.msra.mxu0 0.0
    %779 = vmatprep.subr.mxu0 0.0
    %780 = vmatpush2.msra.mxu0 0.0
    %781 = vmatprep.subr.mxu0 0.0
    %782 = vmatpush2.msra.mxu0 0.0
    %783 = vmatprep.mubr.f32.mxu0 0.0
    %784 = vmatmul.mubr.f32.gmra.mxu0 %v717
    %v785 = vpop.f32.mrf.mxu0
    %v786 = vadd.f32 0.0, %v785
    %v787 = vpop.f32.mrf.mxu0
    %788 = vdwg.mxu0
    %v789 = vadd.f32 %v716, %v786
    %s790 = scalar_lea.vmem [#allocation3], 12
    %v791 = vld [vmem:[%s790] sm:$0x3]
    %v792 = vsel %vm496, %v711, 0
    %794 = vmatprep.subr.mxu0 0.0
    %795 = vmatpush1.msra.mxu0 0.0
    %796 = vmatprep.subr.mxu0 0.0
    %797 = vmatpush1.msra.mxu0 0.0
    %798 = vmatprep.subr.mxu0 0.0
    %799 = vmatpush1.msra.mxu0 0.0
    %800 = vmatprep.subr.mxu0 0.0
    %801 = vmatpush1.msra.mxu0 0.0
    %802 = vmatprep.subr.mxu0 0.0
    %803 = vmatpush1.msra.mxu0 0.0
    %804 = vmatprep.subr.mxu0 0.0
    %805 = vmatpush1.msra.mxu0 0.0
    %806 = vmatprep.subr.mxu0 0.0
    %807 = vmatpush1.msra.mxu0 0.0
    %808 = vmatprep.subr.mxu0 0.0
    %809 = vmatpush1.msra.mxu0 0.0
    %810 = vmatprep.subr.mxu0 0.0
    %811 = vmatpush1.msra.mxu0 0.0
    %812 = vmatprep.subr.mxu0 0.0
    %813 = vmatpush1.msra.mxu0 0.0
    %814 = vmatprep.subr.mxu0 0.0
    %815 = vmatpush1.msra.mxu0 0.0
    %816 = vmatprep.subr.mxu0 0.0
    %817 = vmatpush1.msra.mxu0 0.0
    %818 = vmatprep.subr.mxu0 0.0
    %819 = vmatpush1.msra.mxu0 %v109
    %820 = vmatprep.subr.mxu0 0.0
    %821 = vmatpush1.msra.mxu0 %v108
    %822 = vmatprep.subr.mxu0 0.0
    %823 = vmatpush1.msra.mxu0 %v107
    %824 = vmatprep.subr.mxu0 0.0
    %825 = vmatpush1.msra.mxu0 %v106
    %826 = vmatprep.subr.mxu0 0.0
    %827 = vmatpush2.msra.mxu0 0.0
    %828 = vmatprep.subr.mxu0 0.0
    %829 = vmatpush2.msra.mxu0 0.0
    %830 = vmatprep.subr.mxu0 0.0
    %831 = vmatpush2.msra.mxu0 0.0
    %832 = vmatprep.subr.mxu0 0.0
    %833 = vmatpush2.msra.mxu0 0.0
    %834 = vmatprep.subr.mxu0 0.0
    %835 = vmatpush2.msra.mxu0 0.0
    %836 = vmatprep.subr.mxu0 0.0
    %837 = vmatpush2.msra.mxu0 0.0
    %838 = vmatprep.subr.mxu0 0.0
    %839 = vmatpush2.msra.mxu0 0.0
    %840 = vmatprep.subr.mxu0 0.0
    %841 = vmatpush2.msra.mxu0 0.0
    %842 = vmatprep.subr.mxu0 0.0
    %843 = vmatpush2.msra.mxu0 0.0
    %844 = vmatprep.subr.mxu0 0.0
    %845 = vmatpush2.msra.mxu0 0.0
    %846 = vmatprep.subr.mxu0 0.0
    %847 = vmatpush2.msra.mxu0 0.0
    %848 = vmatprep.subr.mxu0 0.0
    %849 = vmatpush2.msra.mxu0 0.0
    %850 = vmatprep.subr.mxu0 0.0
    %851 = vmatpush2.msra.mxu0 0.0
    %852 = vmatprep.subr.mxu0 0.0
    %853 = vmatpush2.msra.mxu0 0.0
    %854 = vmatprep.subr.mxu0 0.0
    %855 = vmatpush2.msra.mxu0 0.0
    %856 = vmatprep.subr.mxu0 0.0
    %857 = vmatpush2.msra.mxu0 0.0
    %858 = vmatprep.mubr.f32.mxu0 0.0
    %859 = vmatmul.mubr.f32.gmra.mxu0 %v792
    %v860 = vpop.f32.mrf.mxu0
    %v861 = vadd.f32 0.0, %v860
    %v862 = vpop.f32.mrf.mxu0
    %863 = vdwg.mxu0
    %v864 = vadd.f32 %v791, %v861
    %v865 = vxor.u32 %v789, 2147483648
    %v866 = vmul.f32 %v865, 1.442695
    %v867 = vpow.pop %v866
    %v868 = vadd.f32 %v867, 1.0
    %v869 = vrcp.pop %v868
    %v870 = vmul.f32 1.0, %v869
    %v871 = vtanh.pop %v789
    %v872 = vxor.u32 %v864, 2147483648
    %v873 = vmul.f32 %v872, 1.442695
    %v874 = vpow.pop %v873
    %v875 = vadd.f32 %v874, 1.0
    %v876 = vrcp.pop %v875
    %v877 = vmul.f32 1.0, %v876
    %v878 = vtanh.pop %v864
    %v879 = vmul.f32 %v870, %v675
    %881 = vrot.lane.b32.xlu0 %v871, 64
    %v882 = vpop.permute.xlu0 %881
    %v884 = vmul.f32 %v870, %v882
    %886 = vrot.lane.b32.xlu0 %v884, 32
    %v887 = vpop.permute.xlu0 %886
    %v889 = vadd.f32 %v879, %v887
    %v890 = vtanh.pop %v889
    %892 = vrot.lane.b32.xlu0 %v890, 64
    %v893 = vpop.permute.xlu0 %892
    %v895 = vmul.f32 %v870, %v893
    %v896 = vmul.f32 %v877, %v696
    %898 = vrot.lane.b32.xlu0 %v878, 64
    %v899 = vpop.permute.xlu0 %898
    %v901 = vmul.f32 %v877, %v899
    %903 = vrot.lane.b32.xlu0 %v901, 32
    %v904 = vpop.permute.xlu0 %903
    %v906 = vadd.f32 %v896, %v904
    %v907 = vtanh.pop %v906
    %909 = vrot.lane.b32.xlu0 %v907, 64
    %v910 = vpop.permute.xlu0 %909
    %v912 = vmul.f32 %v877, %v910
    %914 = vrot.lane.b32.xlu0 %v895, 32
    %v915 = vpop.permute.xlu0 %914
    %s917 = scalar_lea.vmem [#allocation13], 2
    %918 = vst.msk [vmem:[%s917] sm:$0x3] %vm707, %v915
    %920 = vrot.lane.b32.xlu0 %v912, 32
    %v921 = vpop.permute.xlu0 %920
    %s923 = scalar_lea.vmem [#allocation14], 12
    %924 = vst.msk [vmem:[%s923] sm:$0x3] %vm707, %v921
    %s925 = scalar_lea.vmem [#allocation2], 4
    %v926 = vld [vmem:[%s925] sm:$0x3]
    %v927 = vsel %vm496, %v915, 0
    %929 = vmatprep.subr.mxu0 0.0
    %930 = vmatpush1.msra.mxu0 0.0
    %931 = vmatprep.subr.mxu0 0.0
    %932 = vmatpush1.msra.mxu0 0.0
    %933 = vmatprep.subr.mxu0 0.0
    %934 = vmatpush1.msra.mxu0 0.0
    %935 = vmatprep.subr.mxu0 0.0
    %936 = vmatpush1.msra.mxu0 0.0
    %937 = vmatprep.subr.mxu0 0.0
    %938 = vmatpush1.msra.mxu0 0.0
    %939 = vmatprep.subr.mxu0 0.0
    %940 = vmatpush1.msra.mxu0 0.0
    %941 = vmatprep.subr.mxu0 0.0
    %942 = vmatpush1.msra.mxu0 0.0
    %943 = vmatprep.subr.mxu0 0.0
    %944 = vmatpush1.msra.mxu0 0.0
    %945 = vmatprep.subr.mxu0 0.0
    %946 = vmatpush1.msra.mxu0 0.0
    %947 = vmatprep.subr.mxu0 0.0
    %948 = vmatpush1.msra.mxu0 0.0
    %949 = vmatprep.subr.mxu0 0.0
    %950 = vmatpush1.msra.mxu0 0.0
    %951 = vmatprep.subr.mxu0 0.0
    %952 = vmatpush1.msra.mxu0 0.0
    %953 = vmatprep.subr.mxu0 0.0
    %954 = vmatpush1.msra.mxu0 %v104
    %955 = vmatprep.subr.mxu0 0.0
    %956 = vmatpush1.msra.mxu0 %v103
    %957 = vmatprep.subr.mxu0 0.0
    %958 = vmatpush1.msra.mxu0 %v102
    %959 = vmatprep.subr.mxu0 0.0
    %960 = vmatpush1.msra.mxu0 %v101
    %961 = vmatprep.subr.mxu0 0.0
    %962 = vmatpush2.msra.mxu0 0.0
    %963 = vmatprep.subr.mxu0 0.0
    %964 = vmatpush2.msra.mxu0 0.0
    %965 = vmatprep.subr.mxu0 0.0
    %966 = vmatpush2.msra.mxu0 0.0
    %967 = vmatprep.subr.mxu0 0.0
    %968 = vmatpush2.msra.mxu0 0.0
    %969 = vmatprep.subr.mxu0 0.0
    %970 = vmatpush2.msra.mxu0 0.0
    %971 = vmatprep.subr.mxu0 0.0
    %972 = vmatpush2.msra.mxu0 0.0
    %973 = vmatprep.subr.mxu0 0.0
    %974 = vmatpush2.msra.mxu0 0.0
    %975 = vmatprep.subr.mxu0 0.0
    %976 = vmatpush2.msra.mxu0 0.0
    %977 = vmatprep.subr.mxu0 0.0
    %978 = vmatpush2.msra.mxu0 0.0
    %979 = vmatprep.subr.mxu0 0.0
    %980 = vmatpush2.msra.mxu0 0.0
    %981 = vmatprep.subr.mxu0 0.0
    %982 = vmatpush2.msra.mxu0 0.0
    %983 = vmatprep.subr.mxu0 0.0
    %984 = vmatpush2.msra.mxu0 0.0
    %985 = vmatprep.subr.mxu0 0.0
    %986 = vmatpush2.msra.mxu0 0.0
    %987 = vmatprep.subr.mxu0 0.0
    %988 = vmatpush2.msra.mxu0 0.0
    %989 = vmatprep.subr.mxu0 0.0
    %990 = vmatpush2.msra.mxu0 0.0
    %991 = vmatprep.subr.mxu0 0.0
    %992 = vmatpush2.msra.mxu0 0.0
    %993 = vmatprep.mubr.f32.mxu0 0.0
    %994 = vmatmul.mubr.f32.gmra.mxu0 %v927
    %v995 = vpop.f32.mrf.mxu0
    %v996 = vadd.f32 0.0, %v995
    %v997 = vpop.f32.mrf.mxu0
    %998 = vdwg.mxu0
    %v999 = vadd.f32 %v926, %v996
    %s1000 = scalar_lea.vmem [#allocation3], 10
    %v1001 = vld [vmem:[%s1000] sm:$0x3]
    %v1002 = vsel %vm496, %v921, 0
    %1004 = vmatprep.subr.mxu0 0.0
    %1005 = vmatpush1.msra.mxu0 0.0
    %1006 = vmatprep.subr.mxu0 0.0
    %1007 = vmatpush1.msra.mxu0 0.0
    %1008 = vmatprep.subr.mxu0 0.0
    %1009 = vmatpush1.msra.mxu0 0.0
    %1010 = vmatprep.subr.mxu0 0.0
    %1011 = vmatpush1.msra.mxu0 0.0
    %1012 = vmatprep.subr.mxu0 0.0
    %1013 = vmatpush1.msra.mxu0 0.0
    %1014 = vmatprep.subr.mxu0 0.0
    %1015 = vmatpush1.msra.mxu0 0.0
    %1016 = vmatprep.subr.mxu0 0.0
    %1017 = vmatpush1.msra.mxu0 0.0
    %1018 = vmatprep.subr.mxu0 0.0
    %1019 = vmatpush1.msra.mxu0 0.0
    %1020 = vmatprep.subr.mxu0 0.0
    %1021 = vmatpush1.msra.mxu0 0.0
    %1022 = vmatprep.subr.mxu0 0.0
    %1023 = vmatpush1.msra.mxu0 0.0
    %1024 = vmatprep.subr.mxu0 0.0
    %1025 = vmatpush1.msra.mxu0 0.0
    %1026 = vmatprep.subr.mxu0 0.0
    %1027 = vmatpush1.msra.mxu0 0.0
    %1028 = vmatprep.subr.mxu0 0.0
    %1029 = vmatpush1.msra.mxu0 %v109
    %1030 = vmatprep.subr.mxu0 0.0
    %1031 = vmatpush1.msra.mxu0 %v108
    %1032 = vmatprep.subr.mxu0 0.0
    %1033 = vmatpush1.msra.mxu0 %v107
    %1034 = vmatprep.subr.mxu0 0.0
    %1035 = vmatpush1.msra.mxu0 %v106
    %1036 = vmatprep.subr.mxu0 0.0
    %1037 = vmatpush2.msra.mxu0 0.0
    %1038 = vmatprep.subr.mxu0 0.0
    %1039 = vmatpush2.msra.mxu0 0.0
    %1040 = vmatprep.subr.mxu0 0.0
    %1041 = vmatpush2.msra.mxu0 0.0
    %1042 = vmatprep.subr.mxu0 0.0
    %1043 = vmatpush2.msra.mxu0 0.0
    %1044 = vmatprep.subr.mxu0 0.0
    %1045 = vmatpush2.msra.mxu0 0.0
    %1046 = vmatprep.subr.mxu0 0.0
    %1047 = vmatpush2.msra.mxu0 0.0
    %1048 = vmatprep.subr.mxu0 0.0
    %1049 = vmatpush2.msra.mxu0 0.0
    %1050 = vmatprep.subr.mxu0 0.0
    %1051 = vmatpush2.msra.mxu0 0.0
    %1052 = vmatprep.subr.mxu0 0.0
    %1053 = vmatpush2.msra.mxu0 0.0
    %1054 = vmatprep.subr.mxu0 0.0
    %1055 = vmatpush2.msra.mxu0 0.0
    %1056 = vmatprep.subr.mxu0 0.0
    %1057 = vmatpush2.msra.mxu0 0.0
    %1058 = vmatprep.subr.mxu0 0.0
    %1059 = vmatpush2.msra.mxu0 0.0
    %1060 = vmatprep.subr.mxu0 0.0
    %1061 = vmatpush2.msra.mxu0 0.0
    %1062 = vmatprep.subr.mxu0 0.0
    %1063 = vmatpush2.msra.mxu0 0.0
    %1064 = vmatprep.subr.mxu0 0.0
    %1065 = vmatpush2.msra.mxu0 0.0
    %1066 = vmatprep.subr.mxu0 0.0
    %1067 = vmatpush2.msra.mxu0 0.0
    %1068 = vmatprep.mubr.f32.mxu0 0.0
    %1069 = vmatmul.mubr.f32.gmra.mxu0 %v1002
    %v1070 = vpop.f32.mrf.mxu0
    %v1071 = vadd.f32 0.0, %v1070
    %v1072 = vpop.f32.mrf.mxu0
    %1073 = vdwg.mxu0
    %v1074 = vadd.f32 %v1001, %v1071
    %v1075 = vxor.u32 %v999, 2147483648
    %v1076 = vmul.f32 %v1075, 1.442695
    %v1077 = vpow.pop %v1076
    %v1078 = vadd.f32 %v1077, 1.0
    %v1079 = vrcp.pop %v1078
    %v1080 = vmul.f32 1.0, %v1079
    %v1081 = vtanh.pop %v999
    %v1082 = vxor.u32 %v1074, 2147483648
    %v1083 = vmul.f32 %v1082, 1.442695
    %v1084 = vpow.pop %v1083
    %v1085 = vadd.f32 %v1084, 1.0
    %v1086 = vrcp.pop %v1085
    %v1087 = vmul.f32 1.0, %v1086
    %v1088 = vtanh.pop %v1074
    %v1089 = vmul.f32 %v1080, %v889
    %1091 = vrot.lane.b32.xlu0 %v1081, 64
    %v1092 = vpop.permute.xlu0 %1091
    %v1094 = vmul.f32 %v1080, %v1092
    %1096 = vrot.lane.b32.xlu0 %v1094, 32
    %v1097 = vpop.permute.xlu0 %1096
    %v1099 = vadd.f32 %v1089, %v1097
    %v1100 = vtanh.pop %v1099
    %1102 = vrot.lane.b32.xlu0 %v1100, 64
    %v1103 = vpop.permute.xlu0 %1102
    %v1105 = vmul.f32 %v1080, %v1103
    %v1106 = vmul.f32 %v1087, %v906
    %1108 = vrot.lane.b32.xlu0 %v1088, 64
    %v1109 = vpop.permute.xlu0 %1108
    %v1111 = vmul.f32 %v1087, %v1109
    %1113 = vrot.lane.b32.xlu0 %v1111, 32
    %v1114 = vpop.permute.xlu0 %1113
    %v1116 = vadd.f32 %v1106, %v1114
    %v1117 = vtanh.pop %v1116
    %1119 = vrot.lane.b32.xlu0 %v1117, 64
    %v1120 = vpop.permute.xlu0 %1119
    %v1122 = vmul.f32 %v1087, %v1120
    %1124 = vrot.lane.b32.xlu0 %v1105, 32
    %v1125 = vpop.permute.xlu0 %1124
    %s1127 = scalar_lea.vmem [#allocation13], 4
    %1128 = vst.msk [vmem:[%s1127] sm:$0x3] %vm707, %v1125
    %1130 = vrot.lane.b32.xlu0 %v1122, 32
    %v1131 = vpop.permute.xlu0 %1130
    %s1133 = scalar_lea.vmem [#allocation14], 10
    %1134 = vst.msk [vmem:[%s1133] sm:$0x3] %vm707, %v1131
    %s1135 = scalar_lea.vmem [#allocation2], 6
    %v1136 = vld [vmem:[%s1135] sm:$0x3]
    %v1137 = vsel %vm496, %v1125, 0
    %1139 = vmatprep.subr.mxu0 0.0
    %1140 = vmatpush1.msra.mxu0 0.0
    %1141 = vmatprep.subr.mxu0 0.0
    %1142 = vmatpush1.msra.mxu0 0.0
    %1143 = vmatprep.subr.mxu0 0.0
    %1144 = vmatpush1.msra.mxu0 0.0
    %1145 = vmatprep.subr.mxu0 0.0
    %1146 = vmatpush1.msra.mxu0 0.0
    %1147 = vmatprep.subr.mxu0 0.0
    %1148 = vmatpush1.msra.mxu0 0.0
    %1149 = vmatprep.subr.mxu0 0.0
    %1150 = vmatpush1.msra.mxu0 0.0
    %1151 = vmatprep.subr.mxu0 0.0
    %1152 = vmatpush1.msra.mxu0 0.0
    %1153 = vmatprep.subr.mxu0 0.0
    %1154 = vmatpush1.msra.mxu0 0.0
    %1155 = vmatprep.subr.mxu0 0.0
    %1156 = vmatpush1.msra.mxu0 0.0
    %1157 = vmatprep.subr.mxu0 0.0
    %1158 = vmatpush1.msra.mxu0 0.0
    %1159 = vmatprep.subr.mxu0 0.0
    %1160 = vmatpush1.msra.mxu0 0.0
    %1161 = vmatprep.subr.mxu0 0.0
    %1162 = vmatpush1.msra.mxu0 0.0
    %1163 = vmatprep.subr.mxu0 0.0
    %1164 = vmatpush1.msra.mxu0 %v104
    %1165 = vmatprep.subr.mxu0 0.0
    %1166 = vmatpush1.msra.mxu0 %v103
    %1167 = vmatprep.subr.mxu0 0.0
    %1168 = vmatpush1.msra.mxu0 %v102
    %1169 = vmatprep.subr.mxu0 0.0
    %1170 = vmatpush1.msra.mxu0 %v101
    %1171 = vmatprep.subr.mxu0 0.0
    %1172 = vmatpush2.msra.mxu0 0.0
    %1173 = vmatprep.subr.mxu0 0.0
    %1174 = vmatpush2.msra.mxu0 0.0
    %1175 = vmatprep.subr.mxu0 0.0
    %1176 = vmatpush2.msra.mxu0 0.0
    %1177 = vmatprep.subr.mxu0 0.0
    %1178 = vmatpush2.msra.mxu0 0.0
    %1179 = vmatprep.subr.mxu0 0.0
    %1180 = vmatpush2.msra.mxu0 0.0
    %1181 = vmatprep.subr.mxu0 0.0
    %1182 = vmatpush2.msra.mxu0 0.0
    %1183 = vmatprep.subr.mxu0 0.0
    %1184 = vmatpush2.msra.mxu0 0.0
    %1185 = vmatprep.subr.mxu0 0.0
    %1186 = vmatpush2.msra.mxu0 0.0
    %1187 = vmatprep.subr.mxu0 0.0
    %1188 = vmatpush2.msra.mxu0 0.0
    %1189 = vmatprep.subr.mxu0 0.0
    %1190 = vmatpush2.msra.mxu0 0.0
    %1191 = vmatprep.subr.mxu0 0.0
    %1192 = vmatpush2.msra.mxu0 0.0
    %1193 = vmatprep.subr.mxu0 0.0
    %1194 = vmatpush2.msra.mxu0 0.0
    %1195 = vmatprep.subr.mxu0 0.0
    %1196 = vmatpush2.msra.mxu0 0.0
    %1197 = vmatprep.subr.mxu0 0.0
    %1198 = vmatpush2.msra.mxu0 0.0
    %1199 = vmatprep.subr.mxu0 0.0
    %1200 = vmatpush2.msra.mxu0 0.0
    %1201 = vmatprep.subr.mxu0 0.0
    %1202 = vmatpush2.msra.mxu0 0.0
    %1203 = vmatprep.mubr.f32.mxu0 0.0
    %1204 = vmatmul.mubr.f32.gmra.mxu0 %v1137
    %v1205 = vpop.f32.mrf.mxu0
    %v1206 = vadd.f32 0.0, %v1205
    %v1207 = vpop.f32.mrf.mxu0
    %1208 = vdwg.mxu0
    %v1209 = vadd.f32 %v1136, %v1206
    %s1210 = scalar_lea.vmem [#allocation3], 8
    %v1211 = vld [vmem:[%s1210] sm:$0x3]
    %v1212 = vsel %vm496, %v1131, 0
    %1214 = vmatprep.subr.mxu0 0.0
    %1215 = vmatpush1.msra.mxu0 0.0
    %1216 = vmatprep.subr.mxu0 0.0
    %1217 = vmatpush1.msra.mxu0 0.0
    %1218 = vmatprep.subr.mxu0 0.0
    %1219 = vmatpush1.msra.mxu0 0.0
    %1220 = vmatprep.subr.mxu0 0.0
    %1221 = vmatpush1.msra.mxu0 0.0
    %1222 = vmatprep.subr.mxu0 0.0
    %1223 = vmatpush1.msra.mxu0 0.0
    %1224 = vmatprep.subr.mxu0 0.0
    %1225 = vmatpush1.msra.mxu0 0.0
    %1226 = vmatprep.subr.mxu0 0.0
    %1227 = vmatpush1.msra.mxu0 0.0
    %1228 = vmatprep.subr.mxu0 0.0
    %1229 = vmatpush1.msra.mxu0 0.0
    %1230 = vmatprep.subr.mxu0 0.0
    %1231 = vmatpush1.msra.mxu0 0.0
    %1232 = vmatprep.subr.mxu0 0.0
    %1233 = vmatpush1.msra.mxu0 0.0
    %1234 = vmatprep.subr.mxu0 0.0
    %1235 = vmatpush1.msra.mxu0 0.0
    %1236 = vmatprep.subr.mxu0 0.0
    %1237 = vmatpush1.msra.mxu0 0.0
    %1238 = vmatprep.subr.mxu0 0.0
    %1239 = vmatpush1.msra.mxu0 %v109
    %1240 = vmatprep.subr.mxu0 0.0
    %1241 = vmatpush1.msra.mxu0 %v108
    %1242 = vmatprep.subr.mxu0 0.0
    %1243 = vmatpush1.msra.mxu0 %v107
    %1244 = vmatprep.subr.mxu0 0.0
    %1245 = vmatpush1.msra.mxu0 %v106
    %1246 = vmatprep.subr.mxu0 0.0
    %1247 = vmatpush2.msra.mxu0 0.0
    %1248 = vmatprep.subr.mxu0 0.0
    %1249 = vmatpush2.msra.mxu0 0.0
    %1250 = vmatprep.subr.mxu0 0.0
    %1251 = vmatpush2.msra.mxu0 0.0
    %1252 = vmatprep.subr.mxu0 0.0
    %1253 = vmatpush2.msra.mxu0 0.0
    %1254 = vmatprep.subr.mxu0 0.0
    %1255 = vmatpush2.msra.mxu0 0.0
    %1256 = vmatprep.subr.mxu0 0.0
    %1257 = vmatpush2.msra.mxu0 0.0
    %1258 = vmatprep.subr.mxu0 0.0
    %1259 = vmatpush2.msra.mxu0 0.0
    %1260 = vmatprep.subr.mxu0 0.0
    %1261 = vmatpush2.msra.mxu0 0.0
    %1262 = vmatprep.subr.mxu0 0.0
    %1263 = vmatpush2.msra.mxu0 0.0
    %1264 = vmatprep.subr.mxu0 0.0
    %1265 = vmatpush2.msra.mxu0 0.0
    %1266 = vmatprep.subr.mxu0 0.0
    %1267 = vmatpush2.msra.mxu0 0.0
    %1268 = vmatprep.subr.mxu0 0.0
    %1269 = vmatpush2.msra.mxu0 0.0
    %1270 = vmatprep.subr.mxu0 0.0
    %1271 = vmatpush2.msra.mxu0 0.0
    %1272 = vmatprep.subr.mxu0 0.0
    %1273 = vmatpush2.msra.mxu0 0.0
    %1274 = vmatprep.subr.mxu0 0.0
    %1275 = vmatpush2.msra.mxu0 0.0
    %1276 = vmatprep.subr.mxu0 0.0
    %1277 = vmatpush2.msra.mxu0 0.0
    %1278 = vmatprep.mubr.f32.mxu0 0.0
    %1279 = vmatmul.mubr.f32.gmra.mxu0 %v1212
    %v1280 = vpop.f32.mrf.mxu0
    %v1281 = vadd.f32 0.0, %v1280
    %v1282 = vpop.f32.mrf.mxu0
    %1283 = vdwg.mxu0
    %v1284 = vadd.f32 %v1211, %v1281
    %v1285 = vxor.u32 %v1209, 2147483648
    %v1286 = vmul.f32 %v1285, 1.442695
    %v1287 = vpow.pop %v1286
    %v1288 = vadd.f32 %v1287, 1.0
    %v1289 = vrcp.pop %v1288
    %v1290 = vmul.f32 1.0, %v1289
    %v1291 = vtanh.pop %v1209
    %v1292 = vxor.u32 %v1284, 2147483648
    %v1293 = vmul.f32 %v1292, 1.442695
    %v1294 = vpow.pop %v1293
    %v1295 = vadd.f32 %v1294, 1.0
    %v1296 = vrcp.pop %v1295
    %v1297 = vmul.f32 1.0, %v1296
    %v1298 = vtanh.pop %v1284
    %v1299 = vmul.f32 %v1290, %v1099
    %1301 = vrot.lane.b32.xlu0 %v1291, 64
    %v1302 = vpop.permute.xlu0 %1301
    %v1304 = vmul.f32 %v1290, %v1302
    %1306 = vrot.lane.b32.xlu0 %v1304, 32
    %v1307 = vpop.permute.xlu0 %1306
    %v1309 = vadd.f32 %v1299, %v1307
    %v1310 = vtanh.pop %v1309
    %1312 = vrot.lane.b32.xlu0 %v1310, 64
    %v1313 = vpop.permute.xlu0 %1312
    %v1315 = vmul.f32 %v1290, %v1313
    %v1316 = vmul.f32 %v1297, %v1116
    %1318 = vrot.lane.b32.xlu0 %v1298, 64
    %v1319 = vpop.permute.xlu0 %1318
    %v1321 = vmul.f32 %v1297, %v1319
    %1323 = vrot.lane.b32.xlu0 %v1321, 32
    %v1324 = vpop.permute.xlu0 %1323
    %v1326 = vadd.f32 %v1316, %v1324
    %v1327 = vtanh.pop %v1326
    %1329 = vrot.lane.b32.xlu0 %v1327, 64
    %v1330 = vpop.permute.xlu0 %1329
    %v1332 = vmul.f32 %v1297, %v1330
    %1334 = vrot.lane.b32.xlu0 %v1315, 32
    %v1335 = vpop.permute.xlu0 %1334
    %s1337 = scalar_lea.vmem [#allocation13], 6
    %1338 = vst.msk [vmem:[%s1337] sm:$0x3] %vm707, %v1335
    %1340 = vrot.lane.b32.xlu0 %v1332, 32
    %v1341 = vpop.permute.xlu0 %1340
    %s1343 = scalar_lea.vmem [#allocation14], 8
    %1344 = vst.msk [vmem:[%s1343] sm:$0x3] %vm707, %v1341
    %s1345 = scalar_lea.vmem [#allocation2], 8
    %v1346 = vld [vmem:[%s1345] sm:$0x3]
    %v1347 = vsel %vm496, %v1335, 0
    %1349 = vmatprep.subr.mxu0 0.0
    %1350 = vmatpush1.msra.mxu0 0.0
    %1351 = vmatprep.subr.mxu0 0.0
    %1352 = vmatpush1.msra.mxu0 0.0
    %1353 = vmatprep.subr.mxu0 0.0
    %1354 = vmatpush1.msra.mxu0 0.0
    %1355 = vmatprep.subr.mxu0 0.0
    %1356 = vmatpush1.msra.mxu0 0.0
    %1357 = vmatprep.subr.mxu0 0.0
    %1358 = vmatpush1.msra.mxu0 0.0
    %1359 = vmatprep.subr.mxu0 0.0
    %1360 = vmatpush1.msra.mxu0 0.0
    %1361 = vmatprep.subr.mxu0 0.0
    %1362 = vmatpush1.msra.mxu0 0.0
    %1363 = vmatprep.subr.mxu0 0.0
    %1364 = vmatpush1.msra.mxu0 0.0
    %1365 = vmatprep.subr.mxu0 0.0
    %1366 = vmatpush1.msra.mxu0 0.0
    %1367 = vmatprep.subr.mxu0 0.0
    %1368 = vmatpush1.msra.mxu0 0.0
    %1369 = vmatprep.subr.mxu0 0.0
    %1370 = vmatpush1.msra.mxu0 0.0
    %1371 = vmatprep.subr.mxu0 0.0
    %1372 = vmatpush1.msra.mxu0 0.0
    %1373 = vmatprep.subr.mxu0 0.0
    %1374 = vmatpush1.msra.mxu0 %v104
    %1375 = vmatprep.subr.mxu0 0.0
    %1376 = vmatpush1.msra.mxu0 %v103
    %1377 = vmatprep.subr.mxu0 0.0
    %1378 = vmatpush1.msra.mxu0 %v102
    %1379 = vmatprep.subr.mxu0 0.0
    %1380 = vmatpush1.msra.mxu0 %v101
    %1381 = vmatprep.subr.mxu0 0.0
    %1382 = vmatpush2.msra.mxu0 0.0
    %1383 = vmatprep.subr.mxu0 0.0
    %1384 = vmatpush2.msra.mxu0 0.0
    %1385 = vmatprep.subr.mxu0 0.0
    %1386 = vmatpush2.msra.mxu0 0.0
    %1387 = vmatprep.subr.mxu0 0.0
    %1388 = vmatpush2.msra.mxu0 0.0
    %1389 = vmatprep.subr.mxu0 0.0
    %1390 = vmatpush2.msra.mxu0 0.0
    %1391 = vmatprep.subr.mxu0 0.0
    %1392 = vmatpush2.msra.mxu0 0.0
    %1393 = vmatprep.subr.mxu0 0.0
    %1394 = vmatpush2.msra.mxu0 0.0
    %1395 = vmatprep.subr.mxu0 0.0
    %1396 = vmatpush2.msra.mxu0 0.0
    %1397 = vmatprep.subr.mxu0 0.0
    %1398 = vmatpush2.msra.mxu0 0.0
    %1399 = vmatprep.subr.mxu0 0.0
    %1400 = vmatpush2.msra.mxu0 0.0
    %1401 = vmatprep.subr.mxu0 0.0
    %1402 = vmatpush2.msra.mxu0 0.0
    %1403 = vmatprep.subr.mxu0 0.0
    %1404 = vmatpush2.msra.mxu0 0.0
    %1405 = vmatprep.subr.mxu0 0.0
    %1406 = vmatpush2.msra.mxu0 0.0
    %1407 = vmatprep.subr.mxu0 0.0
    %1408 = vmatpush2.msra.mxu0 0.0
    %1409 = vmatprep.subr.mxu0 0.0
    %1410 = vmatpush2.msra.mxu0 0.0
    %1411 = vmatprep.subr.mxu0 0.0
    %1412 = vmatpush2.msra.mxu0 0.0
    %1413 = vmatprep.mubr.f32.mxu0 0.0
    %1414 = vmatmul.mubr.f32.gmra.mxu0 %v1347
    %v1415 = vpop.f32.mrf.mxu0
    %v1416 = vadd.f32 0.0, %v1415
    %v1417 = vpop.f32.mrf.mxu0
    %1418 = vdwg.mxu0
    %v1419 = vadd.f32 %v1346, %v1416
    %s1420 = scalar_lea.vmem [#allocation3], 6
    %v1421 = vld [vmem:[%s1420] sm:$0x3]
    %v1422 = vsel %vm496, %v1341, 0
    %1424 = vmatprep.subr.mxu0 0.0
    %1425 = vmatpush1.msra.mxu0 0.0
    %1426 = vmatprep.subr.mxu0 0.0
    %1427 = vmatpush1.msra.mxu0 0.0
    %1428 = vmatprep.subr.mxu0 0.0
    %1429 = vmatpush1.msra.mxu0 0.0
    %1430 = vmatprep.subr.mxu0 0.0
    %1431 = vmatpush1.msra.mxu0 0.0
    %1432 = vmatprep.subr.mxu0 0.0
    %1433 = vmatpush1.msra.mxu0 0.0
    %1434 = vmatprep.subr.mxu0 0.0
    %1435 = vmatpush1.msra.mxu0 0.0
    %1436 = vmatprep.subr.mxu0 0.0
    %1437 = vmatpush1.msra.mxu0 0.0
    %1438 = vmatprep.subr.mxu0 0.0
    %1439 = vmatpush1.msra.mxu0 0.0
    %1440 = vmatprep.subr.mxu0 0.0
    %1441 = vmatpush1.msra.mxu0 0.0
    %1442 = vmatprep.subr.mxu0 0.0
    %1443 = vmatpush1.msra.mxu0 0.0
    %1444 = vmatprep.subr.mxu0 0.0
    %1445 = vmatpush1.msra.mxu0 0.0
    %1446 = vmatprep.subr.mxu0 0.0
    %1447 = vmatpush1.msra.mxu0 0.0
    %1448 = vmatprep.subr.mxu0 0.0
    %1449 = vmatpush1.msra.mxu0 %v109
    %1450 = vmatprep.subr.mxu0 0.0
    %1451 = vmatpush1.msra.mxu0 %v108
    %1452 = vmatprep.subr.mxu0 0.0
    %1453 = vmatpush1.msra.mxu0 %v107
    %1454 = vmatprep.subr.mxu0 0.0
    %1455 = vmatpush1.msra.mxu0 %v106
    %1456 = vmatprep.subr.mxu0 0.0
    %1457 = vmatpush2.msra.mxu0 0.0
    %1458 = vmatprep.subr.mxu0 0.0
    %1459 = vmatpush2.msra.mxu0 0.0
    %1460 = vmatprep.subr.mxu0 0.0
    %1461 = vmatpush2.msra.mxu0 0.0
    %1462 = vmatprep.subr.mxu0 0.0
    %1463 = vmatpush2.msra.mxu0 0.0
    %1464 = vmatprep.subr.mxu0 0.0
    %1465 = vmatpush2.msra.mxu0 0.0
    %1466 = vmatprep.subr.mxu0 0.0
    %1467 = vmatpush2.msra.mxu0 0.0
    %1468 = vmatprep.subr.mxu0 0.0
    %1469 = vmatpush2.msra.mxu0 0.0
    %1470 = vmatprep.subr.mxu0 0.0
    %1471 = vmatpush2.msra.mxu0 0.0
    %1472 = vmatprep.subr.mxu0 0.0
    %1473 = vmatpush2.msra.mxu0 0.0
    %1474 = vmatprep.subr.mxu0 0.0
    %1475 = vmatpush2.msra.mxu0 0.0
    %1476 = vmatprep.subr.mxu0 0.0
    %1477 = vmatpush2.msra.mxu0 0.0
    %1478 = vmatprep.subr.mxu0 0.0
    %1479 = vmatpush2.msra.mxu0 0.0
    %1480 = vmatprep.subr.mxu0 0.0
    %1481 = vmatpush2.msra.mxu0 0.0
    %1482 = vmatprep.subr.mxu0 0.0
    %1483 = vmatpush2.msra.mxu0 0.0
    %1484 = vmatprep.subr.mxu0 0.0
    %1485 = vmatpush2.msra.mxu0 0.0
    %1486 = vmatprep.subr.mxu0 0.0
    %1487 = vmatpush2.msra.mxu0 0.0
    %1488 = vmatprep.mubr.f32.mxu0 0.0
    %1489 = vmatmul.mubr.f32.gmra.mxu0 %v1422
    %v1490 = vpop.f32.mrf.mxu0
    %v1491 = vadd.f32 0.0, %v1490
    %v1492 = vpop.f32.mrf.mxu0
    %1493 = vdwg.mxu0
    %v1494 = vadd.f32 %v1421, %v1491
    %v1495 = vxor.u32 %v1419, 2147483648
    %v1496 = vmul.f32 %v1495, 1.442695
    %v1497 = vpow.pop %v1496
    %v1498 = vadd.f32 %v1497, 1.0
    %v1499 = vrcp.pop %v1498
    %v1500 = vmul.f32 1.0, %v1499
    %v1501 = vtanh.pop %v1419
    %v1502 = vxor.u32 %v1494, 2147483648
    %v1503 = vmul.f32 %v1502, 1.442695
    %v1504 = vpow.pop %v1503
    %v1505 = vadd.f32 %v1504, 1.0
    %v1506 = vrcp.pop %v1505
    %v1507 = vmul.f32 1.0, %v1506
    %v1508 = vtanh.pop %v1494
    %v1509 = vmul.f32 %v1500, %v1309
    %1511 = vrot.lane.b32.xlu0 %v1501, 64
    %v1512 = vpop.permute.xlu0 %1511
    %v1514 = vmul.f32 %v1500, %v1512
    %1516 = vrot.lane.b32.xlu0 %v1514, 32
    %v1517 = vpop.permute.xlu0 %1516
    %v1519 = vadd.f32 %v1509, %v1517
    %v1520 = vtanh.pop %v1519
    %1522 = vrot.lane.b32.xlu0 %v1520, 64
    %v1523 = vpop.permute.xlu0 %1522
    %v1525 = vmul.f32 %v1500, %v1523
    %v1526 = vmul.f32 %v1507, %v1326
    %1528 = vrot.lane.b32.xlu0 %v1508, 64
    %v1529 = vpop.permute.xlu0 %1528
    %v1531 = vmul.f32 %v1507, %v1529
    %1533 = vrot.lane.b32.xlu0 %v1531, 32
    %v1534 = vpop.permute.xlu0 %1533
    %v1536 = vadd.f32 %v1526, %v1534
    %v1537 = vtanh.pop %v1536
    %1539 = vrot.lane.b32.xlu0 %v1537, 64
    %v1540 = vpop.permute.xlu0 %1539
    %v1542 = vmul.f32 %v1507, %v1540
    %1544 = vrot.lane.b32.xlu0 %v1525, 32
    %v1545 = vpop.permute.xlu0 %1544
    %s1547 = scalar_lea.vmem [#allocation13], 8
    %1548 = vst.msk [vmem:[%s1547] sm:$0x3] %vm707, %v1545
    %1550 = vrot.lane.b32.xlu0 %v1542, 32
    %v1551 = vpop.permute.xlu0 %1550
    %s1553 = scalar_lea.vmem [#allocation14], 6
    %1554 = vst.msk [vmem:[%s1553] sm:$0x3] %vm707, %v1551
    %s1555 = scalar_lea.vmem [#allocation2], 10
    %v1556 = vld [vmem:[%s1555] sm:$0x3]
    %v1557 = vsel %vm496, %v1545, 0
    %1559 = vmatprep.subr.mxu0 0.0
    %1560 = vmatpush1.msra.mxu0 0.0
    %1561 = vmatprep.subr.mxu0 0.0
    %1562 = vmatpush1.msra.mxu0 0.0
    %1563 = vmatprep.subr.mxu0 0.0
    %1564 = vmatpush1.msra.mxu0 0.0
    %1565 = vmatprep.subr.mxu0 0.0
    %1566 = vmatpush1.msra.mxu0 0.0
    %1567 = vmatprep.subr.mxu0 0.0
    %1568 = vmatpush1.msra.mxu0 0.0
    %1569 = vmatprep.subr.mxu0 0.0
    %1570 = vmatpush1.msra.mxu0 0.0
    %1571 = vmatprep.subr.mxu0 0.0
    %1572 = vmatpush1.msra.mxu0 0.0
    %1573 = vmatprep.subr.mxu0 0.0
    %1574 = vmatpush1.msra.mxu0 0.0
    %1575 = vmatprep.subr.mxu0 0.0
    %1576 = vmatpush1.msra.mxu0 0.0
    %1577 = vmatprep.subr.mxu0 0.0
    %1578 = vmatpush1.msra.mxu0 0.0
    %1579 = vmatprep.subr.mxu0 0.0
    %1580 = vmatpush1.msra.mxu0 0.0
    %1581 = vmatprep.subr.mxu0 0.0
    %1582 = vmatpush1.msra.mxu0 0.0
    %1583 = vmatprep.subr.mxu0 0.0
    %1584 = vmatpush1.msra.mxu0 %v104
    %1585 = vmatprep.subr.mxu0 0.0
    %1586 = vmatpush1.msra.mxu0 %v103
    %1587 = vmatprep.subr.mxu0 0.0
    %1588 = vmatpush1.msra.mxu0 %v102
    %1589 = vmatprep.subr.mxu0 0.0
    %1590 = vmatpush1.msra.mxu0 %v101
    %1591 = vmatprep.subr.mxu0 0.0
    %1592 = vmatpush2.msra.mxu0 0.0
    %1593 = vmatprep.subr.mxu0 0.0
    %1594 = vmatpush2.msra.mxu0 0.0
    %1595 = vmatprep.subr.mxu0 0.0
    %1596 = vmatpush2.msra.mxu0 0.0
    %1597 = vmatprep.subr.mxu0 0.0
    %1598 = vmatpush2.msra.mxu0 0.0
    %1599 = vmatprep.subr.mxu0 0.0
    %1600 = vmatpush2.msra.mxu0 0.0
    %1601 = vmatprep.subr.mxu0 0.0
    %1602 = vmatpush2.msra.mxu0 0.0
    %1603 = vmatprep.subr.mxu0 0.0
    %1604 = vmatpush2.msra.mxu0 0.0
    %1605 = vmatprep.subr.mxu0 0.0
    %1606 = vmatpush2.msra.mxu0 0.0
    %1607 = vmatprep.subr.mxu0 0.0
    %1608 = vmatpush2.msra.mxu0 0.0
    %1609 = vmatprep.subr.mxu0 0.0
    %1610 = vmatpush2.msra.mxu0 0.0
    %1611 = vmatprep.subr.mxu0 0.0
    %1612 = vmatpush2.msra.mxu0 0.0
    %1613 = vmatprep.subr.mxu0 0.0
    %1614 = vmatpush2.msra.mxu0 0.0
    %1615 = vmatprep.subr.mxu0 0.0
    %1616 = vmatpush2.msra.mxu0 0.0
    %1617 = vmatprep.subr.mxu0 0.0
    %1618 = vmatpush2.msra.mxu0 0.0
    %1619 = vmatprep.subr.mxu0 0.0
    %1620 = vmatpush2.msra.mxu0 0.0
    %1621 = vmatprep.subr.mxu0 0.0
    %1622 = vmatpush2.msra.mxu0 0.0
    %1623 = vmatprep.mubr.f32.mxu0 0.0
    %1624 = vmatmul.mubr.f32.gmra.mxu0 %v1557
    %v1625 = vpop.f32.mrf.mxu0
    %v1626 = vadd.f32 0.0, %v1625
    %v1627 = vpop.f32.mrf.mxu0
    %1628 = vdwg.mxu0
    %v1629 = vadd.f32 %v1556, %v1626
    %s1630 = scalar_lea.vmem [#allocation3], 4
    %v1631 = vld [vmem:[%s1630] sm:$0x3]
    %v1632 = vsel %vm496, %v1551, 0
    %1634 = vmatprep.subr.mxu0 0.0
    %1635 = vmatpush1.msra.mxu0 0.0
    %1636 = vmatprep.subr.mxu0 0.0
    %1637 = vmatpush1.msra.mxu0 0.0
    %1638 = vmatprep.subr.mxu0 0.0
    %1639 = vmatpush1.msra.mxu0 0.0
    %1640 = vmatprep.subr.mxu0 0.0
    %1641 = vmatpush1.msra.mxu0 0.0
    %1642 = vmatprep.subr.mxu0 0.0
    %1643 = vmatpush1.msra.mxu0 0.0
    %1644 = vmatprep.subr.mxu0 0.0
    %1645 = vmatpush1.msra.mxu0 0.0
    %1646 = vmatprep.subr.mxu0 0.0
    %1647 = vmatpush1.msra.mxu0 0.0
    %1648 = vmatprep.subr.mxu0 0.0
    %1649 = vmatpush1.msra.mxu0 0.0
    %1650 = vmatprep.subr.mxu0 0.0
    %1651 = vmatpush1.msra.mxu0 0.0
    %1652 = vmatprep.subr.mxu0 0.0
    %1653 = vmatpush1.msra.mxu0 0.0
    %1654 = vmatprep.subr.mxu0 0.0
    %1655 = vmatpush1.msra.mxu0 0.0
    %1656 = vmatprep.subr.mxu0 0.0
    %1657 = vmatpush1.msra.mxu0 0.0
    %1658 = vmatprep.subr.mxu0 0.0
    %1659 = vmatpush1.msra.mxu0 %v109
    %1660 = vmatprep.subr.mxu0 0.0
    %1661 = vmatpush1.msra.mxu0 %v108
    %1662 = vmatprep.subr.mxu0 0.0
    %1663 = vmatpush1.msra.mxu0 %v107
    %1664 = vmatprep.subr.mxu0 0.0
    %1665 = vmatpush1.msra.mxu0 %v106
    %1666 = vmatprep.subr.mxu0 0.0
    %1667 = vmatpush2.msra.mxu0 0.0
    %1668 = vmatprep.subr.mxu0 0.0
    %1669 = vmatpush2.msra.mxu0 0.0
    %1670 = vmatprep.subr.mxu0 0.0
    %1671 = vmatpush2.msra.mxu0 0.0
    %1672 = vmatprep.subr.mxu0 0.0
    %1673 = vmatpush2.msra.mxu0 0.0
    %1674 = vmatprep.subr.mxu0 0.0
    %1675 = vmatpush2.msra.mxu0 0.0
    %1676 = vmatprep.subr.mxu0 0.0
    %1677 = vmatpush2.msra.mxu0 0.0
    %1678 = vmatprep.subr.mxu0 0.0
    %1679 = vmatpush2.msra.mxu0 0.0
    %1680 = vmatprep.subr.mxu0 0.0
    %1681 = vmatpush2.msra.mxu0 0.0
    %1682 = vmatprep.subr.mxu0 0.0
    %1683 = vmatpush2.msra.mxu0 0.0
    %1684 = vmatprep.subr.mxu0 0.0
    %1685 = vmatpush2.msra.mxu0 0.0
    %1686 = vmatprep.subr.mxu0 0.0
    %1687 = vmatpush2.msra.mxu0 0.0
    %1688 = vmatprep.subr.mxu0 0.0
    %1689 = vmatpush2.msra.mxu0 0.0
    %1690 = vmatprep.subr.mxu0 0.0
    %1691 = vmatpush2.msra.mxu0 0.0
    %1692 = vmatprep.subr.mxu0 0.0
    %1693 = vmatpush2.msra.mxu0 0.0
    %1694 = vmatprep.subr.mxu0 0.0
    %1695 = vmatpush2.msra.mxu0 0.0
    %1696 = vmatprep.subr.mxu0 0.0
    %1697 = vmatpush2.msra.mxu0 0.0
    %1698 = vmatprep.mubr.f32.mxu0 0.0
    %1699 = vmatmul.mubr.f32.gmra.mxu0 %v1632
    %v1700 = vpop.f32.mrf.mxu0
    %v1701 = vadd.f32 0.0, %v1700
    %v1702 = vpop.f32.mrf.mxu0
    %1703 = vdwg.mxu0
    %v1704 = vadd.f32 %v1631, %v1701
    %v1705 = vxor.u32 %v1629, 2147483648
    %v1706 = vmul.f32 %v1705, 1.442695
    %v1707 = vpow.pop %v1706
    %v1708 = vadd.f32 %v1707, 1.0
    %v1709 = vrcp.pop %v1708
    %v1710 = vmul.f32 1.0, %v1709
    %v1711 = vtanh.pop %v1629
    %v1712 = vxor.u32 %v1704, 2147483648
    %v1713 = vmul.f32 %v1712, 1.442695
    %v1714 = vpow.pop %v1713
    %v1715 = vadd.f32 %v1714, 1.0
    %v1716 = vrcp.pop %v1715
    %v1717 = vmul.f32 1.0, %v1716
    %v1718 = vtanh.pop %v1704
    %v1719 = vmul.f32 %v1710, %v1519
    %1721 = vrot.lane.b32.xlu0 %v1711, 64
    %v1722 = vpop.permute.xlu0 %1721
    %v1724 = vmul.f32 %v1710, %v1722
    %1726 = vrot.lane.b32.xlu0 %v1724, 32
    %v1727 = vpop.permute.xlu0 %1726
    %v1729 = vadd.f32 %v1719, %v1727
    %v1730 = vtanh.pop %v1729
    %1732 = vrot.lane.b32.xlu0 %v1730, 64
    %v1733 = vpop.permute.xlu0 %1732
    %v1735 = vmul.f32 %v1710, %v1733
    %v1736 = vmul.f32 %v1717, %v1536
    %1738 = vrot.lane.b32.xlu0 %v1718, 64
    %v1739 = vpop.permute.xlu0 %1738
    %v1741 = vmul.f32 %v1717, %v1739
    %1743 = vrot.lane.b32.xlu0 %v1741, 32
    %v1744 = vpop.permute.xlu0 %1743
    %v1746 = vadd.f32 %v1736, %v1744
    %v1747 = vtanh.pop %v1746
    %1749 = vrot.lane.b32.xlu0 %v1747, 64
    %v1750 = vpop.permute.xlu0 %1749
    %v1752 = vmul.f32 %v1717, %v1750
    %1754 = vrot.lane.b32.xlu0 %v1735, 32
    %v1755 = vpop.permute.xlu0 %1754
    %s1757 = scalar_lea.vmem [#allocation13], 10
    %1758 = vst.msk [vmem:[%s1757] sm:$0x3] %vm707, %v1755
    %1760 = vrot.lane.b32.xlu0 %v1752, 32
    %v1761 = vpop.permute.xlu0 %1760
    %s1763 = scalar_lea.vmem [#allocation14], 4
    %1764 = vst.msk [vmem:[%s1763] sm:$0x3] %vm707, %v1761
    %s1765 = scalar_lea.vmem [#allocation2], 12
    %v1766 = vld [vmem:[%s1765] sm:$0x3]
    %v1767 = vsel %vm496, %v1755, 0
    %1769 = vmatprep.subr.mxu0 0.0
    %1770 = vmatpush1.msra.mxu0 0.0
    %1771 = vmatprep.subr.mxu0 0.0
    %1772 = vmatpush1.msra.mxu0 0.0
    %1773 = vmatprep.subr.mxu0 0.0
    %1774 = vmatpush1.msra.mxu0 0.0
    %1775 = vmatprep.subr.mxu0 0.0
    %1776 = vmatpush1.msra.mxu0 0.0
    %1777 = vmatprep.subr.mxu0 0.0
    %1778 = vmatpush1.msra.mxu0 0.0
    %1779 = vmatprep.subr.mxu0 0.0
    %1780 = vmatpush1.msra.mxu0 0.0
    %1781 = vmatprep.subr.mxu0 0.0
    %1782 = vmatpush1.msra.mxu0 0.0
    %1783 = vmatprep.subr.mxu0 0.0
    %1784 = vmatpush1.msra.mxu0 0.0
    %1785 = vmatprep.subr.mxu0 0.0
    %1786 = vmatpush1.msra.mxu0 0.0
    %1787 = vmatprep.subr.mxu0 0.0
    %1788 = vmatpush1.msra.mxu0 0.0
    %1789 = vmatprep.subr.mxu0 0.0
    %1790 = vmatpush1.msra.mxu0 0.0
    %1791 = vmatprep.subr.mxu0 0.0
    %1792 = vmatpush1.msra.mxu0 0.0
    %1793 = vmatprep.subr.mxu0 0.0
    %1794 = vmatpush1.msra.mxu0 %v104
    %1795 = vmatprep.subr.mxu0 0.0
    %1796 = vmatpush1.msra.mxu0 %v103
    %1797 = vmatprep.subr.mxu0 0.0
    %1798 = vmatpush1.msra.mxu0 %v102
    %1799 = vmatprep.subr.mxu0 0.0
    %1800 = vmatpush1.msra.mxu0 %v101
    %1801 = vmatprep.subr.mxu0 0.0
    %1802 = vmatpush2.msra.mxu0 0.0
    %1803 = vmatprep.subr.mxu0 0.0
    %1804 = vmatpush2.msra.mxu0 0.0
    %1805 = vmatprep.subr.mxu0 0.0
    %1806 = vmatpush2.msra.mxu0 0.0
    %1807 = vmatprep.subr.mxu0 0.0
    %1808 = vmatpush2.msra.mxu0 0.0
    %1809 = vmatprep.subr.mxu0 0.0
    %1810 = vmatpush2.msra.mxu0 0.0
    %1811 = vmatprep.subr.mxu0 0.0
    %1812 = vmatpush2.msra.mxu0 0.0
    %1813 = vmatprep.subr.mxu0 0.0
    %1814 = vmatpush2.msra.mxu0 0.0
    %1815 = vmatprep.subr.mxu0 0.0
    %1816 = vmatpush2.msra.mxu0 0.0
    %1817 = vmatprep.subr.mxu0 0.0
    %1818 = vmatpush2.msra.mxu0 0.0
    %1819 = vmatprep.subr.mxu0 0.0
    %1820 = vmatpush2.msra.mxu0 0.0
    %1821 = vmatprep.subr.mxu0 0.0
    %1822 = vmatpush2.msra.mxu0 0.0
    %1823 = vmatprep.subr.mxu0 0.0
    %1824 = vmatpush2.msra.mxu0 0.0
    %1825 = vmatprep.subr.mxu0 0.0
    %1826 = vmatpush2.msra.mxu0 0.0
    %1827 = vmatprep.subr.mxu0 0.0
    %1828 = vmatpush2.msra.mxu0 0.0
    %1829 = vmatprep.subr.mxu0 0.0
    %1830 = vmatpush2.msra.mxu0 0.0
    %1831 = vmatprep.subr.mxu0 0.0
    %1832 = vmatpush2.msra.mxu0 0.0
    %1833 = vmatprep.mubr.f32.mxu0 0.0
    %1834 = vmatmul.mubr.f32.gmra.mxu0 %v1767
    %v1835 = vpop.f32.mrf.mxu0
    %v1836 = vadd.f32 0.0, %v1835
    %v1837 = vpop.f32.mrf.mxu0
    %1838 = vdwg.mxu0
    %v1839 = vadd.f32 %v1766, %v1836
    %s1840 = scalar_lea.vmem [#allocation3], 2
    %v1841 = vld [vmem:[%s1840] sm:$0x3]
    %v1842 = vsel %vm496, %v1761, 0
    %1844 = vmatprep.subr.mxu0 0.0
    %1845 = vmatpush1.msra.mxu0 0.0
    %1846 = vmatprep.subr.mxu0 0.0
    %1847 = vmatpush1.msra.mxu0 0.0
    %1848 = vmatprep.subr.mxu0 0.0
    %1849 = vmatpush1.msra.mxu0 0.0
    %1850 = vmatprep.subr.mxu0 0.0
    %1851 = vmatpush1.msra.mxu0 0.0
    %1852 = vmatprep.subr.mxu0 0.0
    %1853 = vmatpush1.msra.mxu0 0.0
    %1854 = vmatprep.subr.mxu0 0.0
    %1855 = vmatpush1.msra.mxu0 0.0
    %1856 = vmatprep.subr.mxu0 0.0
    %1857 = vmatpush1.msra.mxu0 0.0
    %1858 = vmatprep.subr.mxu0 0.0
    %1859 = vmatpush1.msra.mxu0 0.0
    %1860 = vmatprep.subr.mxu0 0.0
    %1861 = vmatpush1.msra.mxu0 0.0
    %1862 = vmatprep.subr.mxu0 0.0
    %1863 = vmatpush1.msra.mxu0 0.0
    %1864 = vmatprep.subr.mxu0 0.0
    %1865 = vmatpush1.msra.mxu0 0.0
    %1866 = vmatprep.subr.mxu0 0.0
    %1867 = vmatpush1.msra.mxu0 0.0
    %1868 = vmatprep.subr.mxu0 0.0
    %1869 = vmatpush1.msra.mxu0 %v109
    %1870 = vmatprep.subr.mxu0 0.0
    %1871 = vmatpush1.msra.mxu0 %v108
    %1872 = vmatprep.subr.mxu0 0.0
    %1873 = vmatpush1.msra.mxu0 %v107
    %1874 = vmatprep.subr.mxu0 0.0
    %1875 = vmatpush1.msra.mxu0 %v106
    %1876 = vmatprep.subr.mxu0 0.0
    %1877 = vmatpush2.msra.mxu0 0.0
    %1878 = vmatprep.subr.mxu0 0.0
    %1879 = vmatpush2.msra.mxu0 0.0
    %1880 = vmatprep.subr.mxu0 0.0
    %1881 = vmatpush2.msra.mxu0 0.0
    %1882 = vmatprep.subr.mxu0 0.0
    %1883 = vmatpush2.msra.mxu0 0.0
    %1884 = vmatprep.subr.mxu0 0.0
    %1885 = vmatpush2.msra.mxu0 0.0
    %1886 = vmatprep.subr.mxu0 0.0
    %1887 = vmatpush2.msra.mxu0 0.0
    %1888 = vmatprep.subr.mxu0 0.0
    %1889 = vmatpush2.msra.mxu0 0.0
    %1890 = vmatprep.subr.mxu0 0.0
    %1891 = vmatpush2.msra.mxu0 0.0
    %1892 = vmatprep.subr.mxu0 0.0
    %1893 = vmatpush2.msra.mxu0 0.0
    %1894 = vmatprep.subr.mxu0 0.0
    %1895 = vmatpush2.msra.mxu0 0.0
    %1896 = vmatprep.subr.mxu0 0.0
    %1897 = vmatpush2.msra.mxu0 0.0
    %1898 = vmatprep.subr.mxu0 0.0
    %1899 = vmatpush2.msra.mxu0 0.0
    %1900 = vmatprep.subr.mxu0 0.0
    %1901 = vmatpush2.msra.mxu0 0.0
    %1902 = vmatprep.subr.mxu0 0.0
    %1903 = vmatpush2.msra.mxu0 0.0
    %1904 = vmatprep.subr.mxu0 0.0
    %1905 = vmatpush2.msra.mxu0 0.0
    %1906 = vmatprep.subr.mxu0 0.0
    %1907 = vmatpush2.msra.mxu0 0.0
    %1908 = vmatprep.mubr.f32.mxu0 0.0
    %1909 = vmatmul.mubr.f32.gmra.mxu0 %v1842
    %v1910 = vpop.f32.mrf.mxu0
    %v1911 = vadd.f32 0.0, %v1910
    %v1912 = vpop.f32.mrf.mxu0
    %1913 = vdwg.mxu0
    %v1914 = vadd.f32 %v1841, %v1911
    %v1915 = vxor.u32 %v1839, 2147483648
    %v1916 = vmul.f32 %v1915, 1.442695
    %v1917 = vpow.pop %v1916
    %v1918 = vadd.f32 %v1917, 1.0
    %v1919 = vrcp.pop %v1918
    %v1920 = vmul.f32 1.0, %v1919
    %v1921 = vtanh.pop %v1839
    %v1922 = vxor.u32 %v1914, 2147483648
    %v1923 = vmul.f32 %v1922, 1.442695
    %v1924 = vpow.pop %v1923
    %v1925 = vadd.f32 %v1924, 1.0
    %v1926 = vrcp.pop %v1925
    %v1927 = vmul.f32 1.0, %v1926
    %v1928 = vtanh.pop %v1914
    %v1929 = vmul.f32 %v1920, %v1729
    %1931 = vrot.lane.b32.xlu0 %v1921, 64
    %v1932 = vpop.permute.xlu0 %1931
    %v1934 = vmul.f32 %v1920, %v1932
    %1936 = vrot.lane.b32.xlu0 %v1934, 32
    %v1937 = vpop.permute.xlu0 %1936
    %v1939 = vadd.f32 %v1929, %v1937
    %v1940 = vtanh.pop %v1939
    %1942 = vrot.lane.b32.xlu0 %v1940, 64
    %v1943 = vpop.permute.xlu0 %1942
    %v1945 = vmul.f32 %v1920, %v1943
    %v1946 = vmul.f32 %v1927, %v1746
    %1948 = vrot.lane.b32.xlu0 %v1928, 64
    %v1949 = vpop.permute.xlu0 %1948
    %v1951 = vmul.f32 %v1927, %v1949
    %1953 = vrot.lane.b32.xlu0 %v1951, 32
    %v1954 = vpop.permute.xlu0 %1953
    %v1956 = vadd.f32 %v1946, %v1954
    %v1957 = vtanh.pop %v1956
    %1959 = vrot.lane.b32.xlu0 %v1957, 64
    %v1960 = vpop.permute.xlu0 %1959
    %v1962 = vmul.f32 %v1927, %v1960
    %1964 = vrot.lane.b32.xlu0 %v1945, 32
    %v1965 = vpop.permute.xlu0 %1964
    %s1967 = scalar_lea.vmem [#allocation13], 12
    %1968 = vst.msk [vmem:[%s1967] sm:$0x3] %vm707, %v1965
    %1970 = vrot.lane.b32.xlu0 %v1962, 32
    %v1971 = vpop.permute.xlu0 %1970
    %s1973 = scalar_lea.vmem [#allocation14], 2
    %1974 = vst.msk [vmem:[%s1973] sm:$0x3] %vm707, %v1971
    %s1975 = scalar_lea.vmem [#allocation2], 14
    %v1976 = vld [vmem:[%s1975] sm:$0x3]
    %v1977 = vsel %vm496, %v1965, 0
    %1979 = vmatprep.subr.mxu0 0.0
    %1980 = vmatpush1.msra.mxu0 0.0
    %1981 = vmatprep.subr.mxu0 0.0
    %1982 = vmatpush1.msra.mxu0 0.0
    %1983 = vmatprep.subr.mxu0 0.0
    %1984 = vmatpush1.msra.mxu0 0.0
    %1985 = vmatprep.subr.mxu0 0.0
    %1986 = vmatpush1.msra.mxu0 0.0
    %1987 = vmatprep.subr.mxu0 0.0
    %1988 = vmatpush1.msra.mxu0 0.0
    %1989 = vmatprep.subr.mxu0 0.0
    %1990 = vmatpush1.msra.mxu0 0.0
    %1991 = vmatprep.subr.mxu0 0.0
    %1992 = vmatpush1.msra.mxu0 0.0
    %1993 = vmatprep.subr.mxu0 0.0
    %1994 = vmatpush1.msra.mxu0 0.0
    %1995 = vmatprep.subr.mxu0 0.0
    %1996 = vmatpush1.msra.mxu0 0.0
    %1997 = vmatprep.subr.mxu0 0.0
    %1998 = vmatpush1.msra.mxu0 0.0
    %1999 = vmatprep.subr.mxu0 0.0
    %2000 = vmatpush1.msra.mxu0 0.0
    %2001 = vmatprep.subr.mxu0 0.0
    %2002 = vmatpush1.msra.mxu0 0.0
    %2003 = vmatprep.subr.mxu0 0.0
    %2004 = vmatpush1.msra.mxu0 %v104
    %2005 = vmatprep.subr.mxu0 0.0
    %2006 = vmatpush1.msra.mxu0 %v103
    %2007 = vmatprep.subr.mxu0 0.0
    %2008 = vmatpush1.msra.mxu0 %v102
    %2009 = vmatprep.subr.mxu0 0.0
    %2010 = vmatpush1.msra.mxu0 %v101
    %2011 = vmatprep.subr.mxu0 0.0
    %2012 = vmatpush2.msra.mxu0 0.0
    %2013 = vmatprep.subr.mxu0 0.0
    %2014 = vmatpush2.msra.mxu0 0.0
    %2015 = vmatprep.subr.mxu0 0.0
    %2016 = vmatpush2.msra.mxu0 0.0
    %2017 = vmatprep.subr.mxu0 0.0
    %2018 = vmatpush2.msra.mxu0 0.0
    %2019 = vmatprep.subr.mxu0 0.0
    %2020 = vmatpush2.msra.mxu0 0.0
    %2021 = vmatprep.subr.mxu0 0.0
    %2022 = vmatpush2.msra.mxu0 0.0
    %2023 = vmatprep.subr.mxu0 0.0
    %2024 = vmatpush2.msra.mxu0 0.0
    %2025 = vmatprep.subr.mxu0 0.0
    %2026 = vmatpush2.msra.mxu0 0.0
    %2027 = vmatprep.subr.mxu0 0.0
    %2028 = vmatpush2.msra.mxu0 0.0
    %2029 = vmatprep.subr.mxu0 0.0
    %2030 = vmatpush2.msra.mxu0 0.0
    %2031 = vmatprep.subr.mxu0 0.0
    %2032 = vmatpush2.msra.mxu0 0.0
    %2033 = vmatprep.subr.mxu0 0.0
    %2034 = vmatpush2.msra.mxu0 0.0
    %2035 = vmatprep.subr.mxu0 0.0
    %2036 = vmatpush2.msra.mxu0 0.0
    %2037 = vmatprep.subr.mxu0 0.0
    %2038 = vmatpush2.msra.mxu0 0.0
    %2039 = vmatprep.subr.mxu0 0.0
    %2040 = vmatpush2.msra.mxu0 0.0
    %2041 = vmatprep.subr.mxu0 0.0
    %2042 = vmatpush2.msra.mxu0 0.0
    %2043 = vmatprep.mubr.f32.mxu0 0.0
    %2044 = vmatmul.mubr.f32.gmra.mxu0 %v1977
    %v2045 = vpop.f32.mrf.mxu0
    %v2046 = vadd.f32 0.0, %v2045
    %v2047 = vpop.f32.mrf.mxu0
    %2048 = vdwg.mxu0
    %v2049 = vadd.f32 %v1976, %v2046
    %v2050 = vld [vmem:[#allocation3] sm:$0x3]
    %v2051 = vsel %vm496, %v1971, 0
    %2053 = vmatprep.subr.mxu0 0.0
    %2054 = vmatpush1.msra.mxu0 0.0
    %2055 = vmatprep.subr.mxu0 0.0
    %2056 = vmatpush1.msra.mxu0 0.0
    %2057 = vmatprep.subr.mxu0 0.0
    %2058 = vmatpush1.msra.mxu0 0.0
    %2059 = vmatprep.subr.mxu0 0.0
    %2060 = vmatpush1.msra.mxu0 0.0
    %2061 = vmatprep.subr.mxu0 0.0
    %2062 = vmatpush1.msra.mxu0 0.0
    %2063 = vmatprep.subr.mxu0 0.0
    %2064 = vmatpush1.msra.mxu0 0.0
    %2065 = vmatprep.subr.mxu0 0.0
    %2066 = vmatpush1.msra.mxu0 0.0
    %2067 = vmatprep.subr.mxu0 0.0
    %2068 = vmatpush1.msra.mxu0 0.0
    %2069 = vmatprep.subr.mxu0 0.0
    %2070 = vmatpush1.msra.mxu0 0.0
    %2071 = vmatprep.subr.mxu0 0.0
    %2072 = vmatpush1.msra.mxu0 0.0
    %2073 = vmatprep.subr.mxu0 0.0
    %2074 = vmatpush1.msra.mxu0 0.0
    %2075 = vmatprep.subr.mxu0 0.0
    %2076 = vmatpush1.msra.mxu0 0.0
    %2077 = vmatprep.subr.mxu0 0.0
    %2078 = vmatpush1.msra.mxu0 %v109
    %2079 = vmatprep.subr.mxu0 0.0
    %2080 = vmatpush1.msra.mxu0 %v108
    %2081 = vmatprep.subr.mxu0 0.0
    %2082 = vmatpush1.msra.mxu0 %v107
    %2083 = vmatprep.subr.mxu0 0.0
    %2084 = vmatpush1.msra.mxu0 %v106
    %2085 = vmatprep.subr.mxu0 0.0
    %2086 = vmatpush2.msra.mxu0 0.0
    %2087 = vmatprep.subr.mxu0 0.0
    %2088 = vmatpush2.msra.mxu0 0.0
    %2089 = vmatprep.subr.mxu0 0.0
    %2090 = vmatpush2.msra.mxu0 0.0
    %2091 = vmatprep.subr.mxu0 0.0
    %2092 = vmatpush2.msra.mxu0 0.0
    %2093 = vmatprep.subr.mxu0 0.0
    %2094 = vmatpush2.msra.mxu0 0.0
    %2095 = vmatprep.subr.mxu0 0.0
    %2096 = vmatpush2.msra.mxu0 0.0
    %2097 = vmatprep.subr.mxu0 0.0
    %2098 = vmatpush2.msra.mxu0 0.0
    %2099 = vmatprep.subr.mxu0 0.0
    %2100 = vmatpush2.msra.mxu0 0.0
    %2101 = vmatprep.subr.mxu0 0.0
    %2102 = vmatpush2.msra.mxu0 0.0
    %2103 = vmatprep.subr.mxu0 0.0
    %2104 = vmatpush2.msra.mxu0 0.0
    %2105 = vmatprep.subr.mxu0 0.0
    %2106 = vmatpush2.msra.mxu0 0.0
    %2107 = vmatprep.subr.mxu0 0.0
    %2108 = vmatpush2.msra.mxu0 0.0
    %2109 = vmatprep.subr.mxu0 0.0
    %2110 = vmatpush2.msra.mxu0 0.0
    %2111 = vmatprep.subr.mxu0 0.0
    %2112 = vmatpush2.msra.mxu0 0.0
    %2113 = vmatprep.subr.mxu0 0.0
    %2114 = vmatpush2.msra.mxu0 0.0
    %2115 = vmatprep.subr.mxu0 0.0
    %2116 = vmatpush2.msra.mxu0 0.0
    %2117 = vmatprep.mubr.f32.mxu0 0.0
    %2118 = vmatmul.mubr.f32.gmra.mxu0 %v2051
    %v2119 = vpop.f32.mrf.mxu0
    %v2120 = vadd.f32 0.0, %v2119
    %v2121 = vpop.f32.mrf.mxu0
    %2122 = vdwg.mxu0
    %v2123 = vadd.f32 %v2050, %v2120
    %v2124 = vxor.u32 %v2049, 2147483648
    %v2125 = vmul.f32 %v2124, 1.442695
    %v2126 = vpow.pop %v2125
    %v2127 = vadd.f32 %v2126, 1.0
    %v2128 = vrcp.pop %v2127
    %v2129 = vmul.f32 1.0, %v2128
    %v2130 = vtanh.pop %v2049
    %v2131 = vxor.u32 %v2123, 2147483648
    %v2132 = vmul.f32 %v2131, 1.442695
    %v2133 = vpow.pop %v2132
    %v2134 = vadd.f32 %v2133, 1.0
    %v2135 = vrcp.pop %v2134
    %v2136 = vmul.f32 1.0, %v2135
    %v2137 = vtanh.pop %v2123
    %v2138 = vmul.f32 %v2129, %v1939
    %2140 = vrot.lane.b32.xlu0 %v2130, 64
    %v2141 = vpop.permute.xlu0 %2140
    %v2143 = vmul.f32 %v2129, %v2141
    %2145 = vrot.lane.b32.xlu0 %v2143, 32
    %v2146 = vpop.permute.xlu0 %2145
    %v2148 = vadd.f32 %v2138, %v2146
    %v2149 = vtanh.pop %v2148
    %2151 = vrot.lane.b32.xlu0 %v2149, 64
    %v2152 = vpop.permute.xlu0 %2151
    %v2154 = vmul.f32 %v2129, %v2152
    %v2155 = vmul.f32 %v2136, %v1956
    %2157 = vrot.lane.b32.xlu0 %v2137, 64
    %v2158 = vpop.permute.xlu0 %2157
    %v2160 = vmul.f32 %v2136, %v2158
    %2162 = vrot.lane.b32.xlu0 %v2160, 32
    %v2163 = vpop.permute.xlu0 %2162
    %v2165 = vadd.f32 %v2155, %v2163
    %v2166 = vtanh.pop %v2165
    %2168 = vrot.lane.b32.xlu0 %v2166, 64
    %v2169 = vpop.permute.xlu0 %2168
    %v2171 = vmul.f32 %v2136, %v2169
    %2173 = vrot.lane.b32.xlu0 %v2154, 32
    %v2174 = vpop.permute.xlu0 %2173
    %s2176 = scalar_lea.vmem [#allocation13], 14
    %2177 = vst.msk [vmem:[%s2176] sm:$0x3] %vm707, %v2174
    %2179 = vrot.lane.b32.xlu0 %v2171, 32
    %v2180 = vpop.permute.xlu0 %2179
    %2182 = vst.msk [vmem:[#allocation14] sm:$0x3] %vm707, %v2180
    %2183 = vst.msk [vmem:[#allocation4] sm:$0x3] %vm707, %v2174
    %2185 = vrot.lane.b32.xlu0 %v2148, 96
    %v2186 = vpop.permute.xlu0 %2185
    %2188 = vst.msk [vmem:[%s489] sm:$0x3] %vm707, %v2186
    %2189 = vst.msk [vmem:[%s491] sm:$0x3] %vm707, %v2180
    %2191 = vrot.lane.b32.xlu0 %v2165, 96
    %v2192 = vpop.permute.xlu0 %2191
    %2194 = vst.msk [vmem:[%s493] sm:$0x3] %vm707, %v2192
    // Predicated region
    $region42: #{tpu_custom_call.1} parent=1 // pred_check
      _
    $region43: #{tpu_custom_call.1} parent=1 // pred_check_branch
      %2196 = sbr.rel (0) target = $region45
    $region44: #{tpu_custom_call.1} parent=1 // pred_region
      %s2198 = ssub.s32 256, 256
      %2199 = vsyncadd [#allocation7], %s2198
      %s2200 = sshll.u32 [#allocation13], 4
      %s2201 = int_to_ptr.vmem [resolvable:$true] %s2200
      %2206 = dma.vmem_to_hbm [thread:$0]  %s2201, 256, %s5, [#allocation7], 32, 32, 2
    $region45: #{tpu_custom_call.1} parent=1 // pred_fallthru
      _
    // Predicated region
    $region46: #{tpu_custom_call.1} parent=1 // pred_check
      _
    $region47: #{tpu_custom_call.1} parent=1 // pred_check_branch
      %2208 = sbr.rel (0) target = $region49
    $region48: #{tpu_custom_call.1} parent=1 // pred_region
      %s2209 = ssub.s32 0, 0
      %s2210 = smul.u32 8, %s2209
      %s2212 = ssub.s32 256, 256
      %2213 = vsyncadd [#allocation15], %s2212
      %s2214 = smul.addr %s2210, 32
      %s2215 = scalar_lea.hbm %s6, %s2214
      %s2216 = sshll.u32 [#allocation14], 4
      %s2217 = int_to_ptr.vmem [resolvable:$true] %s2216
      %2222 = dma.vmem_to_hbm [thread:$0]  %s2217, 256, %s2215, [#allocation15], 32, 32, 2
    $region49: #{tpu_custom_call.1} parent=1 // pred_fallthru
      _
    // Predicated region
    $region50: #{tpu_custom_call.1} parent=1 // pred_check
      _
    $region51: #{tpu_custom_call.1} parent=1 // pred_check_branch
      %2224 = sbr.rel (0) target = $region53
    $region52: #{tpu_custom_call.1} parent=1 // pred_region
      %2225 = dma.done [#allocation7], 256
    $region53: #{tpu_custom_call.1} parent=1 // pred_fallthru
      _
    // Predicated region
    $region54: #{tpu_custom_call.1} parent=1 // pred_check
      _
    $region55: #{tpu_custom_call.1} parent=1 // pred_check_branch
      %2227 = sbr.rel (0) target = $region57
    $region56: #{tpu_custom_call.1} parent=1 // pred_region
      %2228 = dma.done [#allocation15], 256
    $region57: #{tpu_custom_call.1} parent=1 // pred_fallthru
      _
    %2229 = vsyncpa [#allocation6], 1
    %2230 = vsyncpa [#allocation9], 1
    %2231 = vsyncpa [#allocation12], 1
    %2232 = vsyncpa [#allocation7], 1
    %2233 = vsyncpa [#allocation15], 1

</llo_original>
